<compile_context>
chip_gen: v7x
topology: tpu7x:2x2x1
jax: 0.10.0
libtpu: 0.0.40
codegen_flags: <defaults>
</compile_context>

<pallas_src>
import functools

import jax
import jax.numpy as jnp
from jax import lax
from jax.experimental import pallas as pl
from jax.experimental.pallas import tpu as pltpu

EPS = 1e-5
LANE = 128  # pad SA channel widths to this many lanes


# ----------------------------------------------------------------------------
# Pallas kernels
# ----------------------------------------------------------------------------
def _sa_mlp_kernel(grouped_ref, w1_ref, g1_ref, b1_ref, w2_ref, g2_ref, b2_ref,
                   w3_ref, g3_ref, b3_ref, out_ref, *, nsample, npoint_s):
  """A block of batch samples of a PointNetSetAbstraction MLP stack.

  grouped_ref: (Bblk, nsample * npoint_s, C_in) bf16, neighbour-major rows
  w*_ref:      (C_in_l, 128) bf16 1x1-conv weights (cols zero-padded to 128)
  g*/b*_ref:   (1, 128) f32 InstanceNorm affine params (zero-padded)
  out_ref:     (Bblk, npoint_s, 128) f32  (max over the nsample neighbourhood)
  """
  h = grouped_ref[...]                    # (Bblk, M, Cin) bf16
  bblk, m = h.shape[0], h.shape[1]

  def layer(h, w_ref, g_ref, b_ref):
    cin = h.shape[-1]
    # bf16 MXU matmul, f32 accumulation; M collapses the Bblk axis.
    z = jnp.dot(h.reshape(bblk * m, cin).astype(jnp.bfloat16), w_ref[...],
                preferred_element_type=jnp.float32)
    z = z.reshape(bblk, m, z.shape[-1])
    # InstanceNorm2d(affine=True): per-sample, per-channel stats over the
    # (nsample, npoint) extent == all rows of each sample (segmented over axis 1).
    mean = jnp.mean(z, axis=1, keepdims=True)
    var = jnp.mean(jnp.square(z - mean), axis=1, keepdims=True)
    z = (z - mean) * lax.rsqrt(var + EPS)
    z = z * g_ref[...] + b_ref[...]
    return jnp.maximum(z, 0.0)

  h = layer(h, w1_ref, g1_ref, b1_ref)
  h = layer(h, w2_ref, g2_ref, b2_ref)
  h = layer(h, w3_ref, g3_ref, b3_ref)    # (Bblk, M, 128) f32

  # Neighbourhood max-pool: rows are nsample-major, so the reduce is an unrolled
  # running max over nsample contiguous (npoint_s, 128) slabs (pure VPU).
  acc = h[:, 0:npoint_s, :]
  for k in range(1, nsample):
    acc = jnp.maximum(acc, h[:, k * npoint_s:(k + 1) * npoint_s, :])
  out_ref[...] = acc


def _head_kernel(feat_ref, w1_ref, g_ref, beta_ref, w2_ref, b2_ref, out_ref):
  """x = relu(bn1(conv1(feat))); query = conv2(x).sum(points) / 8192.

  Linearity hoist: sum_s (x @ w2 + b2) == (sum_s x) @ w2 + S*b2, so conv2 runs
  on B rows instead of B*S rows.

  feat_ref: (B, S, 128) f32   w1_ref: (128, 256) bf16   g/beta: (1, 256) f32
  w2_ref:   (256, 256) bf16   b2_ref: (1, 256) f32      out_ref: (B, 256) f32
  """
  B, S, C = feat_ref.shape
  h = feat_ref[...].reshape(B * S, C).astype(jnp.bfloat16)
  z = jnp.dot(h, w1_ref[...], preferred_element_type=jnp.float32)   # (B*S, 256)
  # BatchNorm1d, training-mode batch statistics (fresh module is in train mode):
  # per-channel stats over (batch, length) == all B*S rows, biased variance.
  mean = jnp.mean(z, axis=0, keepdims=True)
  var = jnp.mean(jnp.square(z - mean), axis=0, keepdims=True)
  z = (z - mean) * lax.rsqrt(var + EPS) * g_ref[...] + beta_ref[...]
  z = jnp.maximum(z, 0.0)
  zsum = jnp.sum(z.reshape(B, S, -1), axis=1)                        # (B, 256)
  y = jnp.dot(zsum.astype(jnp.bfloat16), w2_ref[...],
              preferred_element_type=jnp.float32) + float(S) * b2_ref[...]
  out_ref[...] = y / 8192.0


# ----------------------------------------------------------------------------
# JAX glue: sampling / kNN grouping (gather-heavy bookkeeping)
# ----------------------------------------------------------------------------
def _knn_indices(query, ref, k):
  # query: (B, S, 3), ref: (B, N, 3) -> (B, S, k) indices into ref
  d = (jnp.sum(query * query, -1, keepdims=True)
       + jnp.sum(ref * ref, -1)[:, None, :]
       - 2.0 * jnp.einsum("bsc,bnc->bsn", query, ref))
  _, idx = lax.top_k(-d, k)
  return idx


def _gather_points(points, idx):
  # points: (B, N, C), idx: (B, ...) -> (B, ..., C)
  batch_idx = jnp.arange(points.shape[0]).reshape((-1,) + (1,) * (idx.ndim - 1))
  return points[batch_idx, idx]


def _sample_and_group(npoint_s, nsample, xyz, feats):
  # TODO(synk): farthest-point sampling has no clean vectorized/Pallas equivalent
  # here; replaced with a deterministic first-npoint selection.
  new_xyz = xyz[:, :npoint_s, :]
  idx = _knn_indices(new_xyz, xyz, nsample)            # radius=None -> kNN grouping
  idx_nm = jnp.swapaxes(idx, 1, 2)                     # (B, ns, S) neighbour-major
  # Build the largest intermediate directly in bf16 so its HBM write (and the SA
  # kernel's read) are half-width; kNN distances above stay f32.
  grouped_xyz = (_gather_points(xyz, idx_nm)
                 - new_xyz[:, None, :, :]).astype(jnp.bfloat16)
  grouped_feats = _gather_points(feats, idx_nm).astype(jnp.bfloat16)
  grouped = jnp.concatenate([grouped_xyz, grouped_feats], axis=-1)
  # TODO(synk): at production point counts this gather should be fused into the
  # SA kernel (scalar-prefetched idx + manual DMA gather, memory_space=pl.ANY)
  # to avoid the HBM write+read round-trip of `grouped`.
  return new_xyz, grouped                               # (B,S,3), (B,ns,S,3+C) bf16


# ----------------------------------------------------------------------------
# Pallas wrappers
# ----------------------------------------------------------------------------
def _pick_block_batch(batch, rows_per_sample, max_rows=4096):
  """Largest batch block that keeps per-step rows bounded while leaving >=2
  grid steps (so v7x's second TensorCore gets work when batch >= 2)."""
  min_grid = 2 if batch >= 2 else 1
  best = 1
  for c in range(1, batch + 1):
    if batch % c == 0 and c * rows_per_sample <= max_rows and batch // c >= min_grid:
      best = c
  return best


def sa_mlp(grouped, params, out_channels=LANE):
  """3-layer SA MLP + neighbourhood max-pool.

  grouped: (B, ns, S, Cin) neighbour-major (bf16).  Returns (B, S, 128) f32
  (channels beyond the real layer width are zero).
  """
  B, ns, S, Cin = grouped.shape
  M = ns * S
  x = grouped.reshape(B, M, Cin)
  if x.dtype != jnp.bfloat16:
    x = x.astype(jnp.bfloat16)
  bblk = _pick_block_batch(B, M)
  kernel = functools.partial(_sa_mlp_kernel, nsample=ns, npoint_s=S)
  weight_specs = [pl.BlockSpec(p.shape, lambda b: (0, 0)) for p in params]

  ws = (params[0], params[3], params[6])
  flops = int(sum(2 * B * M * w.shape[0] * w.shape[1] + 10 * B * M * w.shape[1]
                  for w in ws))
  param_bytes = int(sum(int(p.size) * p.dtype.itemsize for p in params))
  bytes_accessed = int(x.size) * 2 + param_bytes + B * S * out_channels * 4

  # TODO(synk): at production point counts (S*ns*Cin blocks of tens of MiB) add a
  # second grid axis over npoint chunks with a two-pass InstanceNorm to fit v7x's
  # 64 MiB VMEM; unnecessary at these sizes.
  return pl.pallas_call(
      kernel,
      out_shape=jax.ShapeDtypeStruct((B, S, out_channels), jnp.float32),
      grid=(B // bblk,),
      in_specs=[pl.BlockSpec((bblk, M, Cin), lambda b: (b, 0, 0))] + weight_specs,
      out_specs=pl.BlockSpec((bblk, S, out_channels), lambda b: (b, 0, 0)),
      compiler_params=pltpu.CompilerParams(
          dimension_semantics=("parallel",),
          vmem_limit_bytes=32 * 1024 * 1024),
      cost_estimate=pl.CostEstimate(flops=flops, transcendentals=3 * B * LANE,
                                    bytes_accessed=bytes_accessed),
  )(x, *params)


def head(feat_l2, head_params):
  """feat_l2: (B, S, 128) -> query (B, 256)."""
  w1, g, beta, w2, b2 = head_params
  B, S, C = feat_l2.shape
  flops = int(2 * B * S * C * w1.shape[1] + 2 * B * w2.shape[0] * w2.shape[1]
              + 8 * B * S * w1.shape[1])
  bytes_accessed = int(B * S * C * 4 + int(w1.size) * 2 + int(w2.size) * 2
                       + 3 * 256 * 4 + B * 256 * 4)
  vmem_spec = pl.BlockSpec(memory_space=pltpu.MemorySpace.VMEM)
  # TODO(synk): on v7x the conv2 output channels could be split across a 2-wide
  # parallel grid to feed the second TC; after the point-sum hoist the head is
  # negligible at these sizes, so it stays gridless.
  return pl.pallas_call(
      _head_kernel,
      out_shape=jax.ShapeDtypeStruct((B, w2.shape[1]), jnp.float32),
      in_specs=[vmem_spec] * 6,
      out_specs=vmem_spec,
      compiler_params=pltpu.CompilerParams(vmem_limit_bytes=32 * 1024 * 1024),
      cost_estimate=pl.CostEstimate(flops=flops, transcendentals=256,
                                    bytes_accessed=bytes_accessed),
  )(feat_l2, w1, g, beta, w2, b2)


# ----------------------------------------------------------------------------
# Parameters (deterministic synthetic init, lane-padded + bf16 weights)
# ----------------------------------------------------------------------------
def _w(key, shape, scale=0.1):
  return scale * jax.random.normal(key, shape, jnp.float32)


def init_params(key):
  keys = jax.random.split(key, 12)

  def mlp_params(ks, cin, widths):
    ps = []
    c = cin
    for i, w in enumerate(widths):
      wt = _w(ks[i], (c, w))
      # Pad output channels (lanes) to 128; for layers > 0 also pad input rows to
      # 128 (the incoming padded activation channels are exactly zero, and the
      # padded gamma/beta are zero, so the padded channels stay zero end-to-end).
      row_pad = (LANE - c) if i > 0 else 0
      wt = jnp.pad(wt, ((0, row_pad), (0, LANE - w)))
      ps.append(wt.astype(jnp.bfloat16))                                   # conv weight
      ps.append(jnp.pad(jnp.ones((1, w), jnp.float32),
                        ((0, 0), (0, LANE - w))))                          # norm gamma
      ps.append(jnp.zeros((1, LANE), jnp.float32))                         # norm beta
      c = w
    return tuple(ps)

  sa1 = mlp_params(keys[0:3], 3 + 3, [32, 32, 64])     # in_channel=3 (+3 rel xyz)
  sa2 = mlp_params(keys[3:6], 64 + 3, [64, 64, 128])   # in_channel=64 (+3 rel xyz)
  w_c1 = _w(keys[6], (128, 256)).astype(jnp.bfloat16)
  g_bn1 = jnp.ones((1, 256), jnp.float32)
  b_bn1 = jnp.zeros((1, 256), jnp.float32)
  w_c2 = _w(keys[7], (256, 256)).astype(jnp.bfloat16)
  b_c2 = _w(keys[8], (1, 256), scale=0.01)
  return dict(sa1=sa1, sa2=sa2, sa1_cout=64, sa2_cout=128,
              head=(w_c1, g_bn1, b_bn1, w_c2, b_c2))


# ----------------------------------------------------------------------------
# Full DriftBrake forward
# ----------------------------------------------------------------------------
def drift_brake_forward(params, pc, feature, npoint, nsample=16):
  # pc: (B, N, 3), feature: (B, N, 3)   (PyTorch passes (B, 3, N))
  S = npoint // 8

  # sa1
  new_xyz1, grouped1 = _sample_and_group(S, nsample, pc, feature)
  feat_l1 = sa_mlp(grouped1, params["sa1"])[..., :params["sa1_cout"]]   # (B, S, 64)

  # sa2
  # TODO(synk): the literal PyTorch code calls self.sa2(pc, feat_l1), mixing N-point
  # coordinates with N/8-point features (shape-inconsistent indexing); we use sa1's
  # sampled coordinates so grouping indices stay valid.
  S2 = min(S, new_xyz1.shape[1])
  _, grouped2 = _sample_and_group(S2, nsample, new_xyz1, feat_l1)
  feat_l2 = sa_mlp(grouped2, params["sa2"])                             # (B, S, 128)

  # head: relu(bn1(conv1)) -> conv2 -> sum over points / 8192 (hardcoded as in spec)
  query = head(feat_l2, params["head"])                                 # (B, 256)
  return query[:, :, None]                                              # (B, 256, 1)


if __name__ == "__main__":
  key = jax.random.PRNGKey(0)
  k_pc, k_feat, k_par = jax.random.split(key, 3)

  B, N = 2, 256           # npoint = N = 256 -> SA layers use npoint/8 = 32, nsample = 16
  pc = jax.random.normal(k_pc, (B, N, 3), jnp.float32)
  feature = jax.random.normal(k_feat, (B, N, 3), jnp.float32)
  params = init_params(k_par)

  query = drift_brake_forward(params, pc, feature, npoint=N)
  jax.block_until_ready(query)
  assert query.shape == (B, 256, 1) and query.dtype == jnp.float32
  print("KERNEL_OK")
</pallas_src>

<mosaic_0001>
module attributes {stable_mosaic.version = 11 : i64} {
  func.func @_sa_mlp_kernel(%arg0: i32, %arg1: memref<1x512x6xbf16, #tpu.memory_space<vmem>>, %arg2: memref<6x128xbf16, #tpu.memory_space<vmem>>, %arg3: memref<1x128xf32, #tpu.memory_space<vmem>>, %arg4: memref<1x128xf32, #tpu.memory_space<vmem>>, %arg5: memref<128x128xbf16, #tpu.memory_space<vmem>>, %arg6: memref<1x128xf32, #tpu.memory_space<vmem>>, %arg7: memref<1x128xf32, #tpu.memory_space<vmem>>, %arg8: memref<128x128xbf16, #tpu.memory_space<vmem>>, %arg9: memref<1x128xf32, #tpu.memory_space<vmem>>, %arg10: memref<1x128xf32, #tpu.memory_space<vmem>>, %arg11: memref<1x32x128xf32, #tpu.memory_space<vmem>>) attributes {dimension_semantics = [#tpu.dimension_semantics<parallel>], iteration_bounds = array<i64: 2>, scalar_prefetch = 0 : i64, scratch_operands = 0 : i64, tpu.core_type = #tpu.core_type<tc>, window_params = [{transform_indices = @transform_0, window_bounds = array<i64: 1, 512, 6>}, {pipeline_mode = #tpu.pipeline_mode<synchronous>, transform_indices = @transform_1, window_bounds = array<i64: 6, 128>}, {pipeline_mode = #tpu.pipeline_mode<synchronous>, transform_indices = @transform_2, window_bounds = array<i64: 1, 128>}, {pipeline_mode = #tpu.pipeline_mode<synchronous>, transform_indices = @transform_3, window_bounds = array<i64: 1, 128>}, {pipeline_mode = #tpu.pipeline_mode<synchronous>, transform_indices = @transform_4, window_bounds = array<i64: 128, 128>}, {pipeline_mode = #tpu.pipeline_mode<synchronous>, transform_indices = @transform_5, window_bounds = array<i64: 1, 128>}, {pipeline_mode = #tpu.pipeline_mode<synchronous>, transform_indices = @transform_6, window_bounds = array<i64: 1, 128>}, {pipeline_mode = #tpu.pipeline_mode<synchronous>, transform_indices = @transform_7, window_bounds = array<i64: 128, 128>}, {pipeline_mode = #tpu.pipeline_mode<synchronous>, transform_indices = @transform_8, window_bounds = array<i64: 1, 128>}, {pipeline_mode = #tpu.pipeline_mode<synchronous>, transform_indices = @transform_9, window_bounds = array<i64: 1, 128>}, {transform_indices = @transform_10, window_bounds = array<i64: 1, 32, 128>}]} {
    %c0 = arith.constant 0 : index
    %c0_0 = arith.constant 0 : index
    %c0_1 = arith.constant 0 : index
    %0 = vector.load %arg1[%c0, %c0_0, %c0_1] : memref<1x512x6xbf16, #tpu.memory_space<vmem>>, vector<1x512x6xbf16>
    %1 = vector.shape_cast %0 : vector<1x512x6xbf16> to vector<512x6xbf16>
    %c0_2 = arith.constant 0 : index
    %c0_3 = arith.constant 0 : index
    %2 = vector.load %arg2[%c0_2, %c0_3] : memref<6x128xbf16, #tpu.memory_space<vmem>>, vector<6x128xbf16>
    %cst = arith.constant dense<0.000000e+00> : vector<512x128xf32>
    %3 = tpu.matmul %1, %2, %cst {dimension_numbers = #tpu.dot_dimension_numbers<[1], [0], [0], [1], [0, 0, 1, 1], [], []>} : vector<512x6xbf16>, vector<6x128xbf16>, vector<512x128xf32> -> vector<512x128xf32>
    %4 = vector.shape_cast %3 : vector<512x128xf32> to vector<1x512x128xf32>
    %cst_4 = arith.constant dense<0.000000e+00> : vector<1x128xf32>
    %5 = vector.multi_reduction <add>, %4, %cst_4 [1] : vector<1x512x128xf32> to vector<1x128xf32>
    %6 = vector.shape_cast %5 : vector<1x128xf32> to vector<1x1x128xf32>
    %cst_5 = arith.constant 5.120000e+02 : f32
    %7 = vector.broadcast %cst_5 : f32 to vector<1x1x128xf32>
    %8 = arith.divf %6, %7 : vector<1x1x128xf32>
    %9 = vector.broadcast %8 : vector<1x1x128xf32> to vector<1x512x128xf32>
    %10 = arith.subf %4, %9 : vector<1x512x128xf32>
    %11 = arith.mulf %10, %10 : vector<1x512x128xf32>
    %cst_6 = arith.constant dense<0.000000e+00> : vector<1x128xf32>
    %12 = vector.multi_reduction <add>, %11, %cst_6 [1] : vector<1x512x128xf32> to vector<1x128xf32>
    %13 = vector.shape_cast %12 : vector<1x128xf32> to vector<1x1x128xf32>
    %cst_7 = arith.constant 5.120000e+02 : f32
    %14 = vector.broadcast %cst_7 : f32 to vector<1x1x128xf32>
    %15 = arith.divf %13, %14 : vector<1x1x128xf32>
    %16 = vector.broadcast %8 : vector<1x1x128xf32> to vector<1x512x128xf32>
    %17 = arith.subf %4, %16 : vector<1x512x128xf32>
    %cst_8 = arith.constant 9.99999974E-6 : f32
    %18 = vector.broadcast %cst_8 : f32 to vector<1x1x128xf32>
    %19 = arith.addf %15, %18 : vector<1x1x128xf32>
    %20 = math.rsqrt %19 : vector<1x1x128xf32>
    %21 = vector.broadcast %20 : vector<1x1x128xf32> to vector<1x512x128xf32>
    %22 = arith.mulf %17, %21 : vector<1x512x128xf32>
    %c0_9 = arith.constant 0 : index
    %c0_10 = arith.constant 0 : index
    %23 = vector.load %arg3[%c0_9, %c0_10] : memref<1x128xf32, #tpu.memory_space<vmem>>, vector<1x128xf32>
    %24 = vector.shape_cast %23 : vector<1x128xf32> to vector<1x1x128xf32>
    %25 = vector.broadcast %24 : vector<1x1x128xf32> to vector<1x512x128xf32>
    %26 = arith.mulf %22, %25 : vector<1x512x128xf32>
    %c0_11 = arith.constant 0 : index
    %c0_12 = arith.constant 0 : index
    %27 = vector.load %arg4[%c0_11, %c0_12] : memref<1x128xf32, #tpu.memory_space<vmem>>, vector<1x128xf32>
    %28 = vector.shape_cast %27 : vector<1x128xf32> to vector<1x1x128xf32>
    %29 = vector.broadcast %28 : vector<1x1x128xf32> to vector<1x512x128xf32>
    %30 = arith.addf %26, %29 : vector<1x512x128xf32>
    %cst_13 = arith.constant 0.000000e+00 : f32
    %31 = vector.broadcast %cst_13 : f32 to vector<1x512x128xf32>
    %32 = arith.maximumf %30, %31 : vector<1x512x128xf32>
    %33 = vector.shape_cast %32 : vector<1x512x128xf32> to vector<512x128xf32>
    %34 = arith.truncf %33 : vector<512x128xf32> to vector<512x128xbf16>
    %c0_14 = arith.constant 0 : index
    %c0_15 = arith.constant 0 : index
    %35 = vector.load %arg5[%c0_14, %c0_15] : memref<128x128xbf16, #tpu.memory_space<vmem>>, vector<128x128xbf16>
    %cst_16 = arith.constant dense<0.000000e+00> : vector<512x128xf32>
    %36 = tpu.matmul %34, %35, %cst_16 {dimension_numbers = #tpu.dot_dimension_numbers<[1], [0], [0], [1], [0, 0, 1, 1], [], []>} : vector<512x128xbf16>, vector<128x128xbf16>, vector<512x128xf32> -> vector<512x128xf32>
    %37 = vector.shape_cast %36 : vector<512x128xf32> to vector<1x512x128xf32>
    %cst_17 = arith.constant dense<0.000000e+00> : vector<1x128xf32>
    %38 = vector.multi_reduction <add>, %37, %cst_17 [1] : vector<1x512x128xf32> to vector<1x128xf32>
    %39 = vector.shape_cast %38 : vector<1x128xf32> to vector<1x1x128xf32>
    %cst_18 = arith.constant 5.120000e+02 : f32
    %40 = vector.broadcast %cst_18 : f32 to vector<1x1x128xf32>
    %41 = arith.divf %39, %40 : vector<1x1x128xf32>
    %42 = vector.broadcast %41 : vector<1x1x128xf32> to vector<1x512x128xf32>
    %43 = arith.subf %37, %42 : vector<1x512x128xf32>
    %44 = arith.mulf %43, %43 : vector<1x512x128xf32>
    %cst_19 = arith.constant dense<0.000000e+00> : vector<1x128xf32>
    %45 = vector.multi_reduction <add>, %44, %cst_19 [1] : vector<1x512x128xf32> to vector<1x128xf32>
    %46 = vector.shape_cast %45 : vector<1x128xf32> to vector<1x1x128xf32>
    %cst_20 = arith.constant 5.120000e+02 : f32
    %47 = vector.broadcast %cst_20 : f32 to vector<1x1x128xf32>
    %48 = arith.divf %46, %47 : vector<1x1x128xf32>
    %49 = vector.broadcast %41 : vector<1x1x128xf32> to vector<1x512x128xf32>
    %50 = arith.subf %37, %49 : vector<1x512x128xf32>
    %cst_21 = arith.constant 9.99999974E-6 : f32
    %51 = vector.broadcast %cst_21 : f32 to vector<1x1x128xf32>
    %52 = arith.addf %48, %51 : vector<1x1x128xf32>
    %53 = math.rsqrt %52 : vector<1x1x128xf32>
    %54 = vector.broadcast %53 : vector<1x1x128xf32> to vector<1x512x128xf32>
    %55 = arith.mulf %50, %54 : vector<1x512x128xf32>
    %c0_22 = arith.constant 0 : index
    %c0_23 = arith.constant 0 : index
    %56 = vector.load %arg6[%c0_22, %c0_23] : memref<1x128xf32, #tpu.memory_space<vmem>>, vector<1x128xf32>
    %57 = vector.shape_cast %56 : vector<1x128xf32> to vector<1x1x128xf32>
    %58 = vector.broadcast %57 : vector<1x1x128xf32> to vector<1x512x128xf32>
    %59 = arith.mulf %55, %58 : vector<1x512x128xf32>
    %c0_24 = arith.constant 0 : index
    %c0_25 = arith.constant 0 : index
    %60 = vector.load %arg7[%c0_24, %c0_25] : memref<1x128xf32, #tpu.memory_space<vmem>>, vector<1x128xf32>
    %61 = vector.shape_cast %60 : vector<1x128xf32> to vector<1x1x128xf32>
    %62 = vector.broadcast %61 : vector<1x1x128xf32> to vector<1x512x128xf32>
    %63 = arith.addf %59, %62 : vector<1x512x128xf32>
    %cst_26 = arith.constant 0.000000e+00 : f32
    %64 = vector.broadcast %cst_26 : f32 to vector<1x512x128xf32>
    %65 = arith.maximumf %63, %64 : vector<1x512x128xf32>
    %66 = vector.shape_cast %65 : vector<1x512x128xf32> to vector<512x128xf32>
    %67 = arith.truncf %66 : vector<512x128xf32> to vector<512x128xbf16>
    %c0_27 = arith.constant 0 : index
    %c0_28 = arith.constant 0 : index
    %68 = vector.load %arg8[%c0_27, %c0_28] : memref<128x128xbf16, #tpu.memory_space<vmem>>, vector<128x128xbf16>
    %cst_29 = arith.constant dense<0.000000e+00> : vector<512x128xf32>
    %69 = tpu.matmul %67, %68, %cst_29 {dimension_numbers = #tpu.dot_dimension_numbers<[1], [0], [0], [1], [0, 0, 1, 1], [], []>} : vector<512x128xbf16>, vector<128x128xbf16>, vector<512x128xf32> -> vector<512x128xf32>
    %70 = vector.shape_cast %69 : vector<512x128xf32> to vector<1x512x128xf32>
    %cst_30 = arith.constant dense<0.000000e+00> : vector<1x128xf32>
    %71 = vector.multi_reduction <add>, %70, %cst_30 [1] : vector<1x512x128xf32> to vector<1x128xf32>
    %72 = vector.shape_cast %71 : vector<1x128xf32> to vector<1x1x128xf32>
    %cst_31 = arith.constant 5.120000e+02 : f32
    %73 = vector.broadcast %cst_31 : f32 to vector<1x1x128xf32>
    %74 = arith.divf %72, %73 : vector<1x1x128xf32>
    %75 = vector.broadcast %74 : vector<1x1x128xf32> to vector<1x512x128xf32>
    %76 = arith.subf %70, %75 : vector<1x512x128xf32>
    %77 = arith.mulf %76, %76 : vector<1x512x128xf32>
    %cst_32 = arith.constant dense<0.000000e+00> : vector<1x128xf32>
    %78 = vector.multi_reduction <add>, %77, %cst_32 [1] : vector<1x512x128xf32> to vector<1x128xf32>
    %79 = vector.shape_cast %78 : vector<1x128xf32> to vector<1x1x128xf32>
    %cst_33 = arith.constant 5.120000e+02 : f32
    %80 = vector.broadcast %cst_33 : f32 to vector<1x1x128xf32>
    %81 = arith.divf %79, %80 : vector<1x1x128xf32>
    %82 = vector.broadcast %74 : vector<1x1x128xf32> to vector<1x512x128xf32>
    %83 = arith.subf %70, %82 : vector<1x512x128xf32>
    %cst_34 = arith.constant 9.99999974E-6 : f32
    %84 = vector.broadcast %cst_34 : f32 to vector<1x1x128xf32>
    %85 = arith.addf %81, %84 : vector<1x1x128xf32>
    %86 = math.rsqrt %85 : vector<1x1x128xf32>
    %87 = vector.broadcast %86 : vector<1x1x128xf32> to vector<1x512x128xf32>
    %88 = arith.mulf %83, %87 : vector<1x512x128xf32>
    %c0_35 = arith.constant 0 : index
    %c0_36 = arith.constant 0 : index
    %89 = vector.load %arg9[%c0_35, %c0_36] : memref<1x128xf32, #tpu.memory_space<vmem>>, vector<1x128xf32>
    %90 = vector.shape_cast %89 : vector<1x128xf32> to vector<1x1x128xf32>
    %91 = vector.broadcast %90 : vector<1x1x128xf32> to vector<1x512x128xf32>
    %92 = arith.mulf %88, %91 : vector<1x512x128xf32>
    %c0_37 = arith.constant 0 : index
    %c0_38 = arith.constant 0 : index
    %93 = vector.load %arg10[%c0_37, %c0_38] : memref<1x128xf32, #tpu.memory_space<vmem>>, vector<1x128xf32>
    %94 = vector.shape_cast %93 : vector<1x128xf32> to vector<1x1x128xf32>
    %95 = vector.broadcast %94 : vector<1x1x128xf32> to vector<1x512x128xf32>
    %96 = arith.addf %92, %95 : vector<1x512x128xf32>
    %cst_39 = arith.constant 0.000000e+00 : f32
    %97 = vector.broadcast %cst_39 : f32 to vector<1x512x128xf32>
    %98 = arith.maximumf %96, %97 : vector<1x512x128xf32>
    %99 = vector.extract_strided_slice %98 {offsets = [0, 0, 0], sizes = [1, 32, 128], strides = [1, 1, 1]} : vector<1x512x128xf32> to vector<1x32x128xf32>
    %100 = vector.extract_strided_slice %98 {offsets = [0, 32, 0], sizes = [1, 32, 128], strides = [1, 1, 1]} : vector<1x512x128xf32> to vector<1x32x128xf32>
    %101 = arith.maximumf %99, %100 : vector<1x32x128xf32>
    %102 = vector.extract_strided_slice %98 {offsets = [0, 64, 0], sizes = [1, 32, 128], strides = [1, 1, 1]} : vector<1x512x128xf32> to vector<1x32x128xf32>
    %103 = arith.maximumf %101, %102 : vector<1x32x128xf32>
    %104 = vector.extract_strided_slice %98 {offsets = [0, 96, 0], sizes = [1, 32, 128], strides = [1, 1, 1]} : vector<1x512x128xf32> to vector<1x32x128xf32>
    %105 = arith.maximumf %103, %104 : vector<1x32x128xf32>
    %106 = vector.extract_strided_slice %98 {offsets = [0, 128, 0], sizes = [1, 32, 128], strides = [1, 1, 1]} : vector<1x512x128xf32> to vector<1x32x128xf32>
    %107 = arith.maximumf %105, %106 : vector<1x32x128xf32>
    %108 = vector.extract_strided_slice %98 {offsets = [0, 160, 0], sizes = [1, 32, 128], strides = [1, 1, 1]} : vector<1x512x128xf32> to vector<1x32x128xf32>
    %109 = arith.maximumf %107, %108 : vector<1x32x128xf32>
    %110 = vector.extract_strided_slice %98 {offsets = [0, 192, 0], sizes = [1, 32, 128], strides = [1, 1, 1]} : vector<1x512x128xf32> to vector<1x32x128xf32>
    %111 = arith.maximumf %109, %110 : vector<1x32x128xf32>
    %112 = vector.extract_strided_slice %98 {offsets = [0, 224, 0], sizes = [1, 32, 128], strides = [1, 1, 1]} : vector<1x512x128xf32> to vector<1x32x128xf32>
    %113 = arith.maximumf %111, %112 : vector<1x32x128xf32>
    %114 = vector.extract_strided_slice %98 {offsets = [0, 256, 0], sizes = [1, 32, 128], strides = [1, 1, 1]} : vector<1x512x128xf32> to vector<1x32x128xf32>
    %115 = arith.maximumf %113, %114 : vector<1x32x128xf32>
    %116 = vector.extract_strided_slice %98 {offsets = [0, 288, 0], sizes = [1, 32, 128], strides = [1, 1, 1]} : vector<1x512x128xf32> to vector<1x32x128xf32>
    %117 = arith.maximumf %115, %116 : vector<1x32x128xf32>
    %118 = vector.extract_strided_slice %98 {offsets = [0, 320, 0], sizes = [1, 32, 128], strides = [1, 1, 1]} : vector<1x512x128xf32> to vector<1x32x128xf32>
    %119 = arith.maximumf %117, %118 : vector<1x32x128xf32>
    %120 = vector.extract_strided_slice %98 {offsets = [0, 352, 0], sizes = [1, 32, 128], strides = [1, 1, 1]} : vector<1x512x128xf32> to vector<1x32x128xf32>
    %121 = arith.maximumf %119, %120 : vector<1x32x128xf32>
    %122 = vector.extract_strided_slice %98 {offsets = [0, 384, 0], sizes = [1, 32, 128], strides = [1, 1, 1]} : vector<1x512x128xf32> to vector<1x32x128xf32>
    %123 = arith.maximumf %121, %122 : vector<1x32x128xf32>
    %124 = vector.extract_strided_slice %98 {offsets = [0, 416, 0], sizes = [1, 32, 128], strides = [1, 1, 1]} : vector<1x512x128xf32> to vector<1x32x128xf32>
    %125 = arith.maximumf %123, %124 : vector<1x32x128xf32>
    %126 = vector.extract_strided_slice %98 {offsets = [0, 448, 0], sizes = [1, 32, 128], strides = [1, 1, 1]} : vector<1x512x128xf32> to vector<1x32x128xf32>
    %127 = arith.maximumf %125, %126 : vector<1x32x128xf32>
    %128 = vector.extract_strided_slice %98 {offsets = [0, 480, 0], sizes = [1, 32, 128], strides = [1, 1, 1]} : vector<1x512x128xf32> to vector<1x32x128xf32>
    %129 = arith.maximumf %127, %128 : vector<1x32x128xf32>
    %c0_40 = arith.constant 0 : index
    %c0_41 = arith.constant 0 : index
    %c0_42 = arith.constant 0 : index
    %130 = vector.load %arg11[%c0_40, %c0_41, %c0_42] : memref<1x32x128xf32, #tpu.memory_space<vmem>>, vector<1x32x128xf32>
    tpu.vector_store %arg11[%c0_40, %c0_41, %c0_42], %129 {strides = array<i32>} : memref<1x32x128xf32, #tpu.memory_space<vmem>>, vector<1x32x128xf32>,
    return
  }
  func.func @transform_0(%arg0: i32) -> (i32, i32, i32) {
    %c0_i32 = arith.constant 0 : i32
    %c0_i32_0 = arith.constant 0 : i32
    %c0_i32_1 = arith.constant 0 : i32
    return %arg0, %c0_i32, %c0_i32_0 : i32, i32, i32
  }
  func.func @transform_1(%arg0: i32) -> (i32, i32) {
    %c0_i32 = arith.constant 0 : i32
    %c0_i32_0 = arith.constant 0 : i32
    %c0_i32_1 = arith.constant 0 : i32
    return %c0_i32, %c0_i32_0 : i32, i32
  }
  func.func @transform_2(%arg0: i32) -> (i32, i32) {
    %c0_i32 = arith.constant 0 : i32
    %c0_i32_0 = arith.constant 0 : i32
    %c0_i32_1 = arith.constant 0 : i32
    return %c0_i32, %c0_i32_0 : i32, i32
  }
  func.func @transform_3(%arg0: i32) -> (i32, i32) {
    %c0_i32 = arith.constant 0 : i32
    %c0_i32_0 = arith.constant 0 : i32
    %c0_i32_1 = arith.constant 0 : i32
    return %c0_i32, %c0_i32_0 : i32, i32
  }
  func.func @transform_4(%arg0: i32) -> (i32, i32) {
    %c0_i32 = arith.constant 0 : i32
    %c0_i32_0 = arith.constant 0 : i32
    %c0_i32_1 = arith.constant 0 : i32
    return %c0_i32, %c0_i32_0 : i32, i32
  }
  func.func @transform_5(%arg0: i32) -> (i32, i32) {
    %c0_i32 = arith.constant 0 : i32
    %c0_i32_0 = arith.constant 0 : i32
    %c0_i32_1 = arith.constant 0 : i32
    return %c0_i32, %c0_i32_0 : i32, i32
  }
  func.func @transform_6(%arg0: i32) -> (i32, i32) {
    %c0_i32 = arith.constant 0 : i32
    %c0_i32_0 = arith.constant 0 : i32
    %c0_i32_1 = arith.constant 0 : i32
    return %c0_i32, %c0_i32_0 : i32, i32
  }
  func.func @transform_7(%arg0: i32) -> (i32, i32) {
    %c0_i32 = arith.constant 0 : i32
    %c0_i32_0 = arith.constant 0 : i32
    %c0_i32_1 = arith.constant 0 : i32
    return %c0_i32, %c0_i32_0 : i32, i32
  }
  func.func @transform_8(%arg0: i32) -> (i32, i32) {
    %c0_i32 = arith.constant 0 : i32
    %c0_i32_0 = arith.constant 0 : i32
    %c0_i32_1 = arith.constant 0 : i32
    return %c0_i32, %c0_i32_0 : i32, i32
  }
  func.func @transform_9(%arg0: i32) -> (i32, i32) {
    %c0_i32 = arith.constant 0 : i32
    %c0_i32_0 = arith.constant 0 : i32
    %c0_i32_1 = arith.constant 0 : i32
    return %c0_i32, %c0_i32_0 : i32, i32
  }
  func.func @transform_10(%arg0: i32) -> (i32, i32, i32) {
    %c0_i32 = arith.constant 0 : i32
    %c0_i32_0 = arith.constant 0 : i32
    %c0_i32_1 = arith.constant 0 : i32
    return %arg0, %c0_i32, %c0_i32_0 : i32, i32, i32
  }
}

</mosaic_0001>

<llo_original>
// kernel: tpu_custom_call.1
$region0: #{tpu_custom_call.1}
  #allocation0 [shape = 'u32[]', space=smem, size = 0x4, offset = 0x4, fixed_abs, tag = 'smem constant byte address 0x4 - core index']
  #allocation1 [shape = 'u32[144,128]{1,0:T(1,128)}', space=vmem, size = 0x12000, scoped, tag = 'internal scratch']
  %s0 = inlined_call_operand.vmem [shape: bf16[2,512,6], index: 0, kind: input, shape index: {}]
  %s1 = inlined_call_operand.vmem [shape: bf16[6,128], index: 1, kind: input, shape index: {}]
  %s2 = inlined_call_operand.vmem [shape: f32[1,128], index: 2, kind: input, shape index: {}]
  %s3 = inlined_call_operand.vmem [shape: f32[1,128], index: 3, kind: input, shape index: {}]
  %s4 = inlined_call_operand.vmem [shape: bf16[128,128], index: 4, kind: input, shape index: {}]
  %s5 = inlined_call_operand.vmem [shape: f32[1,128], index: 5, kind: input, shape index: {}]
  %s6 = inlined_call_operand.vmem [shape: f32[1,128], index: 6, kind: input, shape index: {}]
  %s7 = inlined_call_operand.vmem [shape: bf16[128,128], index: 7, kind: input, shape index: {}]
  %s8 = inlined_call_operand.vmem [shape: f32[1,128], index: 8, kind: input, shape index: {}]
  %s9 = inlined_call_operand.vmem [shape: f32[1,128], index: 9, kind: input, shape index: {}]
  %s10 = inlined_call_operand.hbm [shape: f32[2,32,128], index: 10, kind: output, shape index: {}]
  %s11 = sld [smem:[#allocation0]]
  $region73: #{tpu_custom_call.1} parent=0
    _
  %s13 = ssub.s32 1, %s11
  %s14 = scalar_select 0, %s13, %s11
  $region1: #{tpu_custom_call.1} parent=0
    #allocation2 [shape = 'u8[32768]{0}', space=vmem, size = 0x8000, scoped, tag = 'output window, operand 0']
    #allocation3 [shape = 's32[2]{0}', space=sflag, size = 0x8, scoped, tag = 'scoped memory for tpu_custom_call.1']
    %15 = vsyncpa [#allocation3], 0
    %s16 = scalar_lea.sflag [#allocation3], 1
    %17 = vsyncpa %s16, 0
    loop: start=0, step=1, limit=4
    $region2: #{tpu_custom_call.1} parent=1 // loop_pre_header
      _
    $region3: #{tpu_custom_call.1} parent=1 // loop_header
      %s19 = sphi 0, %s23
      %p20 = scmp.ge.s32.totalorder %s19, 4
      %s29 = sphi 0, %s31
      %s32 = sphi 0, %s29
      %s33 = sphi 0, %s32
      %s49 = sphi 0, %s33
      %s53 = sphi 0, %s53
      %s55 = sphi 0, %s53
      %s56 = sphi 0, %s55
      %s70 = sphi 0, %s56
      %s74 = sphi 0, %s74
      %s76 = sphi 0, %s74
      %s77 = sphi 0, %s76
      %s91 = sphi 0, %s77
      %s95 = sphi 0, %s95
      %s97 = sphi 0, %s95
      %s98 = sphi 0, %s97
      %s112 = sphi 0, %s98
      %s116 = sphi 0, %s116
      %s118 = sphi 0, %s116
      %s119 = sphi 0, %s118
      %s133 = sphi 0, %s119
      %s137 = sphi 0, %s137
      %s139 = sphi 0, %s137
      %s140 = sphi 0, %s139
      %s154 = sphi 0, %s140
      %s158 = sphi 0, %s158
      %s160 = sphi 0, %s158
      %s161 = sphi 0, %s160
      %s175 = sphi 0, %s161
      %s179 = sphi 0, %s179
      %s181 = sphi 0, %s179
      %s182 = sphi 0, %s181
      %s196 = sphi 0, %s182
      %s200 = sphi 0, %s200
      %s202 = sphi 0, %s200
      %s203 = sphi 0, %s202
      %s217 = sphi 0, %s203
      %s221 = sphi 0, %s221
      %s223 = sphi 0, %s221
      %s224 = sphi 0, %s223
      %s238 = sphi 0, %s224
      %s244 = sphi 0, %s246
      %s247 = sphi 0, %s244
      %s248 = sphi 0, %s247
      %s264 = sphi 0, %s248
    $region4: #{tpu_custom_call.1} parent=1 // loop_header_branch
      %22 = sbr.rel (%p20) target = $region8
    $region5: #{tpu_custom_call.1} parent=1 // loop_body
      %s24 = ssub.s32 %s19, 1
      %s25 = ssub.s32 %s19, 2
      %s26 = sadd.s32 %s19, 1
      %s27 = ssub.s32 %s19, %s26
      %p28 = scmp.eq.s32.totalorder %s27, 0
      %s30 = sadd.s32 %s29, 1
      %s31 = scalar_select %p28, %s29, %s30
      %p34 = pneg %p28
      %p35 = scmp.eq.s32.totalorder %s19, 1
      %p36 = por %p34, %p35
      %p37 = scmp.ne.s32.totalorder %s29, %s32
      %p38 = scmp.eq.s32.totalorder %s19, 0
      %p39 = por %p37, %p38
      %p40 = scmp.ne.s32.totalorder %s29, %s32
      %p41 = scmp.eq.s32.totalorder %s24, 1
      %p42 = por %p40, %p41
      %p43 = scmp.ne.s32.totalorder %s32, %s33
      %p44 = scmp.eq.s32.totalorder %s24, 0
      %p45 = por %p43, %p44
      %p46 = scmp.ne.s32.totalorder %s32, %s33
      %p47 = scmp.eq.s32.totalorder %s25, 1
      %p48 = por %p46, %p47
      %p50 = scmp.ne.s32.totalorder %s33, %s49
      %p51 = scmp.eq.s32.totalorder %s25, 0
      %p52 = por %p50, %p51
      %s54 = sadd.s32 %s53, 1
      %p57 = scmp.eq.s32.totalorder %s19, 1
      %p58 = scmp.ne.s32.totalorder %s53, %s55
      %p59 = scmp.eq.s32.totalorder %s19, 0
      %p60 = por %p58, %p59
      %p61 = scmp.ne.s32.totalorder %s53, %s55
      %p62 = scmp.eq.s32.totalorder %s24, 1
      %p63 = por %p61, %p62
      %p64 = scmp.ne.s32.totalorder %s55, %s56
      %p65 = scmp.eq.s32.totalorder %s24, 0
      %p66 = por %p64, %p65
      %p67 = scmp.ne.s32.totalorder %s55, %s56
      %p68 = scmp.eq.s32.totalorder %s25, 1
      %p69 = por %p67, %p68
      %p71 = scmp.ne.s32.totalorder %s56, %s70
      %p72 = scmp.eq.s32.totalorder %s25, 0
      %p73 = por %p71, %p72
      %s75 = sadd.s32 %s74, 1
      %p78 = scmp.eq.s32.totalorder %s19, 1
      %p79 = scmp.ne.s32.totalorder %s74, %s76
      %p80 = scmp.eq.s32.totalorder %s19, 0
      %p81 = por %p79, %p80
      %p82 = scmp.ne.s32.totalorder %s74, %s76
      %p83 = scmp.eq.s32.totalorder %s24, 1
      %p84 = por %p82, %p83
      %p85 = scmp.ne.s32.totalorder %s76, %s77
      %p86 = scmp.eq.s32.totalorder %s24, 0
      %p87 = por %p85, %p86
      %p88 = scmp.ne.s32.totalorder %s76, %s77
      %p89 = scmp.eq.s32.totalorder %s25, 1
      %p90 = por %p88, %p89
      %p92 = scmp.ne.s32.totalorder %s77, %s91
      %p93 = scmp.eq.s32.totalorder %s25, 0
      %p94 = por %p92, %p93
      %s96 = sadd.s32 %s95, 1
      %p99 = scmp.eq.s32.totalorder %s19, 1
      %p100 = scmp.ne.s32.totalorder %s95, %s97
      %p101 = scmp.eq.s32.totalorder %s19, 0
      %p102 = por %p100, %p101
      %p103 = scmp.ne.s32.totalorder %s95, %s97
      %p104 = scmp.eq.s32.totalorder %s24, 1
      %p105 = por %p103, %p104
      %p106 = scmp.ne.s32.totalorder %s97, %s98
      %p107 = scmp.eq.s32.totalorder %s24, 0
      %p108 = por %p106, %p107
      %p109 = scmp.ne.s32.totalorder %s97, %s98
      %p110 = scmp.eq.s32.totalorder %s25, 1
      %p111 = por %p109, %p110
      %p113 = scmp.ne.s32.totalorder %s98, %s112
      %p114 = scmp.eq.s32.totalorder %s25, 0
      %p115 = por %p113, %p114
      %s117 = sadd.s32 %s116, 1
      %p120 = scmp.eq.s32.totalorder %s19, 1
      %p121 = scmp.ne.s32.totalorder %s116, %s118
      %p122 = scmp.eq.s32.totalorder %s19, 0
      %p123 = por %p121, %p122
      %p124 = scmp.ne.s32.totalorder %s116, %s118
      %p125 = scmp.eq.s32.totalorder %s24, 1
      %p126 = por %p124, %p125
      %p127 = scmp.ne.s32.totalorder %s118, %s119
      %p128 = scmp.eq.s32.totalorder %s24, 0
      %p129 = por %p127, %p128
      %p130 = scmp.ne.s32.totalorder %s118, %s119
      %p131 = scmp.eq.s32.totalorder %s25, 1
      %p132 = por %p130, %p131
      %p134 = scmp.ne.s32.totalorder %s119, %s133
      %p135 = scmp.eq.s32.totalorder %s25, 0
      %p136 = por %p134, %p135
      %s138 = sadd.s32 %s137, 1
      %p141 = scmp.eq.s32.totalorder %s19, 1
      %p142 = scmp.ne.s32.totalorder %s137, %s139
      %p143 = scmp.eq.s32.totalorder %s19, 0
      %p144 = por %p142, %p143
      %p145 = scmp.ne.s32.totalorder %s137, %s139
      %p146 = scmp.eq.s32.totalorder %s24, 1
      %p147 = por %p145, %p146
      %p148 = scmp.ne.s32.totalorder %s139, %s140
      %p149 = scmp.eq.s32.totalorder %s24, 0
      %p150 = por %p148, %p149
      %p151 = scmp.ne.s32.totalorder %s139, %s140
      %p152 = scmp.eq.s32.totalorder %s25, 1
      %p153 = por %p151, %p152
      %p155 = scmp.ne.s32.totalorder %s140, %s154
      %p156 = scmp.eq.s32.totalorder %s25, 0
      %p157 = por %p155, %p156
      %s159 = sadd.s32 %s158, 1
      %p162 = scmp.eq.s32.totalorder %s19, 1
      %p163 = scmp.ne.s32.totalorder %s158, %s160
      %p164 = scmp.eq.s32.totalorder %s19, 0
      %p165 = por %p163, %p164
      %p166 = scmp.ne.s32.totalorder %s158, %s160
      %p167 = scmp.eq.s32.totalorder %s24, 1
      %p168 = por %p166, %p167
      %p169 = scmp.ne.s32.totalorder %s160, %s161
      %p170 = scmp.eq.s32.totalorder %s24, 0
      %p171 = por %p169, %p170
      %p172 = scmp.ne.s32.totalorder %s160, %s161
      %p173 = scmp.eq.s32.totalorder %s25, 1
      %p174 = por %p172, %p173
      %p176 = scmp.ne.s32.totalorder %s161, %s175
      %p177 = scmp.eq.s32.totalorder %s25, 0
      %p178 = por %p176, %p177
      %s180 = sadd.s32 %s179, 1
      %p183 = scmp.eq.s32.totalorder %s19, 1
      %p184 = scmp.ne.s32.totalorder %s179, %s181
      %p185 = scmp.eq.s32.totalorder %s19, 0
      %p186 = por %p184, %p185
      %p187 = scmp.ne.s32.totalorder %s179, %s181
      %p188 = scmp.eq.s32.totalorder %s24, 1
      %p189 = por %p187, %p188
      %p190 = scmp.ne.s32.totalorder %s181, %s182
      %p191 = scmp.eq.s32.totalorder %s24, 0
      %p192 = por %p190, %p191
      %p193 = scmp.ne.s32.totalorder %s181, %s182
      %p194 = scmp.eq.s32.totalorder %s25, 1
      %p195 = por %p193, %p194
      %p197 = scmp.ne.s32.totalorder %s182, %s196
      %p198 = scmp.eq.s32.totalorder %s25, 0
      %p199 = por %p197, %p198
      %s201 = sadd.s32 %s200, 1
      %p204 = scmp.eq.s32.totalorder %s19, 1
      %p205 = scmp.ne.s32.totalorder %s200, %s202
      %p206 = scmp.eq.s32.totalorder %s19, 0
      %p207 = por %p205, %p206
      %p208 = scmp.ne.s32.totalorder %s200, %s202
      %p209 = scmp.eq.s32.totalorder %s24, 1
      %p210 = por %p208, %p209
      %p211 = scmp.ne.s32.totalorder %s202, %s203
      %p212 = scmp.eq.s32.totalorder %s24, 0
      %p213 = por %p211, %p212
      %p214 = scmp.ne.s32.totalorder %s202, %s203
      %p215 = scmp.eq.s32.totalorder %s25, 1
      %p216 = por %p214, %p215
      %p218 = scmp.ne.s32.totalorder %s203, %s217
      %p219 = scmp.eq.s32.totalorder %s25, 0
      %p220 = por %p218, %p219
      %s222 = sadd.s32 %s221, 1
      %p225 = scmp.eq.s32.totalorder %s19, 1
      %p226 = scmp.ne.s32.totalorder %s221, %s223
      %p227 = scmp.eq.s32.totalorder %s19, 0
      %p228 = por %p226, %p227
      %p229 = scmp.ne.s32.totalorder %s221, %s223
      %p230 = scmp.eq.s32.totalorder %s24, 1
      %p231 = por %p229, %p230
      %p232 = scmp.ne.s32.totalorder %s223, %s224
      %p233 = scmp.eq.s32.totalorder %s24, 0
      %p234 = por %p232, %p233
      %p235 = scmp.ne.s32.totalorder %s223, %s224
      %p236 = scmp.eq.s32.totalorder %s25, 1
      %p237 = por %p235, %p236
      %p239 = scmp.ne.s32.totalorder %s224, %s238
      %p240 = scmp.eq.s32.totalorder %s25, 0
      %p241 = por %p239, %p240
      %s242 = ssub.s32 %s19, %s26
      %p243 = scmp.eq.s32.totalorder %s242, 0
      %s245 = sadd.s32 %s244, 1
      %s246 = scalar_select %p243, %s244, %s245
      %p249 = pneg %p243
      %p250 = scmp.eq.s32.totalorder %s19, 1
      %p251 = por %p249, %p250
      %p252 = scmp.ne.s32.totalorder %s244, %s247
      %p253 = scmp.eq.s32.totalorder %s19, 0
      %p254 = por %p252, %p253
      %p255 = scmp.ne.s32.totalorder %s244, %s247
      %p256 = scmp.eq.s32.totalorder %s24, 1
      %p257 = por %p255, %p256
      %p258 = scmp.ne.s32.totalorder %s247, %s248
      %p259 = scmp.eq.s32.totalorder %s24, 0
      %p260 = por %p258, %p259
      %p261 = scmp.ne.s32.totalorder %s247, %s248
      %p262 = scmp.eq.s32.totalorder %s25, 1
      %p263 = por %p261, %p262
      %p265 = scmp.ne.s32.totalorder %s248, %s264
      %p266 = scmp.eq.s32.totalorder %s25, 0
      %p267 = por %p265, %p266
      %p268 = scmp.le.s32.totalorder 1, %s19
      %p269 = scmp.lt.s32.totalorder %s19, 3
      %p270 = pnand %p268, %p269
      %p271 = pneg %p270
      // Predicated region
      $region9: #{tpu_custom_call.1} parent=5 // pred_check
        _
      $region10: #{tpu_custom_call.1} parent=5 // pred_check_branch
        %273 = sbr.rel (%p270) target = $region12
      $region11: #{tpu_custom_call.1} parent=5 // pred_region
        %s274 = ssub.s32 %s19, 1
        // Predicated region
        $region13: #{tpu_custom_call.1} parent=11 // pred_check
          %p275 = pneg %p66
        $region14: #{tpu_custom_call.1} parent=11 // pred_check_branch
          %277 = sbr.rel (%p275) target = $region16
        $region15: #{tpu_custom_call.1} parent=11 // pred_region
          _
        $region16: #{tpu_custom_call.1} parent=11 // pred_fallthru
          _
        // Predicated region
        $region17: #{tpu_custom_call.1} parent=11 // pred_check
          %p278 = pneg %p87
        $region18: #{tpu_custom_call.1} parent=11 // pred_check_branch
          %280 = sbr.rel (%p278) target = $region20
        $region19: #{tpu_custom_call.1} parent=11 // pred_region
          _
        $region20: #{tpu_custom_call.1} parent=11 // pred_fallthru
          _
        // Predicated region
        $region21: #{tpu_custom_call.1} parent=11 // pred_check
          %p281 = pneg %p108
        $region22: #{tpu_custom_call.1} parent=11 // pred_check_branch
          %283 = sbr.rel (%p281) target = $region24
        $region23: #{tpu_custom_call.1} parent=11 // pred_region
          _
        $region24: #{tpu_custom_call.1} parent=11 // pred_fallthru
          _
        // Predicated region
        $region25: #{tpu_custom_call.1} parent=11 // pred_check
          %p284 = pneg %p129
        $region26: #{tpu_custom_call.1} parent=11 // pred_check_branch
          %286 = sbr.rel (%p284) target = $region28
        $region27: #{tpu_custom_call.1} parent=11 // pred_region
          _
        $region28: #{tpu_custom_call.1} parent=11 // pred_fallthru
          _
        // Predicated region
        $region29: #{tpu_custom_call.1} parent=11 // pred_check
          %p287 = pneg %p150
        $region30: #{tpu_custom_call.1} parent=11 // pred_check_branch
          %289 = sbr.rel (%p287) target = $region32
        $region31: #{tpu_custom_call.1} parent=11 // pred_region
          _
        $region32: #{tpu_custom_call.1} parent=11 // pred_fallthru
          _
        // Predicated region
        $region33: #{tpu_custom_call.1} parent=11 // pred_check
          %p290 = pneg %p171
        $region34: #{tpu_custom_call.1} parent=11 // pred_check_branch
          %292 = sbr.rel (%p290) target = $region36
        $region35: #{tpu_custom_call.1} parent=11 // pred_region
          _
        $region36: #{tpu_custom_call.1} parent=11 // pred_fallthru
          _
        // Predicated region
        $region37: #{tpu_custom_call.1} parent=11 // pred_check
          %p293 = pneg %p192
        $region38: #{tpu_custom_call.1} parent=11 // pred_check_branch
          %295 = sbr.rel (%p293) target = $region40
        $region39: #{tpu_custom_call.1} parent=11 // pred_region
          _
        $region40: #{tpu_custom_call.1} parent=11 // pred_fallthru
          _
        // Predicated region
        $region41: #{tpu_custom_call.1} parent=11 // pred_check
          %p296 = pneg %p213
        $region42: #{tpu_custom_call.1} parent=11 // pred_check_branch
          %298 = sbr.rel (%p296) target = $region44
        $region43: #{tpu_custom_call.1} parent=11 // pred_region
          _
        $region44: #{tpu_custom_call.1} parent=11 // pred_fallthru
          _
        // Predicated region
        $region45: #{tpu_custom_call.1} parent=11 // pred_check
          %p299 = pneg %p234
        $region46: #{tpu_custom_call.1} parent=11 // pred_check_branch
          %301 = sbr.rel (%p299) target = $region48
        $region47: #{tpu_custom_call.1} parent=11 // pred_region
          _
        $region48: #{tpu_custom_call.1} parent=11 // pred_fallthru
          _
      $region12: #{tpu_custom_call.1} parent=5 // pred_fallthru
        _
      %p302 = scmp.lt.s32.totalorder %s19, 2
      // Predicated region
      $region49: #{tpu_custom_call.1} parent=5 // pred_check
        %p303 = pneg %p302
      $region50: #{tpu_custom_call.1} parent=5 // pred_check_branch
        %305 = sbr.rel (%p303) target = $region52
      $region51: #{tpu_custom_call.1} parent=5 // pred_region
        // Predicated region
        $region53: #{tpu_custom_call.1} parent=51 // pred_check
          %p306 = pneg %p39
        $region54: #{tpu_custom_call.1} parent=51 // pred_check_branch
          %308 = sbr.rel (%p306) target = $region56
        $region55: #{tpu_custom_call.1} parent=51 // pred_region
          %p309 = scmp.lt.s32.totalorder %s19, 1
          %s310 = scalar_select %p309, %s19, 1
          %s311 = smul.addr %s310, 64
          %s312 = smul.addr %s311, 4
          %s313 = scalar_lea.vmem %s0, %s312
        $region56: #{tpu_custom_call.1} parent=51 // pred_fallthru
          _
      $region52: #{tpu_custom_call.1} parent=5 // pred_fallthru
        _
      %p314 = scmp.le.s32.totalorder 1, %s19
      %p315 = scmp.lt.s32.totalorder %s19, 3
      %p316 = pnand %p314, %p315
      %p317 = pneg %p316
      // Predicated region
      $region57: #{tpu_custom_call.1} parent=5 // pred_check
        _
      $region58: #{tpu_custom_call.1} parent=5 // pred_check_branch
        %319 = sbr.rel (%p316) target = $region60
      $region59: #{tpu_custom_call.1} parent=5 // pred_region
        %s320 = ssub.s32 %s19, 1
        %p321 = scmp.lt.s32.totalorder %s24, 1
        %s322 = scalar_select %p321, %s24, 1
        %s323 = smul.addr %s322, 64
        %s324 = smul.addr %s323, 4
        %s325 = scalar_lea.vmem %s0, %s324
        %p326 = pneg %p45
        %p327 = pneg %p42
        %p328 = pneg %p66
        %p329 = pneg %p63
        %p330 = pneg %p87
        %p331 = pneg %p84
        %p332 = pneg %p108
        %p333 = pneg %p105
        %p334 = pneg %p129
        %p335 = pneg %p126
        %p336 = pneg %p150
        %p337 = pneg %p147
        %p338 = pneg %p171
        %p339 = pneg %p168
        %p340 = pneg %p192
        %p341 = pneg %p189
        %p342 = pneg %p213
        %p343 = pneg %p210
        %p344 = pneg %p234
        %p345 = pneg %p231
        %p346 = pneg %p260
        %p347 = pneg %p257
        %s348 = sand.u32 %s247, 1
        %s349 = scalar_lea.sflag [#allocation3], %s348
        %s350 = sand.u32 %s247, 1
        %s351 = smul.addr %s350, 32
        %s352 = scalar_lea.vmem [#allocation2], %s351
        %p353 = scmp.lt.s32.totalorder %s24, 1
        %s354 = scalar_select %p353, %s24, 1
        %s355 = smul.addr %s354, 64
        %s356 = smul.addr %s355, 4
        %s357 = scalar_lea.vmem %s0, %s356
        %v359 = vld [vmem:[%s357] sm:$0xf]
        %v360 = vld [vmem:[%s357 + $0x4] sm:$0xf]
        %v361 = vld [vmem:[%s357 + $0x8] sm:$0xf]
        %v362 = vld [vmem:[%s357 + $0xc] sm:$0xf]
        %v363 = vld [vmem:[%s357 + $0x10] sm:$0xf]
        %v364 = vld [vmem:[%s357 + $0x14] sm:$0xf]
        %v365 = vld [vmem:[%s357 + $0x18] sm:$0xf]
        %v366 = vld [vmem:[%s357 + $0x1c] sm:$0xf]
        %v367 = vld [vmem:[%s357 + $0x20] sm:$0xf]
        %v368 = vld [vmem:[%s357 + $0x24] sm:$0xf]
        %v369 = vld [vmem:[%s357 + $0x28] sm:$0xf]
        %v370 = vld [vmem:[%s357 + $0x2c] sm:$0xf]
        %v371 = vld [vmem:[%s357 + $0x30] sm:$0xf]
        %v372 = vld [vmem:[%s357 + $0x34] sm:$0xf]
        %v373 = vld [vmem:[%s357 + $0x38] sm:$0xf]
        %v374 = vld [vmem:[%s357 + $0x3c] sm:$0xf]
        %v375 = vld [vmem:[%s357 + $0x40] sm:$0xf]
        %v376 = vld [vmem:[%s357 + $0x44] sm:$0xf]
        %v377 = vld [vmem:[%s357 + $0x48] sm:$0xf]
        %v378 = vld [vmem:[%s357 + $0x4c] sm:$0xf]
        %v379 = vld [vmem:[%s357 + $0x50] sm:$0xf]
        %v380 = vld [vmem:[%s357 + $0x54] sm:$0xf]
        %v381 = vld [vmem:[%s357 + $0x58] sm:$0xf]
        %v382 = vld [vmem:[%s357 + $0x5c] sm:$0xf]
        %v383 = vld [vmem:[%s357 + $0x60] sm:$0xf]
        %v384 = vld [vmem:[%s357 + $0x64] sm:$0xf]
        %v385 = vld [vmem:[%s357 + $0x68] sm:$0xf]
        %v386 = vld [vmem:[%s357 + $0x6c] sm:$0xf]
        %v387 = vld [vmem:[%s357 + $0x70] sm:$0xf]
        %v388 = vld [vmem:[%s357 + $0x74] sm:$0xf]
        %v389 = vld [vmem:[%s357 + $0x78] sm:$0xf]
        %v390 = vld [vmem:[%s357 + $0x7c] sm:$0xf]
        %v391 = vld [vmem:[%s357 + $0x80] sm:$0xf]
        %v392 = vld [vmem:[%s357 + $0x84] sm:$0xf]
        %v393 = vld [vmem:[%s357 + $0x88] sm:$0xf]
        %v394 = vld [vmem:[%s357 + $0x8c] sm:$0xf]
        %v395 = vld [vmem:[%s357 + $0x90] sm:$0xf]
        %v396 = vld [vmem:[%s357 + $0x94] sm:$0xf]
        %v397 = vld [vmem:[%s357 + $0x98] sm:$0xf]
        %v398 = vld [vmem:[%s357 + $0x9c] sm:$0xf]
        %v399 = vld [vmem:[%s357 + $0xa0] sm:$0xf]
        %v400 = vld [vmem:[%s357 + $0xa4] sm:$0xf]
        %v401 = vld [vmem:[%s357 + $0xa8] sm:$0xf]
        %v402 = vld [vmem:[%s357 + $0xac] sm:$0xf]
        %v403 = vld [vmem:[%s357 + $0xb0] sm:$0xf]
        %v404 = vld [vmem:[%s357 + $0xb4] sm:$0xf]
        %v405 = vld [vmem:[%s357 + $0xb8] sm:$0xf]
        %v406 = vld [vmem:[%s357 + $0xbc] sm:$0xf]
        %v407 = vld [vmem:[%s357 + $0xc0] sm:$0xf]
        %v408 = vld [vmem:[%s357 + $0xc4] sm:$0xf]
        %v409 = vld [vmem:[%s357 + $0xc8] sm:$0xf]
        %v410 = vld [vmem:[%s357 + $0xcc] sm:$0xf]
        %v411 = vld [vmem:[%s357 + $0xd0] sm:$0xf]
        %v412 = vld [vmem:[%s357 + $0xd4] sm:$0xf]
        %v413 = vld [vmem:[%s357 + $0xd8] sm:$0xf]
        %v414 = vld [vmem:[%s357 + $0xdc] sm:$0xf]
        %v415 = vld [vmem:[%s357 + $0xe0] sm:$0xf]
        %v416 = vld [vmem:[%s357 + $0xe4] sm:$0xf]
        %v417 = vld [vmem:[%s357 + $0xe8] sm:$0xf]
        %v418 = vld [vmem:[%s357 + $0xec] sm:$0xf]
        %v419 = vld [vmem:[%s357 + $0xf0] sm:$0xf]
        %v420 = vld [vmem:[%s357 + $0xf4] sm:$0xf]
        %v421 = vld [vmem:[%s357 + $0xf8] sm:$0xf]
        %v422 = vld [vmem:[%s357 + $0xfc] sm:$0xf]
        %v423 = vld [vmem:[%s1] sm:$0x7]
        %v488 = vunpack.c.l.b16 %v359
        %v489 = vunpack.c.l.b16 %v360
        %v490 = vunpack.c.l.b16 %v361
        %v491 = vunpack.c.l.b16 %v362
        %v492 = vunpack.c.l.b16 %v363
        %v493 = vunpack.c.l.b16 %v364
        %v494 = vunpack.c.l.b16 %v365
        %v495 = vunpack.c.l.b16 %v366
        %v496 = vunpack.c.l.b16 %v367
        %v497 = vunpack.c.l.b16 %v368
        %v498 = vunpack.c.l.b16 %v369
        %v499 = vunpack.c.l.b16 %v370
        %v500 = vunpack.c.l.b16 %v371
        %v501 = vunpack.c.l.b16 %v372
        %v502 = vunpack.c.l.b16 %v373
        %v503 = vunpack.c.l.b16 %v374
        %v504 = vunpack.c.l.b16 %v375
        %v505 = vunpack.c.l.b16 %v376
        %v506 = vunpack.c.l.b16 %v377
        %v507 = vunpack.c.l.b16 %v378
        %v508 = vunpack.c.l.b16 %v379
        %v509 = vunpack.c.l.b16 %v380
        %v510 = vunpack.c.l.b16 %v381
        %v511 = vunpack.c.l.b16 %v382
        %v512 = vunpack.c.l.b16 %v383
        %v513 = vunpack.c.l.b16 %v384
        %v514 = vunpack.c.l.b16 %v385
        %v515 = vunpack.c.l.b16 %v386
        %v516 = vunpack.c.l.b16 %v387
        %v517 = vunpack.c.l.b16 %v388
        %v518 = vunpack.c.l.b16 %v389
        %v519 = vunpack.c.l.b16 %v390
        %v520 = vunpack.c.l.b16 %v391
        %v521 = vunpack.c.l.b16 %v392
        %v522 = vunpack.c.l.b16 %v393
        %v523 = vunpack.c.l.b16 %v394
        %v524 = vunpack.c.l.b16 %v395
        %v525 = vunpack.c.l.b16 %v396
        %v526 = vunpack.c.l.b16 %v397
        %v527 = vunpack.c.l.b16 %v398
        %v528 = vunpack.c.l.b16 %v399
        %v529 = vunpack.c.l.b16 %v400
        %v530 = vunpack.c.l.b16 %v401
        %v531 = vunpack.c.l.b16 %v402
        %v532 = vunpack.c.l.b16 %v403
        %v533 = vunpack.c.l.b16 %v404
        %v534 = vunpack.c.l.b16 %v405
        %v535 = vunpack.c.l.b16 %v406
        %v536 = vunpack.c.l.b16 %v407
        %v537 = vunpack.c.l.b16 %v408
        %v538 = vunpack.c.l.b16 %v409
        %v539 = vunpack.c.l.b16 %v410
        %v540 = vunpack.c.l.b16 %v411
        %v541 = vunpack.c.l.b16 %v412
        %v542 = vunpack.c.l.b16 %v413
        %v543 = vunpack.c.l.b16 %v414
        %v544 = vunpack.c.l.b16 %v415
        %v545 = vunpack.c.l.b16 %v416
        %v546 = vunpack.c.l.b16 %v417
        %v547 = vunpack.c.l.b16 %v418
        %v548 = vunpack.c.l.b16 %v419
        %v549 = vunpack.c.l.b16 %v420
        %v550 = vunpack.c.l.b16 %v421
        %v551 = vunpack.c.l.b16 %v422
        %v552 = vpack.c.b16 %v489, %v488
        %v553 = vpack.c.b16 %v491, %v490
        %v554 = vpack.c.b16 %v493, %v492
        %v555 = vpack.c.b16 %v495, %v494
        %v556 = vpack.c.b16 %v497, %v496
        %v557 = vpack.c.b16 %v499, %v498
        %v558 = vpack.c.b16 %v501, %v500
        %v559 = vpack.c.b16 %v503, %v502
        %v560 = vpack.c.b16 %v505, %v504
        %v561 = vpack.c.b16 %v507, %v506
        %v562 = vpack.c.b16 %v509, %v508
        %v563 = vpack.c.b16 %v511, %v510
        %v564 = vpack.c.b16 %v513, %v512
        %v565 = vpack.c.b16 %v515, %v514
        %v566 = vpack.c.b16 %v517, %v516
        %v567 = vpack.c.b16 %v519, %v518
        %v568 = vpack.c.b16 %v521, %v520
        %v569 = vpack.c.b16 %v523, %v522
        %v570 = vpack.c.b16 %v525, %v524
        %v571 = vpack.c.b16 %v527, %v526
        %v572 = vpack.c.b16 %v529, %v528
        %v573 = vpack.c.b16 %v531, %v530
        %v574 = vpack.c.b16 %v533, %v532
        %v575 = vpack.c.b16 %v535, %v534
        %v576 = vpack.c.b16 %v537, %v536
        %v577 = vpack.c.b16 %v539, %v538
        %v578 = vpack.c.b16 %v541, %v540
        %v579 = vpack.c.b16 %v543, %v542
        %v580 = vpack.c.b16 %v545, %v544
        %v581 = vpack.c.b16 %v547, %v546
        %v582 = vpack.c.b16 %v549, %v548
        %v583 = vpack.c.b16 %v551, %v550
        %vm584 = vcmask 48128
        %v586 = vsel %vm584, %v552, 0
        %v589 = vsel %vm584, %v553, 0
        %v592 = vsel %vm584, %v554, 0
        %v595 = vsel %vm584, %v555, 0
        %v598 = vsel %vm584, %v556, 0
        %v601 = vsel %vm584, %v557, 0
        %v604 = vsel %vm584, %v558, 0
        %v607 = vsel %vm584, %v559, 0
        %v610 = vsel %vm584, %v560, 0
        %v613 = vsel %vm584, %v561, 0
        %v616 = vsel %vm584, %v562, 0
        %v619 = vsel %vm584, %v563, 0
        %v622 = vsel %vm584, %v564, 0
        %v625 = vsel %vm584, %v565, 0
        %v628 = vsel %vm584, %v566, 0
        %v631 = vsel %vm584, %v567, 0
        %v634 = vsel %vm584, %v568, 0
        %v637 = vsel %vm584, %v569, 0
        %v640 = vsel %vm584, %v570, 0
        %v643 = vsel %vm584, %v571, 0
        %v646 = vsel %vm584, %v572, 0
        %v649 = vsel %vm584, %v573, 0
        %v652 = vsel %vm584, %v574, 0
        %v655 = vsel %vm584, %v575, 0
        %v658 = vsel %vm584, %v576, 0
        %v661 = vsel %vm584, %v577, 0
        %v664 = vsel %vm584, %v578, 0
        %v667 = vsel %vm584, %v579, 0
        %v670 = vsel %vm584, %v580, 0
        %v673 = vsel %vm584, %v581, 0
        %v676 = vsel %vm584, %v582, 0
        %v679 = vsel %vm584, %v583, 0
        %vm681 = vcmask 1042432
        %v683 = vsel %vm681, %v423, 0
        %685 = vmatprep.subr.bf16.mxu0 0
        %686 = vmatpush1.bf16.msra.mxu0 %v683
        %687 = vmatprep.subr.bf16.mxu0 0
        %688 = vmatpush1.bf16.msra.mxu0 0
        %689 = vmatprep.subr.bf16.mxu0 0
        %690 = vmatpush1.bf16.msra.mxu0 0
        %691 = vmatprep.subr.bf16.mxu0 0
        %692 = vmatpush1.bf16.msra.mxu0 0
        %693 = vmatprep.subr.bf16.mxu0 0
        %694 = vmatpush1.bf16.msra.mxu0 0
        %695 = vmatprep.subr.bf16.mxu0 0
        %696 = vmatpush1.bf16.msra.mxu0 0
        %697 = vmatprep.subr.bf16.mxu0 0
        %698 = vmatpush1.bf16.msra.mxu0 0
        %699 = vmatprep.subr.bf16.mxu0 0
        %700 = vmatpush1.bf16.msra.mxu0 0
        %701 = vmatprep.subr.bf16.mxu0 0
        %702 = vmatpush1.bf16.msra.mxu0 0
        %703 = vmatprep.subr.bf16.mxu0 0
        %704 = vmatpush1.bf16.msra.mxu0 0
        %705 = vmatprep.subr.bf16.mxu0 0
        %706 = vmatpush1.bf16.msra.mxu0 0
        %707 = vmatprep.subr.bf16.mxu0 0
        %708 = vmatpush1.bf16.msra.mxu0 0
        %709 = vmatprep.subr.bf16.mxu0 0
        %710 = vmatpush1.bf16.msra.mxu0 0
        %711 = vmatprep.subr.bf16.mxu0 0
        %712 = vmatpush1.bf16.msra.mxu0 0
        %713 = vmatprep.subr.bf16.mxu0 0
        %714 = vmatpush1.bf16.msra.mxu0 0
        %715 = vmatprep.subr.bf16.mxu0 0
        %716 = vmatpush1.bf16.msra.mxu0 0
        %717 = vmatprep.mubr.bf16.mxu0 0
        %718 = vmatmul.mubr.bf16.gmra.mrb[0].mxu0 %v586
        %v719 = vpop.f32.mrb[0].mxu0
        %v720 = vadd.f32 0.0, %v719
        %v721 = vpop.f32.mrb[0].mxu0
        %v722 = vpop.f32.mrb[0].mxu0
        %v723 = vadd.f32 0.0, %v722
        %v724 = vpop.f32.mrb[0].mxu0
        %725 = vmatprep.mubr.bf16.mxu0 0
        %726 = vmatmul.mubr.bf16.gmra.mrb[0].mxu0 %v589
        %v727 = vpop.f32.mrb[0].mxu0
        %v728 = vadd.f32 0.0, %v727
        %v729 = vpop.f32.mrb[0].mxu0
        %v730 = vpop.f32.mrb[0].mxu0
        %v731 = vadd.f32 0.0, %v730
        %v732 = vpop.f32.mrb[0].mxu0
        %733 = vmatprep.mubr.bf16.mxu0 0
        %734 = vmatmul.mubr.bf16.gmra.mrb[0].mxu0 %v592
        %v735 = vpop.f32.mrb[0].mxu0
        %v736 = vadd.f32 0.0, %v735
        %v737 = vpop.f32.mrb[0].mxu0
        %v738 = vpop.f32.mrb[0].mxu0
        %v739 = vadd.f32 0.0, %v738
        %v740 = vpop.f32.mrb[0].mxu0
        %741 = vmatprep.mubr.bf16.mxu0 0
        %742 = vmatmul.mubr.bf16.gmra.mrb[0].mxu0 %v595
        %v743 = vpop.f32.mrb[0].mxu0
        %v744 = vadd.f32 0.0, %v743
        %v745 = vpop.f32.mrb[0].mxu0
        %v746 = vpop.f32.mrb[0].mxu0
        %v747 = vadd.f32 0.0, %v746
        %v748 = vpop.f32.mrb[0].mxu0
        %749 = vmatprep.mubr.bf16.mxu0 0
        %750 = vmatmul.mubr.bf16.gmra.mrb[0].mxu0 %v598
        %v751 = vpop.f32.mrb[0].mxu0
        %v752 = vadd.f32 0.0, %v751
        %v753 = vpop.f32.mrb[0].mxu0
        %v754 = vpop.f32.mrb[0].mxu0
        %v755 = vadd.f32 0.0, %v754
        %v756 = vpop.f32.mrb[0].mxu0
        %757 = vmatprep.mubr.bf16.mxu0 0
        %758 = vmatmul.mubr.bf16.gmra.mrb[0].mxu0 %v601
        %v759 = vpop.f32.mrb[0].mxu0
        %v760 = vadd.f32 0.0, %v759
        %v761 = vpop.f32.mrb[0].mxu0
        %v762 = vpop.f32.mrb[0].mxu0
        %v763 = vadd.f32 0.0, %v762
        %v764 = vpop.f32.mrb[0].mxu0
        %765 = vmatprep.mubr.bf16.mxu0 0
        %766 = vmatmul.mubr.bf16.gmra.mrb[0].mxu0 %v604
        %v767 = vpop.f32.mrb[0].mxu0
        %v768 = vadd.f32 0.0, %v767
        %v769 = vpop.f32.mrb[0].mxu0
        %v770 = vpop.f32.mrb[0].mxu0
        %v771 = vadd.f32 0.0, %v770
        %v772 = vpop.f32.mrb[0].mxu0
        %773 = vmatprep.mubr.bf16.mxu0 0
        %774 = vmatmul.mubr.bf16.gmra.mrb[0].mxu0 %v607
        %v775 = vpop.f32.mrb[0].mxu0
        %v776 = vadd.f32 0.0, %v775
        %v777 = vpop.f32.mrb[0].mxu0
        %v778 = vpop.f32.mrb[0].mxu0
        %v779 = vadd.f32 0.0, %v778
        %v780 = vpop.f32.mrb[0].mxu0
        %781 = vmatprep.mubr.bf16.mxu0 0
        %782 = vmatmul.mubr.bf16.gmra.mrb[0].mxu0 %v610
        %v783 = vpop.f32.mrb[0].mxu0
        %v784 = vadd.f32 0.0, %v783
        %v785 = vpop.f32.mrb[0].mxu0
        %v786 = vpop.f32.mrb[0].mxu0
        %v787 = vadd.f32 0.0, %v786
        %v788 = vpop.f32.mrb[0].mxu0
        %789 = vmatprep.mubr.bf16.mxu0 0
        %790 = vmatmul.mubr.bf16.gmra.mrb[0].mxu0 %v613
        %v791 = vpop.f32.mrb[0].mxu0
        %v792 = vadd.f32 0.0, %v791
        %v793 = vpop.f32.mrb[0].mxu0
        %v794 = vpop.f32.mrb[0].mxu0
        %v795 = vadd.f32 0.0, %v794
        %v796 = vpop.f32.mrb[0].mxu0
        %797 = vmatprep.mubr.bf16.mxu0 0
        %798 = vmatmul.mubr.bf16.gmra.mrb[0].mxu0 %v616
        %v799 = vpop.f32.mrb[0].mxu0
        %v800 = vadd.f32 0.0, %v799
        %v801 = vpop.f32.mrb[0].mxu0
        %v802 = vpop.f32.mrb[0].mxu0
        %v803 = vadd.f32 0.0, %v802
        %v804 = vpop.f32.mrb[0].mxu0
        %805 = vmatprep.mubr.bf16.mxu0 0
        %806 = vmatmul.mubr.bf16.gmra.mrb[0].mxu0 %v619
        %v807 = vpop.f32.mrb[0].mxu0
        %v808 = vadd.f32 0.0, %v807
        %v809 = vpop.f32.mrb[0].mxu0
        %v810 = vpop.f32.mrb[0].mxu0
        %v811 = vadd.f32 0.0, %v810
        %v812 = vpop.f32.mrb[0].mxu0
        %813 = vmatprep.mubr.bf16.mxu0 0
        %814 = vmatmul.mubr.bf16.gmra.mrb[0].mxu0 %v622
        %v815 = vpop.f32.mrb[0].mxu0
        %v816 = vadd.f32 0.0, %v815
        %v817 = vpop.f32.mrb[0].mxu0
        %v818 = vpop.f32.mrb[0].mxu0
        %v819 = vadd.f32 0.0, %v818
        %v820 = vpop.f32.mrb[0].mxu0
        %821 = vmatprep.mubr.bf16.mxu0 0
        %822 = vmatmul.mubr.bf16.gmra.mrb[0].mxu0 %v625
        %v823 = vpop.f32.mrb[0].mxu0
        %v824 = vadd.f32 0.0, %v823
        %v825 = vpop.f32.mrb[0].mxu0
        %v826 = vpop.f32.mrb[0].mxu0
        %v827 = vadd.f32 0.0, %v826
        %v828 = vpop.f32.mrb[0].mxu0
        %829 = vmatprep.mubr.bf16.mxu0 0
        %830 = vmatmul.mubr.bf16.gmra.mrb[0].mxu0 %v628
        %v831 = vpop.f32.mrb[0].mxu0
        %v832 = vadd.f32 0.0, %v831
        %v833 = vpop.f32.mrb[0].mxu0
        %v834 = vpop.f32.mrb[0].mxu0
        %v835 = vadd.f32 0.0, %v834
        %v836 = vpop.f32.mrb[0].mxu0
        %837 = vmatprep.mubr.bf16.mxu0 0
        %838 = vmatmul.mubr.bf16.gmra.mrb[0].mxu0 %v631
        %v839 = vpop.f32.mrb[0].mxu0
        %v840 = vadd.f32 0.0, %v839
        %v841 = vpop.f32.mrb[0].mxu0
        %v842 = vpop.f32.mrb[0].mxu0
        %v843 = vadd.f32 0.0, %v842
        %v844 = vpop.f32.mrb[0].mxu0
        %845 = vmatprep.mubr.bf16.mxu0 0
        %846 = vmatmul.mubr.bf16.gmra.mrb[0].mxu0 %v634
        %v847 = vpop.f32.mrb[0].mxu0
        %v848 = vadd.f32 0.0, %v847
        %v849 = vpop.f32.mrb[0].mxu0
        %v850 = vpop.f32.mrb[0].mxu0
        %v851 = vadd.f32 0.0, %v850
        %v852 = vpop.f32.mrb[0].mxu0
        %853 = vmatprep.mubr.bf16.mxu0 0
        %854 = vmatmul.mubr.bf16.gmra.mrb[0].mxu0 %v637
        %v855 = vpop.f32.mrb[0].mxu0
        %v856 = vadd.f32 0.0, %v855
        %v857 = vpop.f32.mrb[0].mxu0
        %v858 = vpop.f32.mrb[0].mxu0
        %v859 = vadd.f32 0.0, %v858
        %v860 = vpop.f32.mrb[0].mxu0
        %861 = vmatprep.mubr.bf16.mxu0 0
        %862 = vmatmul.mubr.bf16.gmra.mrb[0].mxu0 %v640
        %v863 = vpop.f32.mrb[0].mxu0
        %v864 = vadd.f32 0.0, %v863
        %v865 = vpop.f32.mrb[0].mxu0
        %v866 = vpop.f32.mrb[0].mxu0
        %v867 = vadd.f32 0.0, %v866
        %v868 = vpop.f32.mrb[0].mxu0
        %869 = vmatprep.mubr.bf16.mxu0 0
        %870 = vmatmul.mubr.bf16.gmra.mrb[0].mxu0 %v643
        %v871 = vpop.f32.mrb[0].mxu0
        %v872 = vadd.f32 0.0, %v871
        %v873 = vpop.f32.mrb[0].mxu0
        %v874 = vpop.f32.mrb[0].mxu0
        %v875 = vadd.f32 0.0, %v874
        %v876 = vpop.f32.mrb[0].mxu0
        %877 = vmatprep.mubr.bf16.mxu0 0
        %878 = vmatmul.mubr.bf16.gmra.mrb[0].mxu0 %v646
        %v879 = vpop.f32.mrb[0].mxu0
        %v880 = vadd.f32 0.0, %v879
        %v881 = vpop.f32.mrb[0].mxu0
        %v882 = vpop.f32.mrb[0].mxu0
        %v883 = vadd.f32 0.0, %v882
        %v884 = vpop.f32.mrb[0].mxu0
        %885 = vmatprep.mubr.bf16.mxu0 0
        %886 = vmatmul.mubr.bf16.gmra.mrb[0].mxu0 %v649
        %v887 = vpop.f32.mrb[0].mxu0
        %v888 = vadd.f32 0.0, %v887
        %v889 = vpop.f32.mrb[0].mxu0
        %v890 = vpop.f32.mrb[0].mxu0
        %v891 = vadd.f32 0.0, %v890
        %v892 = vpop.f32.mrb[0].mxu0
        %893 = vmatprep.mubr.bf16.mxu0 0
        %894 = vmatmul.mubr.bf16.gmra.mrb[0].mxu0 %v652
        %v895 = vpop.f32.mrb[0].mxu0
        %v896 = vadd.f32 0.0, %v895
        %v897 = vpop.f32.mrb[0].mxu0
        %v898 = vpop.f32.mrb[0].mxu0
        %v899 = vadd.f32 0.0, %v898
        %v900 = vpop.f32.mrb[0].mxu0
        %901 = vmatprep.mubr.bf16.mxu0 0
        %902 = vmatmul.mubr.bf16.gmra.mrb[0].mxu0 %v655
        %v903 = vpop.f32.mrb[0].mxu0
        %v904 = vadd.f32 0.0, %v903
        %v905 = vpop.f32.mrb[0].mxu0
        %v906 = vpop.f32.mrb[0].mxu0
        %v907 = vadd.f32 0.0, %v906
        %v908 = vpop.f32.mrb[0].mxu0
        %909 = vmatprep.mubr.bf16.mxu0 0
        %910 = vmatmul.mubr.bf16.gmra.mrb[0].mxu0 %v658
        %v911 = vpop.f32.mrb[0].mxu0
        %v912 = vadd.f32 0.0, %v911
        %v913 = vpop.f32.mrb[0].mxu0
        %v914 = vpop.f32.mrb[0].mxu0
        %v915 = vadd.f32 0.0, %v914
        %v916 = vpop.f32.mrb[0].mxu0
        %917 = vmatprep.mubr.bf16.mxu0 0
        %918 = vmatmul.mubr.bf16.gmra.mrb[0].mxu0 %v661
        %v919 = vpop.f32.mrb[0].mxu0
        %v920 = vadd.f32 0.0, %v919
        %v921 = vpop.f32.mrb[0].mxu0
        %v922 = vpop.f32.mrb[0].mxu0
        %v923 = vadd.f32 0.0, %v922
        %v924 = vpop.f32.mrb[0].mxu0
        %925 = vmatprep.mubr.bf16.mxu0 0
        %926 = vmatmul.mubr.bf16.gmra.mrb[0].mxu0 %v664
        %v927 = vpop.f32.mrb[0].mxu0
        %v928 = vadd.f32 0.0, %v927
        %v929 = vpop.f32.mrb[0].mxu0
        %v930 = vpop.f32.mrb[0].mxu0
        %v931 = vadd.f32 0.0, %v930
        %v932 = vpop.f32.mrb[0].mxu0
        %933 = vmatprep.mubr.bf16.mxu0 0
        %934 = vmatmul.mubr.bf16.gmra.mrb[0].mxu0 %v667
        %v935 = vpop.f32.mrb[0].mxu0
        %v936 = vadd.f32 0.0, %v935
        %v937 = vpop.f32.mrb[0].mxu0
        %v938 = vpop.f32.mrb[0].mxu0
        %v939 = vadd.f32 0.0, %v938
        %v940 = vpop.f32.mrb[0].mxu0
        %941 = vmatprep.mubr.bf16.mxu0 0
        %942 = vmatmul.mubr.bf16.gmra.mrb[0].mxu0 %v670
        %v943 = vpop.f32.mrb[0].mxu0
        %v944 = vadd.f32 0.0, %v943
        %v945 = vpop.f32.mrb[0].mxu0
        %v946 = vpop.f32.mrb[0].mxu0
        %v947 = vadd.f32 0.0, %v946
        %v948 = vpop.f32.mrb[0].mxu0
        %949 = vmatprep.mubr.bf16.mxu0 0
        %950 = vmatmul.mubr.bf16.gmra.mrb[0].mxu0 %v673
        %v951 = vpop.f32.mrb[0].mxu0
        %v952 = vadd.f32 0.0, %v951
        %v953 = vpop.f32.mrb[0].mxu0
        %v954 = vpop.f32.mrb[0].mxu0
        %v955 = vadd.f32 0.0, %v954
        %v956 = vpop.f32.mrb[0].mxu0
        %957 = vmatprep.mubr.bf16.mxu0 0
        %958 = vmatmul.mubr.bf16.gmra.mrb[0].mxu0 %v676
        %v959 = vpop.f32.mrb[0].mxu0
        %v960 = vadd.f32 0.0, %v959
        %v961 = vpop.f32.mrb[0].mxu0
        %v962 = vpop.f32.mrb[0].mxu0
        %v963 = vadd.f32 0.0, %v962
        %v964 = vpop.f32.mrb[0].mxu0
        %965 = vmatprep.mubr.bf16.mxu0 0
        %966 = vmatmul.mubr.bf16.gmra.mrb[0].mxu0 %v679
        %v967 = vpop.f32.mrb[0].mxu0
        %v968 = vadd.f32 0.0, %v967
        %v969 = vpop.f32.mrb[0].mxu0
        %v970 = vpop.f32.mrb[0].mxu0
        %v971 = vadd.f32 0.0, %v970
        %v972 = vpop.f32.mrb[0].mxu0
        %973 = vdwg.mxu0
        %v974 = vadd.f32 %v720, %v723
        %v975 = vadd.f32 %v974, %v728
        %v976 = vadd.f32 %v975, %v731
        %v977 = vadd.f32 %v976, %v736
        %v978 = vadd.f32 %v977, %v739
        %v979 = vadd.f32 %v978, %v744
        %v980 = vadd.f32 %v979, %v747
        %v981 = vadd.f32 %v980, %v752
        %v982 = vadd.f32 %v981, %v755
        %v983 = vadd.f32 %v982, %v760
        %v984 = vadd.f32 %v983, %v763
        %v985 = vadd.f32 %v984, %v768
        %v986 = vadd.f32 %v985, %v771
        %v987 = vadd.f32 %v986, %v776
        %v988 = vadd.f32 %v987, %v779
        %v989 = vadd.f32 %v988, %v784
        %v990 = vadd.f32 %v989, %v787
        %v991 = vadd.f32 %v990, %v792
        %v992 = vadd.f32 %v991, %v795
        %v993 = vadd.f32 %v992, %v800
        %v994 = vadd.f32 %v993, %v803
        %v995 = vadd.f32 %v994, %v808
        %v996 = vadd.f32 %v995, %v811
        %v997 = vadd.f32 %v996, %v816
        %v998 = vadd.f32 %v997, %v819
        %v999 = vadd.f32 %v998, %v824
        %v1000 = vadd.f32 %v999, %v827
        %v1001 = vadd.f32 %v1000, %v832
        %v1002 = vadd.f32 %v1001, %v835
        %v1003 = vadd.f32 %v1002, %v840
        %v1004 = vadd.f32 %v1003, %v843
        %v1005 = vadd.f32 %v1004, %v848
        %v1006 = vadd.f32 %v1005, %v851
        %v1007 = vadd.f32 %v1006, %v856
        %v1008 = vadd.f32 %v1007, %v859
        %v1009 = vadd.f32 %v1008, %v864
        %v1010 = vadd.f32 %v1009, %v867
        %v1011 = vadd.f32 %v1010, %v872
        %v1012 = vadd.f32 %v1011, %v875
        %v1013 = vadd.f32 %v1012, %v880
        %v1014 = vadd.f32 %v1013, %v883
        %v1015 = vadd.f32 %v1014, %v888
        %v1016 = vadd.f32 %v1015, %v891
        %v1017 = vadd.f32 %v1016, %v896
        %v1018 = vadd.f32 %v1017, %v899
        %v1019 = vadd.f32 %v1018, %v904
        %v1020 = vadd.f32 %v1019, %v907
        %v1021 = vadd.f32 %v1020, %v912
        %v1022 = vadd.f32 %v1021, %v915
        %v1023 = vadd.f32 %v1022, %v920
        %v1024 = vadd.f32 %v1023, %v923
        %v1025 = vadd.f32 %v1024, %v928
        %v1026 = vadd.f32 %v1025, %v931
        %v1027 = vadd.f32 %v1026, %v936
        %v1028 = vadd.f32 %v1027, %v939
        %v1029 = vadd.f32 %v1028, %v944
        %v1030 = vadd.f32 %v1029, %v947
        %v1031 = vadd.f32 %v1030, %v952
        %v1032 = vadd.f32 %v1031, %v955
        %v1033 = vadd.f32 %v1032, %v960
        %v1034 = vadd.f32 %v1033, %v963
        %v1035 = vadd.f32 %v1034, %v968
        %v1036 = vadd.f32 %v1035, %v971
        %v1037 = vrot.slane %v1036, 4
        %v1038 = vadd.f32 %v1036, %v1037
        %v1039 = vrot.slane %v1038, 2
        %v1040 = vadd.f32 %v1038, %v1039
        %v1041 = vrot.slane %v1040, 1
        %v1042 = vadd.f32 %v1040, %v1041
        %v1043 = vrcp.pop 512.0
        %v1044 = vmul.f32 %v1042, %v1043
        %v1045 = vsub.f32 %v720, %v1044
        %v1046 = vsub.f32 %v723, %v1044
        %v1047 = vsub.f32 %v728, %v1044
        %v1048 = vsub.f32 %v731, %v1044
        %v1049 = vsub.f32 %v736, %v1044
        %v1050 = vsub.f32 %v739, %v1044
        %v1051 = vsub.f32 %v744, %v1044
        %v1052 = vsub.f32 %v747, %v1044
        %v1053 = vsub.f32 %v752, %v1044
        %v1054 = vsub.f32 %v755, %v1044
        %v1055 = vsub.f32 %v760, %v1044
        %v1056 = vsub.f32 %v763, %v1044
        %v1057 = vsub.f32 %v768, %v1044
        %v1058 = vsub.f32 %v771, %v1044
        %v1059 = vsub.f32 %v776, %v1044
        %v1060 = vsub.f32 %v779, %v1044
        %v1061 = vsub.f32 %v784, %v1044
        %v1062 = vsub.f32 %v787, %v1044
        %v1063 = vsub.f32 %v792, %v1044
        %v1064 = vsub.f32 %v795, %v1044
        %v1065 = vsub.f32 %v800, %v1044
        %v1066 = vsub.f32 %v803, %v1044
        %v1067 = vsub.f32 %v808, %v1044
        %v1068 = vsub.f32 %v811, %v1044
        %v1069 = vsub.f32 %v816, %v1044
        %v1070 = vsub.f32 %v819, %v1044
        %v1071 = vsub.f32 %v824, %v1044
        %v1072 = vsub.f32 %v827, %v1044
        %v1073 = vsub.f32 %v832, %v1044
        %v1074 = vsub.f32 %v835, %v1044
        %v1075 = vsub.f32 %v840, %v1044
        %v1076 = vsub.f32 %v843, %v1044
        %v1077 = vsub.f32 %v848, %v1044
        %v1078 = vsub.f32 %v851, %v1044
        %v1079 = vsub.f32 %v856, %v1044
        %v1080 = vsub.f32 %v859, %v1044
        %v1081 = vsub.f32 %v864, %v1044
        %v1082 = vsub.f32 %v867, %v1044
        %v1083 = vsub.f32 %v872, %v1044
        %v1084 = vsub.f32 %v875, %v1044
        %v1085 = vsub.f32 %v880, %v1044
        %v1086 = vsub.f32 %v883, %v1044
        %v1087 = vsub.f32 %v888, %v1044
        %v1088 = vsub.f32 %v891, %v1044
        %v1089 = vsub.f32 %v896, %v1044
        %v1090 = vsub.f32 %v899, %v1044
        %v1091 = vsub.f32 %v904, %v1044
        %v1092 = vsub.f32 %v907, %v1044
        %v1093 = vsub.f32 %v912, %v1044
        %v1094 = vsub.f32 %v915, %v1044
        %v1095 = vsub.f32 %v920, %v1044
        %v1096 = vsub.f32 %v923, %v1044
        %v1097 = vsub.f32 %v928, %v1044
        %v1098 = vsub.f32 %v931, %v1044
        %v1099 = vsub.f32 %v936, %v1044
        %v1100 = vsub.f32 %v939, %v1044
        %v1101 = vsub.f32 %v944, %v1044
        %v1102 = vsub.f32 %v947, %v1044
        %v1103 = vsub.f32 %v952, %v1044
        %v1104 = vsub.f32 %v955, %v1044
        %v1105 = vsub.f32 %v960, %v1044
        %v1106 = vsub.f32 %v963, %v1044
        %v1107 = vsub.f32 %v968, %v1044
        %v1108 = vsub.f32 %v971, %v1044
        %v1109 = vmul.f32 %v1045, %v1045
        %v1110 = vmul.f32 %v1046, %v1046
        %v1111 = vmul.f32 %v1047, %v1047
        %v1112 = vmul.f32 %v1048, %v1048
        %v1113 = vmul.f32 %v1049, %v1049
        %v1114 = vmul.f32 %v1050, %v1050
        %v1115 = vmul.f32 %v1051, %v1051
        %v1116 = vmul.f32 %v1052, %v1052
        %v1117 = vmul.f32 %v1053, %v1053
        %v1118 = vmul.f32 %v1054, %v1054
        %v1119 = vmul.f32 %v1055, %v1055
        %v1120 = vmul.f32 %v1056, %v1056
        %v1121 = vmul.f32 %v1057, %v1057
        %v1122 = vmul.f32 %v1058, %v1058
        %v1123 = vmul.f32 %v1059, %v1059
        %v1124 = vmul.f32 %v1060, %v1060
        %v1125 = vmul.f32 %v1061, %v1061
        %v1126 = vmul.f32 %v1062, %v1062
        %v1127 = vmul.f32 %v1063, %v1063
        %v1128 = vmul.f32 %v1064, %v1064
        %v1129 = vmul.f32 %v1065, %v1065
        %v1130 = vmul.f32 %v1066, %v1066
        %v1131 = vmul.f32 %v1067, %v1067
        %v1132 = vmul.f32 %v1068, %v1068
        %v1133 = vmul.f32 %v1069, %v1069
        %v1134 = vmul.f32 %v1070, %v1070
        %v1135 = vmul.f32 %v1071, %v1071
        %v1136 = vmul.f32 %v1072, %v1072
        %v1137 = vmul.f32 %v1073, %v1073
        %v1138 = vmul.f32 %v1074, %v1074
        %v1139 = vmul.f32 %v1075, %v1075
        %v1140 = vmul.f32 %v1076, %v1076
        %v1141 = vmul.f32 %v1077, %v1077
        %v1142 = vmul.f32 %v1078, %v1078
        %v1143 = vmul.f32 %v1079, %v1079
        %v1144 = vmul.f32 %v1080, %v1080
        %v1145 = vmul.f32 %v1081, %v1081
        %v1146 = vmul.f32 %v1082, %v1082
        %v1147 = vmul.f32 %v1083, %v1083
        %v1148 = vmul.f32 %v1084, %v1084
        %v1149 = vmul.f32 %v1085, %v1085
        %v1150 = vmul.f32 %v1086, %v1086
        %v1151 = vmul.f32 %v1087, %v1087
        %v1152 = vmul.f32 %v1088, %v1088
        %v1153 = vmul.f32 %v1089, %v1089
        %v1154 = vmul.f32 %v1090, %v1090
        %v1155 = vmul.f32 %v1091, %v1091
        %v1156 = vmul.f32 %v1092, %v1092
        %v1157 = vmul.f32 %v1093, %v1093
        %v1158 = vmul.f32 %v1094, %v1094
        %v1159 = vmul.f32 %v1095, %v1095
        %v1160 = vmul.f32 %v1096, %v1096
        %v1161 = vmul.f32 %v1097, %v1097
        %v1162 = vmul.f32 %v1098, %v1098
        %v1163 = vmul.f32 %v1099, %v1099
        %v1164 = vmul.f32 %v1100, %v1100
        %v1165 = vmul.f32 %v1101, %v1101
        %v1166 = vmul.f32 %v1102, %v1102
        %v1167 = vmul.f32 %v1103, %v1103
        %v1168 = vmul.f32 %v1104, %v1104
        %v1169 = vmul.f32 %v1105, %v1105
        %v1170 = vmul.f32 %v1106, %v1106
        %v1171 = vmul.f32 %v1107, %v1107
        %v1172 = vmul.f32 %v1108, %v1108
        %v1173 = vadd.f32 %v1109, %v1110
        %v1174 = vadd.f32 %v1173, %v1111
        %v1175 = vadd.f32 %v1174, %v1112
        %v1176 = vadd.f32 %v1175, %v1113
        %v1177 = vadd.f32 %v1176, %v1114
        %v1178 = vadd.f32 %v1177, %v1115
        %v1179 = vadd.f32 %v1178, %v1116
        %v1180 = vadd.f32 %v1179, %v1117
        %v1181 = vadd.f32 %v1180, %v1118
        %v1182 = vadd.f32 %v1181, %v1119
        %v1183 = vadd.f32 %v1182, %v1120
        %v1184 = vadd.f32 %v1183, %v1121
        %v1185 = vadd.f32 %v1184, %v1122
        %v1186 = vadd.f32 %v1185, %v1123
        %v1187 = vadd.f32 %v1186, %v1124
        %v1188 = vadd.f32 %v1187, %v1125
        %v1189 = vadd.f32 %v1188, %v1126
        %v1190 = vadd.f32 %v1189, %v1127
        %v1191 = vadd.f32 %v1190, %v1128
        %v1192 = vadd.f32 %v1191, %v1129
        %v1193 = vadd.f32 %v1192, %v1130
        %v1194 = vadd.f32 %v1193, %v1131
        %v1195 = vadd.f32 %v1194, %v1132
        %v1196 = vadd.f32 %v1195, %v1133
        %v1197 = vadd.f32 %v1196, %v1134
        %v1198 = vadd.f32 %v1197, %v1135
        %v1199 = vadd.f32 %v1198, %v1136
        %v1200 = vadd.f32 %v1199, %v1137
        %v1201 = vadd.f32 %v1200, %v1138
        %v1202 = vadd.f32 %v1201, %v1139
        %v1203 = vadd.f32 %v1202, %v1140
        %v1204 = vadd.f32 %v1203, %v1141
        %v1205 = vadd.f32 %v1204, %v1142
        %v1206 = vadd.f32 %v1205, %v1143
        %v1207 = vadd.f32 %v1206, %v1144
        %v1208 = vadd.f32 %v1207, %v1145
        %v1209 = vadd.f32 %v1208, %v1146
        %v1210 = vadd.f32 %v1209, %v1147
        %v1211 = vadd.f32 %v1210, %v1148
        %v1212 = vadd.f32 %v1211, %v1149
        %v1213 = vadd.f32 %v1212, %v1150
        %v1214 = vadd.f32 %v1213, %v1151
        %v1215 = vadd.f32 %v1214, %v1152
        %v1216 = vadd.f32 %v1215, %v1153
        %v1217 = vadd.f32 %v1216, %v1154
        %v1218 = vadd.f32 %v1217, %v1155
        %v1219 = vadd.f32 %v1218, %v1156
        %v1220 = vadd.f32 %v1219, %v1157
        %v1221 = vadd.f32 %v1220, %v1158
        %v1222 = vadd.f32 %v1221, %v1159
        %v1223 = vadd.f32 %v1222, %v1160
        %v1224 = vadd.f32 %v1223, %v1161
        %v1225 = vadd.f32 %v1224, %v1162
        %v1226 = vadd.f32 %v1225, %v1163
        %v1227 = vadd.f32 %v1226, %v1164
        %v1228 = vadd.f32 %v1227, %v1165
        %v1229 = vadd.f32 %v1228, %v1166
        %v1230 = vadd.f32 %v1229, %v1167
        %v1231 = vadd.f32 %v1230, %v1168
        %v1232 = vadd.f32 %v1231, %v1169
        %v1233 = vadd.f32 %v1232, %v1170
        %v1234 = vadd.f32 %v1233, %v1171
        %v1235 = vadd.f32 %v1234, %v1172
        %v1236 = vrot.slane %v1235, 4
        %v1237 = vadd.f32 %v1235, %v1236
        %v1238 = vrot.slane %v1237, 2
        %v1239 = vadd.f32 %v1237, %v1238
        %v1240 = vrot.slane %v1239, 1
        %v1241 = vadd.f32 %v1239, %v1240
        %v1242 = vmul.f32 %v1241, %v1043
        %v1243 = vadd.f32 %v1242, 1e-05
        %v1244 = vrsqrt.pop %v1243
        %v1245 = vmul.f32 %v1045, %v1244
        %v1246 = vmul.f32 %v1046, %v1244
        %v1247 = vmul.f32 %v1047, %v1244
        %v1248 = vmul.f32 %v1048, %v1244
        %v1249 = vmul.f32 %v1049, %v1244
        %v1250 = vmul.f32 %v1050, %v1244
        %v1251 = vmul.f32 %v1051, %v1244
        %v1252 = vmul.f32 %v1052, %v1244
        %v1253 = vmul.f32 %v1053, %v1244
        %v1254 = vmul.f32 %v1054, %v1244
        %v1255 = vmul.f32 %v1055, %v1244
        %v1256 = vmul.f32 %v1056, %v1244
        %v1257 = vmul.f32 %v1057, %v1244
        %v1258 = vmul.f32 %v1058, %v1244
        %v1259 = vmul.f32 %v1059, %v1244
        %v1260 = vmul.f32 %v1060, %v1244
        %v1261 = vmul.f32 %v1061, %v1244
        %v1262 = vmul.f32 %v1062, %v1244
        %v1263 = vmul.f32 %v1063, %v1244
        %v1264 = vmul.f32 %v1064, %v1244
        %v1265 = vmul.f32 %v1065, %v1244
        %v1266 = vmul.f32 %v1066, %v1244
        %v1267 = vmul.f32 %v1067, %v1244
        %v1268 = vmul.f32 %v1068, %v1244
        %v1269 = vmul.f32 %v1069, %v1244
        %v1270 = vmul.f32 %v1070, %v1244
        %v1271 = vmul.f32 %v1071, %v1244
        %v1272 = vmul.f32 %v1072, %v1244
        %v1273 = vmul.f32 %v1073, %v1244
        %v1274 = vmul.f32 %v1074, %v1244
        %v1275 = vmul.f32 %v1075, %v1244
        %v1276 = vmul.f32 %v1076, %v1244
        %v1277 = vmul.f32 %v1077, %v1244
        %v1278 = vmul.f32 %v1078, %v1244
        %v1279 = vmul.f32 %v1079, %v1244
        %v1280 = vmul.f32 %v1080, %v1244
        %v1281 = vmul.f32 %v1081, %v1244
        %v1282 = vmul.f32 %v1082, %v1244
        %v1283 = vmul.f32 %v1083, %v1244
        %v1284 = vmul.f32 %v1084, %v1244
        %v1285 = vmul.f32 %v1085, %v1244
        %v1286 = vmul.f32 %v1086, %v1244
        %v1287 = vmul.f32 %v1087, %v1244
        %v1288 = vmul.f32 %v1088, %v1244
        %v1289 = vmul.f32 %v1089, %v1244
        %v1290 = vmul.f32 %v1090, %v1244
        %v1291 = vmul.f32 %v1091, %v1244
        %v1292 = vmul.f32 %v1092, %v1244
        %v1293 = vmul.f32 %v1093, %v1244
        %v1294 = vmul.f32 %v1094, %v1244
        %v1295 = vmul.f32 %v1095, %v1244
        %v1296 = vmul.f32 %v1096, %v1244
        %v1297 = vmul.f32 %v1097, %v1244
        %v1298 = vmul.f32 %v1098, %v1244
        %v1299 = vmul.f32 %v1099, %v1244
        %v1300 = vmul.f32 %v1100, %v1244
        %v1301 = vmul.f32 %v1101, %v1244
        %v1302 = vmul.f32 %v1102, %v1244
        %v1303 = vmul.f32 %v1103, %v1244
        %v1304 = vmul.f32 %v1104, %v1244
        %v1305 = vmul.f32 %v1105, %v1244
        %v1306 = vmul.f32 %v1106, %v1244
        %v1307 = vmul.f32 %v1107, %v1244
        %v1308 = vmul.f32 %v1108, %v1244
        %v1309 = vld [vmem:[%s2] sm:$0x1]
        %v1311 = vlaneseq
        %v1312 = vshrl.u32 %v1311, 7
        %v1313 = vsub.s32 0, %v1312
        %v1314 = vrot.slane %v1309, %v1313
        %v1316 = vmul.f32 %v1245, %v1314
        %v1317 = vmul.f32 %v1246, %v1314
        %v1318 = vmul.f32 %v1247, %v1314
        %v1319 = vmul.f32 %v1248, %v1314
        %v1320 = vmul.f32 %v1249, %v1314
        %v1321 = vmul.f32 %v1250, %v1314
        %v1322 = vmul.f32 %v1251, %v1314
        %v1323 = vmul.f32 %v1252, %v1314
        %v1324 = vmul.f32 %v1253, %v1314
        %v1325 = vmul.f32 %v1254, %v1314
        %v1326 = vmul.f32 %v1255, %v1314
        %v1327 = vmul.f32 %v1256, %v1314
        %v1328 = vmul.f32 %v1257, %v1314
        %v1329 = vmul.f32 %v1258, %v1314
        %v1330 = vmul.f32 %v1259, %v1314
        %v1331 = vmul.f32 %v1260, %v1314
        %v1332 = vmul.f32 %v1261, %v1314
        %v1333 = vmul.f32 %v1262, %v1314
        %v1334 = vmul.f32 %v1263, %v1314
        %v1335 = vmul.f32 %v1264, %v1314
        %v1336 = vmul.f32 %v1265, %v1314
        %v1337 = vmul.f32 %v1266, %v1314
        %v1338 = vmul.f32 %v1267, %v1314
        %v1339 = vmul.f32 %v1268, %v1314
        %v1340 = vmul.f32 %v1269, %v1314
        %v1341 = vmul.f32 %v1270, %v1314
        %v1342 = vmul.f32 %v1271, %v1314
        %v1343 = vmul.f32 %v1272, %v1314
        %v1344 = vmul.f32 %v1273, %v1314
        %v1345 = vmul.f32 %v1274, %v1314
        %v1346 = vmul.f32 %v1275, %v1314
        %v1347 = vmul.f32 %v1276, %v1314
        %v1348 = vmul.f32 %v1277, %v1314
        %v1349 = vmul.f32 %v1278, %v1314
        %v1350 = vmul.f32 %v1279, %v1314
        %v1351 = vmul.f32 %v1280, %v1314
        %v1352 = vmul.f32 %v1281, %v1314
        %v1353 = vmul.f32 %v1282, %v1314
        %v1354 = vmul.f32 %v1283, %v1314
        %v1355 = vmul.f32 %v1284, %v1314
        %v1356 = vmul.f32 %v1285, %v1314
        %v1357 = vmul.f32 %v1286, %v1314
        %v1358 = vmul.f32 %v1287, %v1314
        %v1359 = vmul.f32 %v1288, %v1314
        %v1360 = vmul.f32 %v1289, %v1314
        %v1361 = vmul.f32 %v1290, %v1314
        %v1362 = vmul.f32 %v1291, %v1314
        %v1363 = vmul.f32 %v1292, %v1314
        %v1364 = vmul.f32 %v1293, %v1314
        %v1365 = vmul.f32 %v1294, %v1314
        %v1366 = vmul.f32 %v1295, %v1314
        %v1367 = vmul.f32 %v1296, %v1314
        %v1368 = vmul.f32 %v1297, %v1314
        %v1369 = vmul.f32 %v1298, %v1314
        %v1370 = vmul.f32 %v1299, %v1314
        %v1371 = vmul.f32 %v1300, %v1314
        %v1372 = vmul.f32 %v1301, %v1314
        %v1373 = vmul.f32 %v1302, %v1314
        %v1374 = vmul.f32 %v1303, %v1314
        %v1375 = vmul.f32 %v1304, %v1314
        %v1376 = vmul.f32 %v1305, %v1314
        %v1377 = vmul.f32 %v1306, %v1314
        %v1378 = vmul.f32 %v1307, %v1314
        %v1379 = vmul.f32 %v1308, %v1314
        %v1380 = vld [vmem:[%s3] sm:$0x1]
        %v1382 = vlaneseq
        %v1383 = vshrl.u32 %v1382, 7
        %v1384 = vsub.s32 0, %v1383
        %v1385 = vrot.slane %v1380, %v1384
        %v1387 = vadd.f32 %v1316, %v1385
        %v1388 = vadd.f32 %v1317, %v1385
        %v1389 = vadd.f32 %v1318, %v1385
        %v1390 = vadd.f32 %v1319, %v1385
        %v1391 = vadd.f32 %v1320, %v1385
        %v1392 = vadd.f32 %v1321, %v1385
        %v1393 = vadd.f32 %v1322, %v1385
        %v1394 = vadd.f32 %v1323, %v1385
        %v1395 = vadd.f32 %v1324, %v1385
        %v1396 = vadd.f32 %v1325, %v1385
        %v1397 = vadd.f32 %v1326, %v1385
        %v1398 = vadd.f32 %v1327, %v1385
        %v1399 = vadd.f32 %v1328, %v1385
        %v1400 = vadd.f32 %v1329, %v1385
        %v1401 = vadd.f32 %v1330, %v1385
        %v1402 = vadd.f32 %v1331, %v1385
        %v1403 = vadd.f32 %v1332, %v1385
        %v1404 = vadd.f32 %v1333, %v1385
        %v1405 = vadd.f32 %v1334, %v1385
        %v1406 = vadd.f32 %v1335, %v1385
        %v1407 = vadd.f32 %v1336, %v1385
        %v1408 = vadd.f32 %v1337, %v1385
        %v1409 = vadd.f32 %v1338, %v1385
        %v1410 = vadd.f32 %v1339, %v1385
        %v1411 = vadd.f32 %v1340, %v1385
        %v1412 = vadd.f32 %v1341, %v1385
        %v1413 = vadd.f32 %v1342, %v1385
        %v1414 = vadd.f32 %v1343, %v1385
        %v1415 = vadd.f32 %v1344, %v1385
        %v1416 = vadd.f32 %v1345, %v1385
        %v1417 = vadd.f32 %v1346, %v1385
        %v1418 = vadd.f32 %v1347, %v1385
        %v1419 = vadd.f32 %v1348, %v1385
        %v1420 = vadd.f32 %v1349, %v1385
        %v1421 = vadd.f32 %v1350, %v1385
        %v1422 = vadd.f32 %v1351, %v1385
        %v1423 = vadd.f32 %v1352, %v1385
        %v1424 = vadd.f32 %v1353, %v1385
        %v1425 = vadd.f32 %v1354, %v1385
        %v1426 = vadd.f32 %v1355, %v1385
        %v1427 = vadd.f32 %v1356, %v1385
        %v1428 = vadd.f32 %v1357, %v1385
        %v1429 = vadd.f32 %v1358, %v1385
        %v1430 = vadd.f32 %v1359, %v1385
        %v1431 = vadd.f32 %v1360, %v1385
        %v1432 = vadd.f32 %v1361, %v1385
        %v1433 = vadd.f32 %v1362, %v1385
        %v1434 = vadd.f32 %v1363, %v1385
        %v1435 = vadd.f32 %v1364, %v1385
        %v1436 = vadd.f32 %v1365, %v1385
        %v1437 = vadd.f32 %v1366, %v1385
        %v1438 = vadd.f32 %v1367, %v1385
        %v1439 = vadd.f32 %v1368, %v1385
        %v1440 = vadd.f32 %v1369, %v1385
        %v1441 = vadd.f32 %v1370, %v1385
        %v1442 = vadd.f32 %v1371, %v1385
        %v1443 = vadd.f32 %v1372, %v1385
        %v1444 = vadd.f32 %v1373, %v1385
        %v1445 = vadd.f32 %v1374, %v1385
        %v1446 = vadd.f32 %v1375, %v1385
        %v1447 = vadd.f32 %v1376, %v1385
        %v1448 = vadd.f32 %v1377, %v1385
        %v1449 = vadd.f32 %v1378, %v1385
        %v1450 = vadd.f32 %v1379, %v1385
        %v1451 = vmax.f32 %v1387, 0.0
        %v1452 = vmax.f32 %v1388, 0.0
        %v1453 = vmax.f32 %v1389, 0.0
        %v1454 = vmax.f32 %v1390, 0.0
        %v1455 = vmax.f32 %v1391, 0.0
        %v1456 = vmax.f32 %v1392, 0.0
        %v1457 = vmax.f32 %v1393, 0.0
        %v1458 = vmax.f32 %v1394, 0.0
        %v1459 = vmax.f32 %v1395, 0.0
        %v1460 = vmax.f32 %v1396, 0.0
        %v1461 = vmax.f32 %v1397, 0.0
        %v1462 = vmax.f32 %v1398, 0.0
        %v1463 = vmax.f32 %v1399, 0.0
        %v1464 = vmax.f32 %v1400, 0.0
        %v1465 = vmax.f32 %v1401, 0.0
        %v1466 = vmax.f32 %v1402, 0.0
        %v1467 = vmax.f32 %v1403, 0.0
        %v1468 = vmax.f32 %v1404, 0.0
        %v1469 = vmax.f32 %v1405, 0.0
        %v1470 = vmax.f32 %v1406, 0.0
        %v1471 = vmax.f32 %v1407, 0.0
        %v1472 = vmax.f32 %v1408, 0.0
        %v1473 = vmax.f32 %v1409, 0.0
        %v1474 = vmax.f32 %v1410, 0.0
        %v1475 = vmax.f32 %v1411, 0.0
        %v1476 = vmax.f32 %v1412, 0.0
        %v1477 = vmax.f32 %v1413, 0.0
        %v1478 = vmax.f32 %v1414, 0.0
        %v1479 = vmax.f32 %v1415, 0.0
        %v1480 = vmax.f32 %v1416, 0.0
        %v1481 = vmax.f32 %v1417, 0.0
        %v1482 = vmax.f32 %v1418, 0.0
        %v1483 = vmax.f32 %v1419, 0.0
        %v1484 = vmax.f32 %v1420, 0.0
        %v1485 = vmax.f32 %v1421, 0.0
        %v1486 = vmax.f32 %v1422, 0.0
        %v1487 = vmax.f32 %v1423, 0.0
        %v1488 = vmax.f32 %v1424, 0.0
        %v1489 = vmax.f32 %v1425, 0.0
        %v1490 = vmax.f32 %v1426, 0.0
        %v1491 = vmax.f32 %v1427, 0.0
        %v1492 = vmax.f32 %v1428, 0.0
        %v1493 = vmax.f32 %v1429, 0.0
        %v1494 = vmax.f32 %v1430, 0.0
        %v1495 = vmax.f32 %v1431, 0.0
        %v1496 = vmax.f32 %v1432, 0.0
        %v1497 = vmax.f32 %v1433, 0.0
        %v1498 = vmax.f32 %v1434, 0.0
        %v1499 = vmax.f32 %v1435, 0.0
        %v1500 = vmax.f32 %v1436, 0.0
        %v1501 = vmax.f32 %v1437, 0.0
        %v1502 = vmax.f32 %v1438, 0.0
        %v1503 = vmax.f32 %v1439, 0.0
        %v1504 = vmax.f32 %v1440, 0.0
        %v1505 = vmax.f32 %v1441, 0.0
        %v1506 = vmax.f32 %v1442, 0.0
        %v1507 = vmax.f32 %v1443, 0.0
        %v1508 = vmax.f32 %v1444, 0.0
        %v1509 = vmax.f32 %v1445, 0.0
        %v1510 = vmax.f32 %v1446, 0.0
        %v1511 = vmax.f32 %v1447, 0.0
        %v1512 = vmax.f32 %v1448, 0.0
        %v1513 = vmax.f32 %v1449, 0.0
        %v1514 = vmax.f32 %v1450, 0.0
        %v1515 = vpack.c.bf16 %v1452, %v1451
        %v1516 = vpack.c.bf16 %v1454, %v1453
        %v1517 = vpack.c.bf16 %v1456, %v1455
        %v1518 = vpack.c.bf16 %v1458, %v1457
        %v1519 = vpack.c.bf16 %v1460, %v1459
        %v1520 = vpack.c.bf16 %v1462, %v1461
        %v1521 = vpack.c.bf16 %v1464, %v1463
        %v1522 = vpack.c.bf16 %v1466, %v1465
        %v1523 = vpack.c.bf16 %v1468, %v1467
        %v1524 = vpack.c.bf16 %v1470, %v1469
        %v1525 = vpack.c.bf16 %v1472, %v1471
        %v1526 = vpack.c.bf16 %v1474, %v1473
        %v1527 = vpack.c.bf16 %v1476, %v1475
        %v1528 = vpack.c.bf16 %v1478, %v1477
        %v1529 = vpack.c.bf16 %v1480, %v1479
        %v1530 = vpack.c.bf16 %v1482, %v1481
        %v1531 = vpack.c.bf16 %v1484, %v1483
        %v1532 = vpack.c.bf16 %v1486, %v1485
        %v1533 = vpack.c.bf16 %v1488, %v1487
        %v1534 = vpack.c.bf16 %v1490, %v1489
        %v1535 = vpack.c.bf16 %v1492, %v1491
        %v1536 = vpack.c.bf16 %v1494, %v1493
        %v1537 = vpack.c.bf16 %v1496, %v1495
        %v1538 = vpack.c.bf16 %v1498, %v1497
        %v1539 = vpack.c.bf16 %v1500, %v1499
        %v1540 = vpack.c.bf16 %v1502, %v1501
        %v1541 = vpack.c.bf16 %v1504, %v1503
        %v1542 = vpack.c.bf16 %v1506, %v1505
        %v1543 = vpack.c.bf16 %v1508, %v1507
        %v1544 = vpack.c.bf16 %v1510, %v1509
        %v1545 = vpack.c.bf16 %v1512, %v1511
        %v1546 = vpack.c.bf16 %v1514, %v1513
        %v1547 = vld [vmem:[%s4] sm:$0xf]
        %v1548 = vld [vmem:[%s4 + $0x4] sm:$0xf]
        %v1549 = vld [vmem:[%s4 + $0x8] sm:$0xf]
        %v1550 = vld [vmem:[%s4 + $0xc] sm:$0xf]
        %v1551 = vld [vmem:[%s4 + $0x10] sm:$0xf]
        %v1552 = vld [vmem:[%s4 + $0x14] sm:$0xf]
        %v1553 = vld [vmem:[%s4 + $0x18] sm:$0xf]
        %v1554 = vld [vmem:[%s4 + $0x1c] sm:$0xf]
        %v1555 = vld [vmem:[%s4 + $0x20] sm:$0xf]
        %v1556 = vld [vmem:[%s4 + $0x24] sm:$0xf]
        %v1557 = vld [vmem:[%s4 + $0x28] sm:$0xf]
        %v1558 = vld [vmem:[%s4 + $0x2c] sm:$0xf]
        %v1559 = vld [vmem:[%s4 + $0x30] sm:$0xf]
        %v1560 = vld [vmem:[%s4 + $0x34] sm:$0xf]
        %v1561 = vld [vmem:[%s4 + $0x38] sm:$0xf]
        %v1562 = vld [vmem:[%s4 + $0x3c] sm:$0xf]
        %v1579 = vunpack.c.l.b16 %v1547
        %v1580 = vunpack.c.l.b16 %v1548
        %v1581 = vunpack.c.l.b16 %v1549
        %v1582 = vunpack.c.l.b16 %v1550
        %v1583 = vunpack.c.l.b16 %v1551
        %v1584 = vunpack.c.l.b16 %v1552
        %v1585 = vunpack.c.l.b16 %v1553
        %v1586 = vunpack.c.l.b16 %v1554
        %v1587 = vunpack.c.l.b16 %v1555
        %v1588 = vunpack.c.l.b16 %v1556
        %v1589 = vunpack.c.l.b16 %v1557
        %v1590 = vunpack.c.l.b16 %v1558
        %v1591 = vunpack.c.l.b16 %v1559
        %v1592 = vunpack.c.l.b16 %v1560
        %v1593 = vunpack.c.l.b16 %v1561
        %v1594 = vunpack.c.l.b16 %v1562
        %v1595 = vpack.c.b16 %v1580, %v1579
        %v1596 = vpack.c.b16 %v1582, %v1581
        %v1597 = vpack.c.b16 %v1584, %v1583
        %v1598 = vpack.c.b16 %v1586, %v1585
        %v1599 = vpack.c.b16 %v1588, %v1587
        %v1600 = vpack.c.b16 %v1590, %v1589
        %v1601 = vpack.c.b16 %v1592, %v1591
        %v1602 = vpack.c.b16 %v1594, %v1593
        %1611 = vmatprep.subr.bf16.mxu0 0
        %1612 = vmatpush1.bf16.msra.mxu0 %v1595
        %1613 = vmatprep.subr.bf16.mxu0 0
        %1614 = vmatpush1.bf16.msra.mxu0 %v1596
        %1615 = vmatprep.subr.bf16.mxu0 0
        %1616 = vmatpush1.bf16.msra.mxu0 %v1597
        %1617 = vmatprep.subr.bf16.mxu0 0
        %1618 = vmatpush1.bf16.msra.mxu0 %v1598
        %1619 = vmatprep.subr.bf16.mxu0 0
        %1620 = vmatpush1.bf16.msra.mxu0 %v1599
        %1621 = vmatprep.subr.bf16.mxu0 0
        %1622 = vmatpush1.bf16.msra.mxu0 %v1600
        %1623 = vmatprep.subr.bf16.mxu0 0
        %1624 = vmatpush1.bf16.msra.mxu0 %v1601
        %1625 = vmatprep.subr.bf16.mxu0 0
        %1626 = vmatpush1.bf16.msra.mxu0 %v1602
        %1627 = vmatprep.subr.bf16.mxu0 0
        %1628 = vmatpush1.bf16.msra.mxu0 0
        %1629 = vmatprep.subr.bf16.mxu0 0
        %1630 = vmatpush1.bf16.msra.mxu0 0
        %1631 = vmatprep.subr.bf16.mxu0 0
        %1632 = vmatpush1.bf16.msra.mxu0 0
        %1633 = vmatprep.subr.bf16.mxu0 0
        %1634 = vmatpush1.bf16.msra.mxu0 0
        %1635 = vmatprep.subr.bf16.mxu0 0
        %1636 = vmatpush1.bf16.msra.mxu0 0
        %1637 = vmatprep.subr.bf16.mxu0 0
        %1638 = vmatpush1.bf16.msra.mxu0 0
        %1639 = vmatprep.subr.bf16.mxu0 0
        %1640 = vmatpush1.bf16.msra.mxu0 0
        %1641 = vmatprep.subr.bf16.mxu0 0
        %1642 = vmatpush1.bf16.msra.mxu0 0
        %1643 = vmatprep.mubr.bf16.mxu0 0
        %1644 = vmatmul.mubr.bf16.gmra.mrb[0].mxu0 %v1515
        %v1645 = vpop.f32.mrb[0].mxu0
        %v1646 = vadd.f32 0.0, %v1645
        %v1647 = vpop.f32.mrb[0].mxu0
        %v1648 = vpop.f32.mrb[0].mxu0
        %v1649 = vadd.f32 0.0, %v1648
        %v1650 = vpop.f32.mrb[0].mxu0
        %1651 = vmatprep.mubr.bf16.mxu0 0
        %1652 = vmatmul.mubr.bf16.gmra.mrb[0].mxu0 %v1516
        %v1653 = vpop.f32.mrb[0].mxu0
        %v1654 = vadd.f32 0.0, %v1653
        %v1655 = vpop.f32.mrb[0].mxu0
        %v1656 = vpop.f32.mrb[0].mxu0
        %v1657 = vadd.f32 0.0, %v1656
        %v1658 = vpop.f32.mrb[0].mxu0
        %1659 = vmatprep.mubr.bf16.mxu0 0
        %1660 = vmatmul.mubr.bf16.gmra.mrb[0].mxu0 %v1517
        %v1661 = vpop.f32.mrb[0].mxu0
        %v1662 = vadd.f32 0.0, %v1661
        %v1663 = vpop.f32.mrb[0].mxu0
        %v1664 = vpop.f32.mrb[0].mxu0
        %v1665 = vadd.f32 0.0, %v1664
        %v1666 = vpop.f32.mrb[0].mxu0
        %1667 = vmatprep.mubr.bf16.mxu0 0
        %1668 = vmatmul.mubr.bf16.gmra.mrb[0].mxu0 %v1518
        %v1669 = vpop.f32.mrb[0].mxu0
        %v1670 = vadd.f32 0.0, %v1669
        %v1671 = vpop.f32.mrb[0].mxu0
        %v1672 = vpop.f32.mrb[0].mxu0
        %v1673 = vadd.f32 0.0, %v1672
        %v1674 = vpop.f32.mrb[0].mxu0
        %1675 = vmatprep.mubr.bf16.mxu0 0
        %1676 = vmatmul.mubr.bf16.gmra.mrb[0].mxu0 %v1519
        %v1677 = vpop.f32.mrb[0].mxu0
        %v1678 = vadd.f32 0.0, %v1677
        %v1679 = vpop.f32.mrb[0].mxu0
        %v1680 = vpop.f32.mrb[0].mxu0
        %v1681 = vadd.f32 0.0, %v1680
        %v1682 = vpop.f32.mrb[0].mxu0
        %1683 = vmatprep.mubr.bf16.mxu0 0
        %1684 = vmatmul.mubr.bf16.gmra.mrb[0].mxu0 %v1520
        %v1685 = vpop.f32.mrb[0].mxu0
        %v1686 = vadd.f32 0.0, %v1685
        %v1687 = vpop.f32.mrb[0].mxu0
        %v1688 = vpop.f32.mrb[0].mxu0
        %v1689 = vadd.f32 0.0, %v1688
        %v1690 = vpop.f32.mrb[0].mxu0
        %1691 = vmatprep.mubr.bf16.mxu0 0
        %1692 = vmatmul.mubr.bf16.gmra.mrb[0].mxu0 %v1521
        %v1693 = vpop.f32.mrb[0].mxu0
        %v1694 = vadd.f32 0.0, %v1693
        %v1695 = vpop.f32.mrb[0].mxu0
        %v1696 = vpop.f32.mrb[0].mxu0
        %v1697 = vadd.f32 0.0, %v1696
        %v1698 = vpop.f32.mrb[0].mxu0
        %1699 = vmatprep.mubr.bf16.mxu0 0
        %1700 = vmatmul.mubr.bf16.gmra.mrb[0].mxu0 %v1522
        %v1701 = vpop.f32.mrb[0].mxu0
        %v1702 = vadd.f32 0.0, %v1701
        %v1703 = vpop.f32.mrb[0].mxu0
        %v1704 = vpop.f32.mrb[0].mxu0
        %v1705 = vadd.f32 0.0, %v1704
        %v1706 = vpop.f32.mrb[0].mxu0
        %1707 = vmatprep.mubr.bf16.mxu0 0
        %1708 = vmatmul.mubr.bf16.gmra.mrb[0].mxu0 %v1523
        %v1709 = vpop.f32.mrb[0].mxu0
        %v1710 = vadd.f32 0.0, %v1709
        %v1711 = vpop.f32.mrb[0].mxu0
        %v1712 = vpop.f32.mrb[0].mxu0
        %v1713 = vadd.f32 0.0, %v1712
        %v1714 = vpop.f32.mrb[0].mxu0
        %1715 = vmatprep.mubr.bf16.mxu0 0
        %1716 = vmatmul.mubr.bf16.gmra.mrb[0].mxu0 %v1524
        %v1717 = vpop.f32.mrb[0].mxu0
        %v1718 = vadd.f32 0.0, %v1717
        %v1719 = vpop.f32.mrb[0].mxu0
        %v1720 = vpop.f32.mrb[0].mxu0
        %v1721 = vadd.f32 0.0, %v1720
        %v1722 = vpop.f32.mrb[0].mxu0
        %1723 = vmatprep.mubr.bf16.mxu0 0
        %1724 = vmatmul.mubr.bf16.gmra.mrb[0].mxu0 %v1525
        %v1725 = vpop.f32.mrb[0].mxu0
        %v1726 = vadd.f32 0.0, %v1725
        %v1727 = vpop.f32.mrb[0].mxu0
        %v1728 = vpop.f32.mrb[0].mxu0
        %v1729 = vadd.f32 0.0, %v1728
        %v1730 = vpop.f32.mrb[0].mxu0
        %1731 = vmatprep.mubr.bf16.mxu0 0
        %1732 = vmatmul.mubr.bf16.gmra.mrb[0].mxu0 %v1526
        %v1733 = vpop.f32.mrb[0].mxu0
        %v1734 = vadd.f32 0.0, %v1733
        %v1735 = vpop.f32.mrb[0].mxu0
        %v1736 = vpop.f32.mrb[0].mxu0
        %v1737 = vadd.f32 0.0, %v1736
        %v1738 = vpop.f32.mrb[0].mxu0
        %1739 = vmatprep.mubr.bf16.mxu0 0
        %1740 = vmatmul.mubr.bf16.gmra.mrb[0].mxu0 %v1527
        %v1741 = vpop.f32.mrb[0].mxu0
        %v1742 = vadd.f32 0.0, %v1741
        %v1743 = vpop.f32.mrb[0].mxu0
        %v1744 = vpop.f32.mrb[0].mxu0
        %v1745 = vadd.f32 0.0, %v1744
        %v1746 = vpop.f32.mrb[0].mxu0
        %1747 = vmatprep.mubr.bf16.mxu0 0
        %1748 = vmatmul.mubr.bf16.gmra.mrb[0].mxu0 %v1528
        %v1749 = vpop.f32.mrb[0].mxu0
        %v1750 = vadd.f32 0.0, %v1749
        %v1751 = vpop.f32.mrb[0].mxu0
        %v1752 = vpop.f32.mrb[0].mxu0
        %v1753 = vadd.f32 0.0, %v1752
        %v1754 = vpop.f32.mrb[0].mxu0
        %1755 = vmatprep.mubr.bf16.mxu0 0
        %1756 = vmatmul.mubr.bf16.gmra.mrb[0].mxu0 %v1529
        %v1757 = vpop.f32.mrb[0].mxu0
        %v1758 = vadd.f32 0.0, %v1757
        %v1759 = vpop.f32.mrb[0].mxu0
        %v1760 = vpop.f32.mrb[0].mxu0
        %v1761 = vadd.f32 0.0, %v1760
        %v1762 = vpop.f32.mrb[0].mxu0
        %1763 = vmatprep.mubr.bf16.mxu0 0
        %1764 = vmatmul.mubr.bf16.gmra.mrb[0].mxu0 %v1530
        %v1765 = vpop.f32.mrb[0].mxu0
        %v1766 = vadd.f32 0.0, %v1765
        %v1767 = vpop.f32.mrb[0].mxu0
        %v1768 = vpop.f32.mrb[0].mxu0
        %v1769 = vadd.f32 0.0, %v1768
        %v1770 = vpop.f32.mrb[0].mxu0
        %1771 = vmatprep.mubr.bf16.mxu0 0
        %1772 = vmatmul.mubr.bf16.gmra.mrb[0].mxu0 %v1531
        %v1773 = vpop.f32.mrb[0].mxu0
        %v1774 = vadd.f32 0.0, %v1773
        %v1775 = vpop.f32.mrb[0].mxu0
        %v1776 = vpop.f32.mrb[0].mxu0
        %v1777 = vadd.f32 0.0, %v1776
        %v1778 = vpop.f32.mrb[0].mxu0
        %1779 = vmatprep.mubr.bf16.mxu0 0
        %1780 = vmatmul.mubr.bf16.gmra.mrb[0].mxu0 %v1532
        %v1781 = vpop.f32.mrb[0].mxu0
        %v1782 = vadd.f32 0.0, %v1781
        %v1783 = vpop.f32.mrb[0].mxu0
        %v1784 = vpop.f32.mrb[0].mxu0
        %v1785 = vadd.f32 0.0, %v1784
        %v1786 = vpop.f32.mrb[0].mxu0
        %1787 = vmatprep.mubr.bf16.mxu0 0
        %1788 = vmatmul.mubr.bf16.gmra.mrb[0].mxu0 %v1533
        %v1789 = vpop.f32.mrb[0].mxu0
        %v1790 = vadd.f32 0.0, %v1789
        %v1791 = vpop.f32.mrb[0].mxu0
        %v1792 = vpop.f32.mrb[0].mxu0
        %v1793 = vadd.f32 0.0, %v1792
        %v1794 = vpop.f32.mrb[0].mxu0
        %1795 = vmatprep.mubr.bf16.mxu0 0
        %1796 = vmatmul.mubr.bf16.gmra.mrb[0].mxu0 %v1534
        %v1797 = vpop.f32.mrb[0].mxu0
        %v1798 = vadd.f32 0.0, %v1797
        %v1799 = vpop.f32.mrb[0].mxu0
        %v1800 = vpop.f32.mrb[0].mxu0
        %v1801 = vadd.f32 0.0, %v1800
        %v1802 = vpop.f32.mrb[0].mxu0
        %1803 = vmatprep.mubr.bf16.mxu0 0
        %1804 = vmatmul.mubr.bf16.gmra.mrb[0].mxu0 %v1535
        %v1805 = vpop.f32.mrb[0].mxu0
        %v1806 = vadd.f32 0.0, %v1805
        %v1807 = vpop.f32.mrb[0].mxu0
        %v1808 = vpop.f32.mrb[0].mxu0
        %v1809 = vadd.f32 0.0, %v1808
        %v1810 = vpop.f32.mrb[0].mxu0
        %1811 = vmatprep.mubr.bf16.mxu0 0
        %1812 = vmatmul.mubr.bf16.gmra.mrb[0].mxu0 %v1536
        %v1813 = vpop.f32.mrb[0].mxu0
        %v1814 = vadd.f32 0.0, %v1813
        %v1815 = vpop.f32.mrb[0].mxu0
        %v1816 = vpop.f32.mrb[0].mxu0
        %v1817 = vadd.f32 0.0, %v1816
        %v1818 = vpop.f32.mrb[0].mxu0
        %1819 = vmatprep.mubr.bf16.mxu0 0
        %1820 = vmatmul.mubr.bf16.gmra.mrb[0].mxu0 %v1537
        %v1821 = vpop.f32.mrb[0].mxu0
        %v1822 = vadd.f32 0.0, %v1821
        %v1823 = vpop.f32.mrb[0].mxu0
        %v1824 = vpop.f32.mrb[0].mxu0
        %v1825 = vadd.f32 0.0, %v1824
        %v1826 = vpop.f32.mrb[0].mxu0
        %1827 = vmatprep.mubr.bf16.mxu0 0
        %1828 = vmatmul.mubr.bf16.gmra.mrb[0].mxu0 %v1538
        %v1829 = vpop.f32.mrb[0].mxu0
        %v1830 = vadd.f32 0.0, %v1829
        %v1831 = vpop.f32.mrb[0].mxu0
        %v1832 = vpop.f32.mrb[0].mxu0
        %v1833 = vadd.f32 0.0, %v1832
        %v1834 = vpop.f32.mrb[0].mxu0
        %1835 = vmatprep.mubr.bf16.mxu0 0
        %1836 = vmatmul.mubr.bf16.gmra.mrb[0].mxu0 %v1539
        %v1837 = vpop.f32.mrb[0].mxu0
        %v1838 = vadd.f32 0.0, %v1837
        %v1839 = vpop.f32.mrb[0].mxu0
        %v1840 = vpop.f32.mrb[0].mxu0
        %v1841 = vadd.f32 0.0, %v1840
        %v1842 = vpop.f32.mrb[0].mxu0
        %1843 = vmatprep.mubr.bf16.mxu0 0
        %1844 = vmatmul.mubr.bf16.gmra.mrb[0].mxu0 %v1540
        %v1845 = vpop.f32.mrb[0].mxu0
        %v1846 = vadd.f32 0.0, %v1845
        %v1847 = vpop.f32.mrb[0].mxu0
        %v1848 = vpop.f32.mrb[0].mxu0
        %v1849 = vadd.f32 0.0, %v1848
        %v1850 = vpop.f32.mrb[0].mxu0
        %1851 = vmatprep.mubr.bf16.mxu0 0
        %1852 = vmatmul.mubr.bf16.gmra.mrb[0].mxu0 %v1541
        %v1853 = vpop.f32.mrb[0].mxu0
        %v1854 = vadd.f32 0.0, %v1853
        %v1855 = vpop.f32.mrb[0].mxu0
        %v1856 = vpop.f32.mrb[0].mxu0
        %v1857 = vadd.f32 0.0, %v1856
        %v1858 = vpop.f32.mrb[0].mxu0
        %1859 = vmatprep.mubr.bf16.mxu0 0
        %1860 = vmatmul.mubr.bf16.gmra.mrb[0].mxu0 %v1542
        %v1861 = vpop.f32.mrb[0].mxu0
        %v1862 = vadd.f32 0.0, %v1861
        %v1863 = vpop.f32.mrb[0].mxu0
        %v1864 = vpop.f32.mrb[0].mxu0
        %v1865 = vadd.f32 0.0, %v1864
        %v1866 = vpop.f32.mrb[0].mxu0
        %1867 = vmatprep.mubr.bf16.mxu0 0
        %1868 = vmatmul.mubr.bf16.gmra.mrb[0].mxu0 %v1543
        %v1869 = vpop.f32.mrb[0].mxu0
        %v1870 = vadd.f32 0.0, %v1869
        %v1871 = vpop.f32.mrb[0].mxu0
        %v1872 = vpop.f32.mrb[0].mxu0
        %v1873 = vadd.f32 0.0, %v1872
        %v1874 = vpop.f32.mrb[0].mxu0
        %1875 = vmatprep.mubr.bf16.mxu0 0
        %1876 = vmatmul.mubr.bf16.gmra.mrb[0].mxu0 %v1544
        %v1877 = vpop.f32.mrb[0].mxu0
        %v1878 = vadd.f32 0.0, %v1877
        %v1879 = vpop.f32.mrb[0].mxu0
        %v1880 = vpop.f32.mrb[0].mxu0
        %v1881 = vadd.f32 0.0, %v1880
        %v1882 = vpop.f32.mrb[0].mxu0
        %1883 = vmatprep.mubr.bf16.mxu0 0
        %1884 = vmatmul.mubr.bf16.gmra.mrb[0].mxu0 %v1545
        %v1885 = vpop.f32.mrb[0].mxu0
        %v1886 = vadd.f32 0.0, %v1885
        %v1887 = vpop.f32.mrb[0].mxu0
        %v1888 = vpop.f32.mrb[0].mxu0
        %v1889 = vadd.f32 0.0, %v1888
        %v1890 = vpop.f32.mrb[0].mxu0
        %1891 = vmatprep.mubr.bf16.mxu0 0
        %1892 = vmatmul.mubr.bf16.gmra.mrb[0].mxu0 %v1546
        %v1893 = vpop.f32.mrb[0].mxu0
        %v1894 = vadd.f32 0.0, %v1893
        %v1895 = vpop.f32.mrb[0].mxu0
        %v1896 = vpop.f32.mrb[0].mxu0
        %v1897 = vadd.f32 0.0, %v1896
        %v1898 = vpop.f32.mrb[0].mxu0
        %1899 = vdwg.mxu0
        %v1900 = vadd.f32 %v1646, %v1649
        %v1901 = vadd.f32 %v1900, %v1654
        %v1902 = vadd.f32 %v1901, %v1657
        %v1903 = vadd.f32 %v1902, %v1662
        %v1904 = vadd.f32 %v1903, %v1665
        %v1905 = vadd.f32 %v1904, %v1670
        %v1906 = vadd.f32 %v1905, %v1673
        %v1907 = vadd.f32 %v1906, %v1678
        %v1908 = vadd.f32 %v1907, %v1681
        %v1909 = vadd.f32 %v1908, %v1686
        %v1910 = vadd.f32 %v1909, %v1689
        %v1911 = vadd.f32 %v1910, %v1694
        %v1912 = vadd.f32 %v1911, %v1697
        %v1913 = vadd.f32 %v1912, %v1702
        %v1914 = vadd.f32 %v1913, %v1705
        %v1915 = vadd.f32 %v1914, %v1710
        %v1916 = vadd.f32 %v1915, %v1713
        %v1917 = vadd.f32 %v1916, %v1718
        %v1918 = vadd.f32 %v1917, %v1721
        %v1919 = vadd.f32 %v1918, %v1726
        %v1920 = vadd.f32 %v1919, %v1729
        %v1921 = vadd.f32 %v1920, %v1734
        %v1922 = vadd.f32 %v1921, %v1737
        %v1923 = vadd.f32 %v1922, %v1742
        %v1924 = vadd.f32 %v1923, %v1745
        %v1925 = vadd.f32 %v1924, %v1750
        %v1926 = vadd.f32 %v1925, %v1753
        %v1927 = vadd.f32 %v1926, %v1758
        %v1928 = vadd.f32 %v1927, %v1761
        %v1929 = vadd.f32 %v1928, %v1766
        %v1930 = vadd.f32 %v1929, %v1769
        %v1931 = vadd.f32 %v1930, %v1774
        %v1932 = vadd.f32 %v1931, %v1777
        %v1933 = vadd.f32 %v1932, %v1782
        %v1934 = vadd.f32 %v1933, %v1785
        %v1935 = vadd.f32 %v1934, %v1790
        %v1936 = vadd.f32 %v1935, %v1793
        %v1937 = vadd.f32 %v1936, %v1798
        %v1938 = vadd.f32 %v1937, %v1801
        %v1939 = vadd.f32 %v1938, %v1806
        %v1940 = vadd.f32 %v1939, %v1809
        %v1941 = vadd.f32 %v1940, %v1814
        %v1942 = vadd.f32 %v1941, %v1817
        %v1943 = vadd.f32 %v1942, %v1822
        %v1944 = vadd.f32 %v1943, %v1825
        %v1945 = vadd.f32 %v1944, %v1830
        %v1946 = vadd.f32 %v1945, %v1833
        %v1947 = vadd.f32 %v1946, %v1838
        %v1948 = vadd.f32 %v1947, %v1841
        %v1949 = vadd.f32 %v1948, %v1846
        %v1950 = vadd.f32 %v1949, %v1849
        %v1951 = vadd.f32 %v1950, %v1854
        %v1952 = vadd.f32 %v1951, %v1857
        %v1953 = vadd.f32 %v1952, %v1862
        %v1954 = vadd.f32 %v1953, %v1865
        %v1955 = vadd.f32 %v1954, %v1870
        %v1956 = vadd.f32 %v1955, %v1873
        %v1957 = vadd.f32 %v1956, %v1878
        %v1958 = vadd.f32 %v1957, %v1881
        %v1959 = vadd.f32 %v1958, %v1886
        %v1960 = vadd.f32 %v1959, %v1889
        %v1961 = vadd.f32 %v1960, %v1894
        %v1962 = vadd.f32 %v1961, %v1897
        %v1963 = vrot.slane %v1962, 4
        %v1964 = vadd.f32 %v1962, %v1963
        %v1965 = vrot.slane %v1964, 2
        %v1966 = vadd.f32 %v1964, %v1965
        %v1967 = vrot.slane %v1966, 1
        %v1968 = vadd.f32 %v1966, %v1967
        %v1969 = vmul.f32 %v1968, %v1043
        %v1970 = vsub.f32 %v1646, %v1969
        %v1971 = vsub.f32 %v1649, %v1969
        %v1972 = vsub.f32 %v1654, %v1969
        %v1973 = vsub.f32 %v1657, %v1969
        %v1974 = vsub.f32 %v1662, %v1969
        %v1975 = vsub.f32 %v1665, %v1969
        %v1976 = vsub.f32 %v1670, %v1969
        %v1977 = vsub.f32 %v1673, %v1969
        %v1978 = vsub.f32 %v1678, %v1969
        %v1979 = vsub.f32 %v1681, %v1969
        %v1980 = vsub.f32 %v1686, %v1969
        %v1981 = vsub.f32 %v1689, %v1969
        %v1982 = vsub.f32 %v1694, %v1969
        %v1983 = vsub.f32 %v1697, %v1969
        %v1984 = vsub.f32 %v1702, %v1969
        %v1985 = vsub.f32 %v1705, %v1969
        %v1986 = vsub.f32 %v1710, %v1969
        %v1987 = vsub.f32 %v1713, %v1969
        %v1988 = vsub.f32 %v1718, %v1969
        %v1989 = vsub.f32 %v1721, %v1969
        %v1990 = vsub.f32 %v1726, %v1969
        %v1991 = vsub.f32 %v1729, %v1969
        %v1992 = vsub.f32 %v1734, %v1969
        %v1993 = vsub.f32 %v1737, %v1969
        %v1994 = vsub.f32 %v1742, %v1969
        %v1995 = vsub.f32 %v1745, %v1969
        %v1996 = vsub.f32 %v1750, %v1969
        %v1997 = vsub.f32 %v1753, %v1969
        %v1998 = vsub.f32 %v1758, %v1969
        %v1999 = vsub.f32 %v1761, %v1969
        %v2000 = vsub.f32 %v1766, %v1969
        %v2001 = vsub.f32 %v1769, %v1969
        %v2002 = vsub.f32 %v1774, %v1969
        %v2003 = vsub.f32 %v1777, %v1969
        %v2004 = vsub.f32 %v1782, %v1969
        %v2005 = vsub.f32 %v1785, %v1969
        %v2006 = vsub.f32 %v1790, %v1969
        %v2007 = vsub.f32 %v1793, %v1969
        %v2008 = vsub.f32 %v1798, %v1969
        %v2009 = vsub.f32 %v1801, %v1969
        %v2010 = vsub.f32 %v1806, %v1969
        %v2011 = vsub.f32 %v1809, %v1969
        %v2012 = vsub.f32 %v1814, %v1969
        %v2013 = vsub.f32 %v1817, %v1969
        %v2014 = vsub.f32 %v1822, %v1969
        %v2015 = vsub.f32 %v1825, %v1969
        %v2016 = vsub.f32 %v1830, %v1969
        %v2017 = vsub.f32 %v1833, %v1969
        %v2018 = vsub.f32 %v1838, %v1969
        %v2019 = vsub.f32 %v1841, %v1969
        %v2020 = vsub.f32 %v1846, %v1969
        %v2021 = vsub.f32 %v1849, %v1969
        %v2022 = vsub.f32 %v1854, %v1969
        %v2023 = vsub.f32 %v1857, %v1969
        %v2024 = vsub.f32 %v1862, %v1969
        %v2025 = vsub.f32 %v1865, %v1969
        %v2026 = vsub.f32 %v1870, %v1969
        %v2027 = vsub.f32 %v1873, %v1969
        %v2028 = vsub.f32 %v1878, %v1969
        %v2029 = vsub.f32 %v1881, %v1969
        %v2030 = vsub.f32 %v1886, %v1969
        %v2031 = vsub.f32 %v1889, %v1969
        %v2032 = vsub.f32 %v1894, %v1969
        %v2033 = vsub.f32 %v1897, %v1969
        %v2034 = vmul.f32 %v1970, %v1970
        %v2035 = vmul.f32 %v1971, %v1971
        %v2036 = vmul.f32 %v1972, %v1972
        %v2037 = vmul.f32 %v1973, %v1973
        %v2038 = vmul.f32 %v1974, %v1974
        %v2039 = vmul.f32 %v1975, %v1975
        %v2040 = vmul.f32 %v1976, %v1976
        %v2041 = vmul.f32 %v1977, %v1977
        %v2042 = vmul.f32 %v1978, %v1978
        %v2043 = vmul.f32 %v1979, %v1979
        %v2044 = vmul.f32 %v1980, %v1980
        %v2045 = vmul.f32 %v1981, %v1981
        %v2046 = vmul.f32 %v1982, %v1982
        %v2047 = vmul.f32 %v1983, %v1983
        %v2048 = vmul.f32 %v1984, %v1984
        %v2049 = vmul.f32 %v1985, %v1985
        %v2050 = vmul.f32 %v1986, %v1986
        %v2051 = vmul.f32 %v1987, %v1987
        %v2052 = vmul.f32 %v1988, %v1988
        %v2053 = vmul.f32 %v1989, %v1989
        %v2054 = vmul.f32 %v1990, %v1990
        %v2055 = vmul.f32 %v1991, %v1991
        %v2056 = vmul.f32 %v1992, %v1992
        %v2057 = vmul.f32 %v1993, %v1993
        %v2058 = vmul.f32 %v1994, %v1994
        %v2059 = vmul.f32 %v1995, %v1995
        %v2060 = vmul.f32 %v1996, %v1996
        %v2061 = vmul.f32 %v1997, %v1997
        %v2062 = vmul.f32 %v1998, %v1998
        %v2063 = vmul.f32 %v1999, %v1999
        %v2064 = vmul.f32 %v2000, %v2000
        %v2065 = vmul.f32 %v2001, %v2001
        %v2066 = vmul.f32 %v2002, %v2002
        %v2067 = vmul.f32 %v2003, %v2003
        %v2068 = vmul.f32 %v2004, %v2004
        %v2069 = vmul.f32 %v2005, %v2005
        %v2070 = vmul.f32 %v2006, %v2006
        %v2071 = vmul.f32 %v2007, %v2007
        %v2072 = vmul.f32 %v2008, %v2008
        %v2073 = vmul.f32 %v2009, %v2009
        %v2074 = vmul.f32 %v2010, %v2010
        %v2075 = vmul.f32 %v2011, %v2011
        %v2076 = vmul.f32 %v2012, %v2012
        %v2077 = vmul.f32 %v2013, %v2013
        %v2078 = vmul.f32 %v2014, %v2014
        %v2079 = vmul.f32 %v2015, %v2015
        %v2080 = vmul.f32 %v2016, %v2016
        %v2081 = vmul.f32 %v2017, %v2017
        %v2082 = vmul.f32 %v2018, %v2018
        %v2083 = vmul.f32 %v2019, %v2019
        %v2084 = vmul.f32 %v2020, %v2020
        %v2085 = vmul.f32 %v2021, %v2021
        %v2086 = vmul.f32 %v2022, %v2022
        %v2087 = vmul.f32 %v2023, %v2023
        %v2088 = vmul.f32 %v2024, %v2024
        %v2089 = vmul.f32 %v2025, %v2025
        %v2090 = vmul.f32 %v2026, %v2026
        %v2091 = vmul.f32 %v2027, %v2027
        %v2092 = vmul.f32 %v2028, %v2028
        %v2093 = vmul.f32 %v2029, %v2029
        %v2094 = vmul.f32 %v2030, %v2030
        %v2095 = vmul.f32 %v2031, %v2031
        %v2096 = vmul.f32 %v2032, %v2032
        %v2097 = vmul.f32 %v2033, %v2033
        %v2098 = vadd.f32 %v2034, %v2035
        %v2099 = vadd.f32 %v2098, %v2036
        %v2100 = vadd.f32 %v2099, %v2037
        %v2101 = vadd.f32 %v2100, %v2038
        %v2102 = vadd.f32 %v2101, %v2039
        %v2103 = vadd.f32 %v2102, %v2040
        %v2104 = vadd.f32 %v2103, %v2041
        %v2105 = vadd.f32 %v2104, %v2042
        %v2106 = vadd.f32 %v2105, %v2043
        %v2107 = vadd.f32 %v2106, %v2044
        %v2108 = vadd.f32 %v2107, %v2045
        %v2109 = vadd.f32 %v2108, %v2046
        %v2110 = vadd.f32 %v2109, %v2047
        %v2111 = vadd.f32 %v2110, %v2048
        %v2112 = vadd.f32 %v2111, %v2049
        %v2113 = vadd.f32 %v2112, %v2050
        %v2114 = vadd.f32 %v2113, %v2051
        %v2115 = vadd.f32 %v2114, %v2052
        %v2116 = vadd.f32 %v2115, %v2053
        %v2117 = vadd.f32 %v2116, %v2054
        %v2118 = vadd.f32 %v2117, %v2055
        %v2119 = vadd.f32 %v2118, %v2056
        %v2120 = vadd.f32 %v2119, %v2057
        %v2121 = vadd.f32 %v2120, %v2058
        %v2122 = vadd.f32 %v2121, %v2059
        %v2123 = vadd.f32 %v2122, %v2060
        %v2124 = vadd.f32 %v2123, %v2061
        %v2125 = vadd.f32 %v2124, %v2062
        %v2126 = vadd.f32 %v2125, %v2063
        %v2127 = vadd.f32 %v2126, %v2064
        %v2128 = vadd.f32 %v2127, %v2065
        %v2129 = vadd.f32 %v2128, %v2066
        %v2130 = vadd.f32 %v2129, %v2067
        %v2131 = vadd.f32 %v2130, %v2068
        %v2132 = vadd.f32 %v2131, %v2069
        %v2133 = vadd.f32 %v2132, %v2070
        %v2134 = vadd.f32 %v2133, %v2071
        %v2135 = vadd.f32 %v2134, %v2072
        %v2136 = vadd.f32 %v2135, %v2073
        %v2137 = vadd.f32 %v2136, %v2074
        %v2138 = vadd.f32 %v2137, %v2075
        %v2139 = vadd.f32 %v2138, %v2076
        %v2140 = vadd.f32 %v2139, %v2077
        %v2141 = vadd.f32 %v2140, %v2078
        %v2142 = vadd.f32 %v2141, %v2079
        %v2143 = vadd.f32 %v2142, %v2080
        %v2144 = vadd.f32 %v2143, %v2081
        %v2145 = vadd.f32 %v2144, %v2082
        %v2146 = vadd.f32 %v2145, %v2083
        %v2147 = vadd.f32 %v2146, %v2084
        %v2148 = vadd.f32 %v2147, %v2085
        %v2149 = vadd.f32 %v2148, %v2086
        %v2150 = vadd.f32 %v2149, %v2087
        %v2151 = vadd.f32 %v2150, %v2088
        %v2152 = vadd.f32 %v2151, %v2089
        %v2153 = vadd.f32 %v2152, %v2090
        %v2154 = vadd.f32 %v2153, %v2091
        %v2155 = vadd.f32 %v2154, %v2092
        %v2156 = vadd.f32 %v2155, %v2093
        %v2157 = vadd.f32 %v2156, %v2094
        %v2158 = vadd.f32 %v2157, %v2095
        %v2159 = vadd.f32 %v2158, %v2096
        %v2160 = vadd.f32 %v2159, %v2097
        %v2161 = vrot.slane %v2160, 4
        %v2162 = vadd.f32 %v2160, %v2161
        %v2163 = vrot.slane %v2162, 2
        %v2164 = vadd.f32 %v2162, %v2163
        %v2165 = vrot.slane %v2164, 1
        %v2166 = vadd.f32 %v2164, %v2165
        %v2167 = vmul.f32 %v2166, %v1043
        %v2168 = vadd.f32 %v2167, 1e-05
        %v2169 = vrsqrt.pop %v2168
        %v2170 = vmul.f32 %v1970, %v2169
        %v2171 = vmul.f32 %v1971, %v2169
        %v2172 = vmul.f32 %v1972, %v2169
        %v2173 = vmul.f32 %v1973, %v2169
        %v2174 = vmul.f32 %v1974, %v2169
        %v2175 = vmul.f32 %v1975, %v2169
        %v2176 = vmul.f32 %v1976, %v2169
        %v2177 = vmul.f32 %v1977, %v2169
        %v2178 = vmul.f32 %v1978, %v2169
        %v2179 = vmul.f32 %v1979, %v2169
        %v2180 = vmul.f32 %v1980, %v2169
        %v2181 = vmul.f32 %v1981, %v2169
        %v2182 = vmul.f32 %v1982, %v2169
        %v2183 = vmul.f32 %v1983, %v2169
        %v2184 = vmul.f32 %v1984, %v2169
        %v2185 = vmul.f32 %v1985, %v2169
        %v2186 = vmul.f32 %v1986, %v2169
        %v2187 = vmul.f32 %v1987, %v2169
        %v2188 = vmul.f32 %v1988, %v2169
        %v2189 = vmul.f32 %v1989, %v2169
        %v2190 = vmul.f32 %v1990, %v2169
        %v2191 = vmul.f32 %v1991, %v2169
        %v2192 = vmul.f32 %v1992, %v2169
        %v2193 = vmul.f32 %v1993, %v2169
        %v2194 = vmul.f32 %v1994, %v2169
        %v2195 = vmul.f32 %v1995, %v2169
        %v2196 = vmul.f32 %v1996, %v2169
        %v2197 = vmul.f32 %v1997, %v2169
        %v2198 = vmul.f32 %v1998, %v2169
        %v2199 = vmul.f32 %v1999, %v2169
        %v2200 = vmul.f32 %v2000, %v2169
        %v2201 = vmul.f32 %v2001, %v2169
        %v2202 = vmul.f32 %v2002, %v2169
        %v2203 = vmul.f32 %v2003, %v2169
        %v2204 = vmul.f32 %v2004, %v2169
        %v2205 = vmul.f32 %v2005, %v2169
        %v2206 = vmul.f32 %v2006, %v2169
        %v2207 = vmul.f32 %v2007, %v2169
        %v2208 = vmul.f32 %v2008, %v2169
        %v2209 = vmul.f32 %v2009, %v2169
        %v2210 = vmul.f32 %v2010, %v2169
        %v2211 = vmul.f32 %v2011, %v2169
        %v2212 = vmul.f32 %v2012, %v2169
        %v2213 = vmul.f32 %v2013, %v2169
        %v2214 = vmul.f32 %v2014, %v2169
        %v2215 = vmul.f32 %v2015, %v2169
        %v2216 = vmul.f32 %v2016, %v2169
        %v2217 = vmul.f32 %v2017, %v2169
        %v2218 = vmul.f32 %v2018, %v2169
        %v2219 = vmul.f32 %v2019, %v2169
        %v2220 = vmul.f32 %v2020, %v2169
        %v2221 = vmul.f32 %v2021, %v2169
        %v2222 = vmul.f32 %v2022, %v2169
        %v2223 = vmul.f32 %v2023, %v2169
        %v2224 = vmul.f32 %v2024, %v2169
        %v2225 = vmul.f32 %v2025, %v2169
        %v2226 = vmul.f32 %v2026, %v2169
        %v2227 = vmul.f32 %v2027, %v2169
        %v2228 = vmul.f32 %v2028, %v2169
        %v2229 = vmul.f32 %v2029, %v2169
        %v2230 = vmul.f32 %v2030, %v2169
        %v2231 = vmul.f32 %v2031, %v2169
        %v2232 = vmul.f32 %v2032, %v2169
        %v2233 = vmul.f32 %v2033, %v2169
        %v2234 = vld [vmem:[%s5] sm:$0x1]
        %v2236 = vlaneseq
        %v2237 = vshrl.u32 %v2236, 7
        %v2238 = vsub.s32 0, %v2237
        %v2239 = vrot.slane %v2234, %v2238
        %v2241 = vmul.f32 %v2170, %v2239
        %v2242 = vmul.f32 %v2171, %v2239
        %v2243 = vmul.f32 %v2172, %v2239
        %v2244 = vmul.f32 %v2173, %v2239
        %v2245 = vmul.f32 %v2174, %v2239
        %v2246 = vmul.f32 %v2175, %v2239
        %v2247 = vmul.f32 %v2176, %v2239
        %v2248 = vmul.f32 %v2177, %v2239
        %v2249 = vmul.f32 %v2178, %v2239
        %v2250 = vmul.f32 %v2179, %v2239
        %v2251 = vmul.f32 %v2180, %v2239
        %v2252 = vmul.f32 %v2181, %v2239
        %v2253 = vmul.f32 %v2182, %v2239
        %v2254 = vmul.f32 %v2183, %v2239
        %v2255 = vmul.f32 %v2184, %v2239
        %v2256 = vmul.f32 %v2185, %v2239
        %v2257 = vmul.f32 %v2186, %v2239
        %v2258 = vmul.f32 %v2187, %v2239
        %v2259 = vmul.f32 %v2188, %v2239
        %v2260 = vmul.f32 %v2189, %v2239
        %v2261 = vmul.f32 %v2190, %v2239
        %v2262 = vmul.f32 %v2191, %v2239
        %v2263 = vmul.f32 %v2192, %v2239
        %v2264 = vmul.f32 %v2193, %v2239
        %v2265 = vmul.f32 %v2194, %v2239
        %v2266 = vmul.f32 %v2195, %v2239
        %v2267 = vmul.f32 %v2196, %v2239
        %v2268 = vmul.f32 %v2197, %v2239
        %v2269 = vmul.f32 %v2198, %v2239
        %v2270 = vmul.f32 %v2199, %v2239
        %v2271 = vmul.f32 %v2200, %v2239
        %v2272 = vmul.f32 %v2201, %v2239
        %v2273 = vmul.f32 %v2202, %v2239
        %v2274 = vmul.f32 %v2203, %v2239
        %v2275 = vmul.f32 %v2204, %v2239
        %v2276 = vmul.f32 %v2205, %v2239
        %v2277 = vmul.f32 %v2206, %v2239
        %v2278 = vmul.f32 %v2207, %v2239
        %v2279 = vmul.f32 %v2208, %v2239
        %v2280 = vmul.f32 %v2209, %v2239
        %v2281 = vmul.f32 %v2210, %v2239
        %v2282 = vmul.f32 %v2211, %v2239
        %v2283 = vmul.f32 %v2212, %v2239
        %v2284 = vmul.f32 %v2213, %v2239
        %v2285 = vmul.f32 %v2214, %v2239
        %v2286 = vmul.f32 %v2215, %v2239
        %v2287 = vmul.f32 %v2216, %v2239
        %v2288 = vmul.f32 %v2217, %v2239
        %v2289 = vmul.f32 %v2218, %v2239
        %v2290 = vmul.f32 %v2219, %v2239
        %v2291 = vmul.f32 %v2220, %v2239
        %v2292 = vmul.f32 %v2221, %v2239
        %v2293 = vmul.f32 %v2222, %v2239
        %v2294 = vmul.f32 %v2223, %v2239
        %v2295 = vmul.f32 %v2224, %v2239
        %v2296 = vmul.f32 %v2225, %v2239
        %v2297 = vmul.f32 %v2226, %v2239
        %v2298 = vmul.f32 %v2227, %v2239
        %v2299 = vmul.f32 %v2228, %v2239
        %v2300 = vmul.f32 %v2229, %v2239
        %v2301 = vmul.f32 %v2230, %v2239
        %v2302 = vmul.f32 %v2231, %v2239
        %v2303 = vmul.f32 %v2232, %v2239
        %v2304 = vmul.f32 %v2233, %v2239
        %v2305 = vld [vmem:[%s6] sm:$0x1]
        %v2307 = vlaneseq
        %v2308 = vshrl.u32 %v2307, 7
        %v2309 = vsub.s32 0, %v2308
        %v2310 = vrot.slane %v2305, %v2309
        %v2312 = vadd.f32 %v2241, %v2310
        %v2313 = vadd.f32 %v2242, %v2310
        %v2314 = vadd.f32 %v2243, %v2310
        %v2315 = vadd.f32 %v2244, %v2310
        %v2316 = vadd.f32 %v2245, %v2310
        %v2317 = vadd.f32 %v2246, %v2310
        %v2318 = vadd.f32 %v2247, %v2310
        %v2319 = vadd.f32 %v2248, %v2310
        %v2320 = vadd.f32 %v2249, %v2310
        %v2321 = vadd.f32 %v2250, %v2310
        %v2322 = vadd.f32 %v2251, %v2310
        %v2323 = vadd.f32 %v2252, %v2310
        %v2324 = vadd.f32 %v2253, %v2310
        %v2325 = vadd.f32 %v2254, %v2310
        %v2326 = vadd.f32 %v2255, %v2310
        %v2327 = vadd.f32 %v2256, %v2310
        %v2328 = vadd.f32 %v2257, %v2310
        %v2329 = vadd.f32 %v2258, %v2310
        %v2330 = vadd.f32 %v2259, %v2310
        %v2331 = vadd.f32 %v2260, %v2310
        %v2332 = vadd.f32 %v2261, %v2310
        %v2333 = vadd.f32 %v2262, %v2310
        %v2334 = vadd.f32 %v2263, %v2310
        %v2335 = vadd.f32 %v2264, %v2310
        %v2336 = vadd.f32 %v2265, %v2310
        %v2337 = vadd.f32 %v2266, %v2310
        %v2338 = vadd.f32 %v2267, %v2310
        %v2339 = vadd.f32 %v2268, %v2310
        %v2340 = vadd.f32 %v2269, %v2310
        %v2341 = vadd.f32 %v2270, %v2310
        %v2342 = vadd.f32 %v2271, %v2310
        %v2343 = vadd.f32 %v2272, %v2310
        %v2344 = vadd.f32 %v2273, %v2310
        %v2345 = vadd.f32 %v2274, %v2310
        %v2346 = vadd.f32 %v2275, %v2310
        %v2347 = vadd.f32 %v2276, %v2310
        %v2348 = vadd.f32 %v2277, %v2310
        %v2349 = vadd.f32 %v2278, %v2310
        %v2350 = vadd.f32 %v2279, %v2310
        %v2351 = vadd.f32 %v2280, %v2310
        %v2352 = vadd.f32 %v2281, %v2310
        %v2353 = vadd.f32 %v2282, %v2310
        %v2354 = vadd.f32 %v2283, %v2310
        %v2355 = vadd.f32 %v2284, %v2310
        %v2356 = vadd.f32 %v2285, %v2310
        %v2357 = vadd.f32 %v2286, %v2310
        %v2358 = vadd.f32 %v2287, %v2310
        %v2359 = vadd.f32 %v2288, %v2310
        %v2360 = vadd.f32 %v2289, %v2310
        %v2361 = vadd.f32 %v2290, %v2310
        %v2362 = vadd.f32 %v2291, %v2310
        %v2363 = vadd.f32 %v2292, %v2310
        %v2364 = vadd.f32 %v2293, %v2310
        %v2365 = vadd.f32 %v2294, %v2310
        %v2366 = vadd.f32 %v2295, %v2310
        %v2367 = vadd.f32 %v2296, %v2310
        %v2368 = vadd.f32 %v2297, %v2310
        %v2369 = vadd.f32 %v2298, %v2310
        %v2370 = vadd.f32 %v2299, %v2310
        %v2371 = vadd.f32 %v2300, %v2310
        %v2372 = vadd.f32 %v2301, %v2310
        %v2373 = vadd.f32 %v2302, %v2310
        %v2374 = vadd.f32 %v2303, %v2310
        %v2375 = vadd.f32 %v2304, %v2310
        %v2376 = vmax.f32 %v2312, 0.0
        %v2377 = vmax.f32 %v2313, 0.0
        %v2378 = vmax.f32 %v2314, 0.0
        %v2379 = vmax.f32 %v2315, 0.0
        %v2380 = vmax.f32 %v2316, 0.0
        %v2381 = vmax.f32 %v2317, 0.0
        %v2382 = vmax.f32 %v2318, 0.0
        %v2383 = vmax.f32 %v2319, 0.0
        %v2384 = vmax.f32 %v2320, 0.0
        %v2385 = vmax.f32 %v2321, 0.0
        %v2386 = vmax.f32 %v2322, 0.0
        %v2387 = vmax.f32 %v2323, 0.0
        %v2388 = vmax.f32 %v2324, 0.0
        %v2389 = vmax.f32 %v2325, 0.0
        %v2390 = vmax.f32 %v2326, 0.0
        %v2391 = vmax.f32 %v2327, 0.0
        %v2392 = vmax.f32 %v2328, 0.0
        %v2393 = vmax.f32 %v2329, 0.0
        %v2394 = vmax.f32 %v2330, 0.0
        %v2395 = vmax.f32 %v2331, 0.0
        %v2396 = vmax.f32 %v2332, 0.0
        %v2397 = vmax.f32 %v2333, 0.0
        %v2398 = vmax.f32 %v2334, 0.0
        %v2399 = vmax.f32 %v2335, 0.0
        %v2400 = vmax.f32 %v2336, 0.0
        %v2401 = vmax.f32 %v2337, 0.0
        %v2402 = vmax.f32 %v2338, 0.0
        %v2403 = vmax.f32 %v2339, 0.0
        %v2404 = vmax.f32 %v2340, 0.0
        %v2405 = vmax.f32 %v2341, 0.0
        %v2406 = vmax.f32 %v2342, 0.0
        %v2407 = vmax.f32 %v2343, 0.0
        %v2408 = vmax.f32 %v2344, 0.0
        %v2409 = vmax.f32 %v2345, 0.0
        %v2410 = vmax.f32 %v2346, 0.0
        %v2411 = vmax.f32 %v2347, 0.0
        %v2412 = vmax.f32 %v2348, 0.0
        %v2413 = vmax.f32 %v2349, 0.0
        %v2414 = vmax.f32 %v2350, 0.0
        %v2415 = vmax.f32 %v2351, 0.0
        %v2416 = vmax.f32 %v2352, 0.0
        %v2417 = vmax.f32 %v2353, 0.0
        %v2418 = vmax.f32 %v2354, 0.0
        %v2419 = vmax.f32 %v2355, 0.0
        %v2420 = vmax.f32 %v2356, 0.0
        %v2421 = vmax.f32 %v2357, 0.0
        %v2422 = vmax.f32 %v2358, 0.0
        %v2423 = vmax.f32 %v2359, 0.0
        %v2424 = vmax.f32 %v2360, 0.0
        %v2425 = vmax.f32 %v2361, 0.0
        %v2426 = vmax.f32 %v2362, 0.0
        %v2427 = vmax.f32 %v2363, 0.0
        %v2428 = vmax.f32 %v2364, 0.0
        %v2429 = vmax.f32 %v2365, 0.0
        %v2430 = vmax.f32 %v2366, 0.0
        %v2431 = vmax.f32 %v2367, 0.0
        %v2432 = vmax.f32 %v2368, 0.0
        %v2433 = vmax.f32 %v2369, 0.0
        %v2434 = vmax.f32 %v2370, 0.0
        %v2435 = vmax.f32 %v2371, 0.0
        %v2436 = vmax.f32 %v2372, 0.0
        %v2437 = vmax.f32 %v2373, 0.0
        %v2438 = vmax.f32 %v2374, 0.0
        %v2439 = vmax.f32 %v2375, 0.0
        %v2440 = vpack.c.bf16 %v2377, %v2376
        %v2441 = vpack.c.bf16 %v2379, %v2378
        %v2442 = vpack.c.bf16 %v2381, %v2380
        %v2443 = vpack.c.bf16 %v2383, %v2382
        %v2444 = vpack.c.bf16 %v2385, %v2384
        %v2445 = vpack.c.bf16 %v2387, %v2386
        %v2446 = vpack.c.bf16 %v2389, %v2388
        %v2447 = vpack.c.bf16 %v2391, %v2390
        %v2448 = vpack.c.bf16 %v2393, %v2392
        %v2449 = vpack.c.bf16 %v2395, %v2394
        %v2450 = vpack.c.bf16 %v2397, %v2396
        %v2451 = vpack.c.bf16 %v2399, %v2398
        %v2452 = vpack.c.bf16 %v2401, %v2400
        %v2453 = vpack.c.bf16 %v2403, %v2402
        %v2454 = vpack.c.bf16 %v2405, %v2404
        %v2455 = vpack.c.bf16 %v2407, %v2406
        %v2456 = vpack.c.bf16 %v2409, %v2408
        %v2457 = vpack.c.bf16 %v2411, %v2410
        %v2458 = vpack.c.bf16 %v2413, %v2412
        %v2459 = vpack.c.bf16 %v2415, %v2414
        %v2460 = vpack.c.bf16 %v2417, %v2416
        %v2461 = vpack.c.bf16 %v2419, %v2418
        %v2462 = vpack.c.bf16 %v2421, %v2420
        %v2463 = vpack.c.bf16 %v2423, %v2422
        %v2464 = vpack.c.bf16 %v2425, %v2424
        %v2465 = vpack.c.bf16 %v2427, %v2426
        %v2466 = vpack.c.bf16 %v2429, %v2428
        %v2467 = vpack.c.bf16 %v2431, %v2430
        %v2468 = vpack.c.bf16 %v2433, %v2432
        %v2469 = vpack.c.bf16 %v2435, %v2434
        %v2470 = vpack.c.bf16 %v2437, %v2436
        %v2471 = vpack.c.bf16 %v2439, %v2438
        %v2472 = vld [vmem:[%s7] sm:$0xf]
        %v2473 = vld [vmem:[%s7 + $0x4] sm:$0xf]
        %v2474 = vld [vmem:[%s7 + $0x8] sm:$0xf]
        %v2475 = vld [vmem:[%s7 + $0xc] sm:$0xf]
        %v2476 = vld [vmem:[%s7 + $0x10] sm:$0xf]
        %v2477 = vld [vmem:[%s7 + $0x14] sm:$0xf]
        %v2478 = vld [vmem:[%s7 + $0x18] sm:$0xf]
        %v2479 = vld [vmem:[%s7 + $0x1c] sm:$0xf]
        %v2480 = vld [vmem:[%s7 + $0x20] sm:$0xf]
        %v2481 = vld [vmem:[%s7 + $0x24] sm:$0xf]
        %v2482 = vld [vmem:[%s7 + $0x28] sm:$0xf]
        %v2483 = vld [vmem:[%s7 + $0x2c] sm:$0xf]
        %v2484 = vld [vmem:[%s7 + $0x30] sm:$0xf]
        %v2485 = vld [vmem:[%s7 + $0x34] sm:$0xf]
        %v2486 = vld [vmem:[%s7 + $0x38] sm:$0xf]
        %v2487 = vld [vmem:[%s7 + $0x3c] sm:$0xf]
        %v2504 = vunpack.c.l.b16 %v2472
        %v2505 = vunpack.c.l.b16 %v2473
        %v2506 = vunpack.c.l.b16 %v2474
        %v2507 = vunpack.c.l.b16 %v2475
        %v2508 = vunpack.c.l.b16 %v2476
        %v2509 = vunpack.c.l.b16 %v2477
        %v2510 = vunpack.c.l.b16 %v2478
        %v2511 = vunpack.c.l.b16 %v2479
        %v2512 = vunpack.c.l.b16 %v2480
        %v2513 = vunpack.c.l.b16 %v2481
        %v2514 = vunpack.c.l.b16 %v2482
        %v2515 = vunpack.c.l.b16 %v2483
        %v2516 = vunpack.c.l.b16 %v2484
        %v2517 = vunpack.c.l.b16 %v2485
        %v2518 = vunpack.c.l.b16 %v2486
        %v2519 = vunpack.c.l.b16 %v2487
        %v2520 = vpack.c.b16 %v2505, %v2504
        %v2521 = vpack.c.b16 %v2507, %v2506
        %v2522 = vpack.c.b16 %v2509, %v2508
        %v2523 = vpack.c.b16 %v2511, %v2510
        %v2524 = vpack.c.b16 %v2513, %v2512
        %v2525 = vpack.c.b16 %v2515, %v2514
        %v2526 = vpack.c.b16 %v2517, %v2516
        %v2527 = vpack.c.b16 %v2519, %v2518
        %2536 = vmatprep.subr.bf16.mxu0 0
        %2537 = vmatpush1.bf16.msra.mxu0 %v2520
        %2538 = vmatprep.subr.bf16.mxu0 0
        %2539 = vmatpush1.bf16.msra.mxu0 %v2521
        %2540 = vmatprep.subr.bf16.mxu0 0
        %2541 = vmatpush1.bf16.msra.mxu0 %v2522
        %2542 = vmatprep.subr.bf16.mxu0 0
        %2543 = vmatpush1.bf16.msra.mxu0 %v2523
        %2544 = vmatprep.subr.bf16.mxu0 0
        %2545 = vmatpush1.bf16.msra.mxu0 %v2524
        %2546 = vmatprep.subr.bf16.mxu0 0
        %2547 = vmatpush1.bf16.msra.mxu0 %v2525
        %2548 = vmatprep.subr.bf16.mxu0 0
        %2549 = vmatpush1.bf16.msra.mxu0 %v2526
        %2550 = vmatprep.subr.bf16.mxu0 0
        %2551 = vmatpush1.bf16.msra.mxu0 %v2527
        %2552 = vmatprep.subr.bf16.mxu0 0
        %2553 = vmatpush1.bf16.msra.mxu0 0
        %2554 = vmatprep.subr.bf16.mxu0 0
        %2555 = vmatpush1.bf16.msra.mxu0 0
        %2556 = vmatprep.subr.bf16.mxu0 0
        %2557 = vmatpush1.bf16.msra.mxu0 0
        %2558 = vmatprep.subr.bf16.mxu0 0
        %2559 = vmatpush1.bf16.msra.mxu0 0
        %2560 = vmatprep.subr.bf16.mxu0 0
        %2561 = vmatpush1.bf16.msra.mxu0 0
        %2562 = vmatprep.subr.bf16.mxu0 0
        %2563 = vmatpush1.bf16.msra.mxu0 0
        %2564 = vmatprep.subr.bf16.mxu0 0
        %2565 = vmatpush1.bf16.msra.mxu0 0
        %2566 = vmatprep.subr.bf16.mxu0 0
        %2567 = vmatpush1.bf16.msra.mxu0 0
        %2568 = vmatprep.mubr.bf16.mxu0 0
        %2569 = vmatmul.mubr.bf16.gmra.mrb[0].mxu0 %v2440
        %v2570 = vpop.f32.mrb[0].mxu0
        %v2571 = vadd.f32 0.0, %v2570
        %v2572 = vpop.f32.mrb[0].mxu0
        %v2573 = vpop.f32.mrb[0].mxu0
        %v2574 = vadd.f32 0.0, %v2573
        %v2575 = vpop.f32.mrb[0].mxu0
        %2576 = vmatprep.mubr.bf16.mxu0 0
        %2577 = vmatmul.mubr.bf16.gmra.mrb[0].mxu0 %v2441
        %v2578 = vpop.f32.mrb[0].mxu0
        %v2579 = vadd.f32 0.0, %v2578
        %v2580 = vpop.f32.mrb[0].mxu0
        %v2581 = vpop.f32.mrb[0].mxu0
        %v2582 = vadd.f32 0.0, %v2581
        %v2583 = vpop.f32.mrb[0].mxu0
        %2584 = vmatprep.mubr.bf16.mxu0 0
        %2585 = vmatmul.mubr.bf16.gmra.mrb[0].mxu0 %v2442
        %v2586 = vpop.f32.mrb[0].mxu0
        %v2587 = vadd.f32 0.0, %v2586
        %v2588 = vpop.f32.mrb[0].mxu0
        %v2589 = vpop.f32.mrb[0].mxu0
        %v2590 = vadd.f32 0.0, %v2589
        %v2591 = vpop.f32.mrb[0].mxu0
        %2592 = vmatprep.mubr.bf16.mxu0 0
        %2593 = vmatmul.mubr.bf16.gmra.mrb[0].mxu0 %v2443
        %v2594 = vpop.f32.mrb[0].mxu0
        %v2595 = vadd.f32 0.0, %v2594
        %v2596 = vpop.f32.mrb[0].mxu0
        %v2597 = vpop.f32.mrb[0].mxu0
        %v2598 = vadd.f32 0.0, %v2597
        %v2599 = vpop.f32.mrb[0].mxu0
        %2600 = vmatprep.mubr.bf16.mxu0 0
        %2601 = vmatmul.mubr.bf16.gmra.mrb[0].mxu0 %v2444
        %v2602 = vpop.f32.mrb[0].mxu0
        %v2603 = vadd.f32 0.0, %v2602
        %v2604 = vpop.f32.mrb[0].mxu0
        %v2605 = vpop.f32.mrb[0].mxu0
        %v2606 = vadd.f32 0.0, %v2605
        %v2607 = vpop.f32.mrb[0].mxu0
        %2608 = vmatprep.mubr.bf16.mxu0 0
        %2609 = vmatmul.mubr.bf16.gmra.mrb[0].mxu0 %v2445
        %v2610 = vpop.f32.mrb[0].mxu0
        %v2611 = vadd.f32 0.0, %v2610
        %v2612 = vpop.f32.mrb[0].mxu0
        %v2613 = vpop.f32.mrb[0].mxu0
        %v2614 = vadd.f32 0.0, %v2613
        %v2615 = vpop.f32.mrb[0].mxu0
        %2616 = vmatprep.mubr.bf16.mxu0 0
        %2617 = vmatmul.mubr.bf16.gmra.mrb[0].mxu0 %v2446
        %v2618 = vpop.f32.mrb[0].mxu0
        %v2619 = vadd.f32 0.0, %v2618
        %v2620 = vpop.f32.mrb[0].mxu0
        %v2621 = vpop.f32.mrb[0].mxu0
        %v2622 = vadd.f32 0.0, %v2621
        %v2623 = vpop.f32.mrb[0].mxu0
        %2624 = vmatprep.mubr.bf16.mxu0 0
        %2625 = vmatmul.mubr.bf16.gmra.mrb[0].mxu0 %v2447
        %v2626 = vpop.f32.mrb[0].mxu0
        %v2627 = vadd.f32 0.0, %v2626
        %v2628 = vpop.f32.mrb[0].mxu0
        %v2629 = vpop.f32.mrb[0].mxu0
        %v2630 = vadd.f32 0.0, %v2629
        %v2631 = vpop.f32.mrb[0].mxu0
        %2632 = vmatprep.mubr.bf16.mxu0 0
        %2633 = vmatmul.mubr.bf16.gmra.mrb[0].mxu0 %v2448
        %v2634 = vpop.f32.mrb[0].mxu0
        %v2635 = vadd.f32 0.0, %v2634
        %v2636 = vpop.f32.mrb[0].mxu0
        %v2637 = vpop.f32.mrb[0].mxu0
        %v2638 = vadd.f32 0.0, %v2637
        %v2639 = vpop.f32.mrb[0].mxu0
        %2640 = vmatprep.mubr.bf16.mxu0 0
        %2641 = vmatmul.mubr.bf16.gmra.mrb[0].mxu0 %v2449
        %v2642 = vpop.f32.mrb[0].mxu0
        %v2643 = vadd.f32 0.0, %v2642
        %v2644 = vpop.f32.mrb[0].mxu0
        %v2645 = vpop.f32.mrb[0].mxu0
        %v2646 = vadd.f32 0.0, %v2645
        %v2647 = vpop.f32.mrb[0].mxu0
        %2648 = vmatprep.mubr.bf16.mxu0 0
        %2649 = vmatmul.mubr.bf16.gmra.mrb[0].mxu0 %v2450
        %v2650 = vpop.f32.mrb[0].mxu0
        %v2651 = vadd.f32 0.0, %v2650
        %v2652 = vpop.f32.mrb[0].mxu0
        %v2653 = vpop.f32.mrb[0].mxu0
        %v2654 = vadd.f32 0.0, %v2653
        %v2655 = vpop.f32.mrb[0].mxu0
        %2656 = vmatprep.mubr.bf16.mxu0 0
        %2657 = vmatmul.mubr.bf16.gmra.mrb[0].mxu0 %v2451
        %v2658 = vpop.f32.mrb[0].mxu0
        %v2659 = vadd.f32 0.0, %v2658
        %v2660 = vpop.f32.mrb[0].mxu0
        %v2661 = vpop.f32.mrb[0].mxu0
        %v2662 = vadd.f32 0.0, %v2661
        %v2663 = vpop.f32.mrb[0].mxu0
        %2664 = vmatprep.mubr.bf16.mxu0 0
        %2665 = vmatmul.mubr.bf16.gmra.mrb[0].mxu0 %v2452
        %v2666 = vpop.f32.mrb[0].mxu0
        %v2667 = vadd.f32 0.0, %v2666
        %v2668 = vpop.f32.mrb[0].mxu0
        %v2669 = vpop.f32.mrb[0].mxu0
        %v2670 = vadd.f32 0.0, %v2669
        %v2671 = vpop.f32.mrb[0].mxu0
        %2672 = vmatprep.mubr.bf16.mxu0 0
        %2673 = vmatmul.mubr.bf16.gmra.mrb[0].mxu0 %v2453
        %v2674 = vpop.f32.mrb[0].mxu0
        %v2675 = vadd.f32 0.0, %v2674
        %v2676 = vpop.f32.mrb[0].mxu0
        %v2677 = vpop.f32.mrb[0].mxu0
        %v2678 = vadd.f32 0.0, %v2677
        %v2679 = vpop.f32.mrb[0].mxu0
        %2680 = vmatprep.mubr.bf16.mxu0 0
        %2681 = vmatmul.mubr.bf16.gmra.mrb[0].mxu0 %v2454
        %v2682 = vpop.f32.mrb[0].mxu0
        %v2683 = vadd.f32 0.0, %v2682
        %v2684 = vpop.f32.mrb[0].mxu0
        %v2685 = vpop.f32.mrb[0].mxu0
        %v2686 = vadd.f32 0.0, %v2685
        %v2687 = vpop.f32.mrb[0].mxu0
        %2688 = vmatprep.mubr.bf16.mxu0 0
        %2689 = vmatmul.mubr.bf16.gmra.mrb[0].mxu0 %v2455
        %v2690 = vpop.f32.mrb[0].mxu0
        %v2691 = vadd.f32 0.0, %v2690
        %v2692 = vpop.f32.mrb[0].mxu0
        %v2693 = vpop.f32.mrb[0].mxu0
        %v2694 = vadd.f32 0.0, %v2693
        %v2695 = vpop.f32.mrb[0].mxu0
        %2696 = vmatprep.mubr.bf16.mxu0 0
        %2697 = vmatmul.mubr.bf16.gmra.mrb[0].mxu0 %v2456
        %v2698 = vpop.f32.mrb[0].mxu0
        %v2699 = vadd.f32 0.0, %v2698
        %v2700 = vpop.f32.mrb[0].mxu0
        %v2701 = vpop.f32.mrb[0].mxu0
        %v2702 = vadd.f32 0.0, %v2701
        %v2703 = vpop.f32.mrb[0].mxu0
        %2704 = vmatprep.mubr.bf16.mxu0 0
        %2705 = vmatmul.mubr.bf16.gmra.mrb[0].mxu0 %v2457
        %v2706 = vpop.f32.mrb[0].mxu0
        %v2707 = vadd.f32 0.0, %v2706
        %v2708 = vpop.f32.mrb[0].mxu0
        %v2709 = vpop.f32.mrb[0].mxu0
        %v2710 = vadd.f32 0.0, %v2709
        %v2711 = vpop.f32.mrb[0].mxu0
        %2712 = vmatprep.mubr.bf16.mxu0 0
        %2713 = vmatmul.mubr.bf16.gmra.mrb[0].mxu0 %v2458
        %v2714 = vpop.f32.mrb[0].mxu0
        %v2715 = vadd.f32 0.0, %v2714
        %v2716 = vpop.f32.mrb[0].mxu0
        %v2717 = vpop.f32.mrb[0].mxu0
        %v2718 = vadd.f32 0.0, %v2717
        %v2719 = vpop.f32.mrb[0].mxu0
        %2720 = vmatprep.mubr.bf16.mxu0 0
        %2721 = vmatmul.mubr.bf16.gmra.mrb[0].mxu0 %v2459
        %v2722 = vpop.f32.mrb[0].mxu0
        %v2723 = vadd.f32 0.0, %v2722
        %v2724 = vpop.f32.mrb[0].mxu0
        %v2725 = vpop.f32.mrb[0].mxu0
        %v2726 = vadd.f32 0.0, %v2725
        %v2727 = vpop.f32.mrb[0].mxu0
        %2728 = vmatprep.mubr.bf16.mxu0 0
        %2729 = vmatmul.mubr.bf16.gmra.mrb[0].mxu0 %v2460
        %v2730 = vpop.f32.mrb[0].mxu0
        %v2731 = vadd.f32 0.0, %v2730
        %v2732 = vpop.f32.mrb[0].mxu0
        %v2733 = vpop.f32.mrb[0].mxu0
        %v2734 = vadd.f32 0.0, %v2733
        %v2735 = vpop.f32.mrb[0].mxu0
        %2736 = vmatprep.mubr.bf16.mxu0 0
        %2737 = vmatmul.mubr.bf16.gmra.mrb[0].mxu0 %v2461
        %v2738 = vpop.f32.mrb[0].mxu0
        %v2739 = vadd.f32 0.0, %v2738
        %v2740 = vpop.f32.mrb[0].mxu0
        %v2741 = vpop.f32.mrb[0].mxu0
        %v2742 = vadd.f32 0.0, %v2741
        %v2743 = vpop.f32.mrb[0].mxu0
        %2744 = vmatprep.mubr.bf16.mxu0 0
        %2745 = vmatmul.mubr.bf16.gmra.mrb[0].mxu0 %v2462
        %v2746 = vpop.f32.mrb[0].mxu0
        %v2747 = vadd.f32 0.0, %v2746
        %v2748 = vpop.f32.mrb[0].mxu0
        %v2749 = vpop.f32.mrb[0].mxu0
        %v2750 = vadd.f32 0.0, %v2749
        %v2751 = vpop.f32.mrb[0].mxu0
        %2752 = vmatprep.mubr.bf16.mxu0 0
        %2753 = vmatmul.mubr.bf16.gmra.mrb[0].mxu0 %v2463
        %v2754 = vpop.f32.mrb[0].mxu0
        %v2755 = vadd.f32 0.0, %v2754
        %v2756 = vpop.f32.mrb[0].mxu0
        %v2757 = vpop.f32.mrb[0].mxu0
        %v2758 = vadd.f32 0.0, %v2757
        %v2759 = vpop.f32.mrb[0].mxu0
        %2760 = vmatprep.mubr.bf16.mxu0 0
        %2761 = vmatmul.mubr.bf16.gmra.mrb[0].mxu0 %v2464
        %v2762 = vpop.f32.mrb[0].mxu0
        %v2763 = vadd.f32 0.0, %v2762
        %v2764 = vpop.f32.mrb[0].mxu0
        %v2765 = vpop.f32.mrb[0].mxu0
        %v2766 = vadd.f32 0.0, %v2765
        %v2767 = vpop.f32.mrb[0].mxu0
        %2768 = vmatprep.mubr.bf16.mxu0 0
        %2769 = vmatmul.mubr.bf16.gmra.mrb[0].mxu0 %v2465
        %v2770 = vpop.f32.mrb[0].mxu0
        %v2771 = vadd.f32 0.0, %v2770
        %v2772 = vpop.f32.mrb[0].mxu0
        %v2773 = vpop.f32.mrb[0].mxu0
        %v2774 = vadd.f32 0.0, %v2773
        %v2775 = vpop.f32.mrb[0].mxu0
        %2776 = vmatprep.mubr.bf16.mxu0 0
        %2777 = vmatmul.mubr.bf16.gmra.mrb[0].mxu0 %v2466
        %v2778 = vpop.f32.mrb[0].mxu0
        %v2779 = vadd.f32 0.0, %v2778
        %v2780 = vpop.f32.mrb[0].mxu0
        %v2781 = vpop.f32.mrb[0].mxu0
        %v2782 = vadd.f32 0.0, %v2781
        %v2783 = vpop.f32.mrb[0].mxu0
        %2784 = vmatprep.mubr.bf16.mxu0 0
        %2785 = vmatmul.mubr.bf16.gmra.mrb[0].mxu0 %v2467
        %v2786 = vpop.f32.mrb[0].mxu0
        %v2787 = vadd.f32 0.0, %v2786
        %v2788 = vpop.f32.mrb[0].mxu0
        %v2789 = vpop.f32.mrb[0].mxu0
        %v2790 = vadd.f32 0.0, %v2789
        %v2791 = vpop.f32.mrb[0].mxu0
        %2792 = vmatprep.mubr.bf16.mxu0 0
        %2793 = vmatmul.mubr.bf16.gmra.mrb[0].mxu0 %v2468
        %v2794 = vpop.f32.mrb[0].mxu0
        %v2795 = vadd.f32 0.0, %v2794
        %v2796 = vpop.f32.mrb[0].mxu0
        %v2797 = vpop.f32.mrb[0].mxu0
        %v2798 = vadd.f32 0.0, %v2797
        %v2799 = vpop.f32.mrb[0].mxu0
        %2800 = vmatprep.mubr.bf16.mxu0 0
        %2801 = vmatmul.mubr.bf16.gmra.mrb[0].mxu0 %v2469
        %v2802 = vpop.f32.mrb[0].mxu0
        %v2803 = vadd.f32 0.0, %v2802
        %v2804 = vpop.f32.mrb[0].mxu0
        %v2805 = vpop.f32.mrb[0].mxu0
        %v2806 = vadd.f32 0.0, %v2805
        %v2807 = vpop.f32.mrb[0].mxu0
        %2808 = vmatprep.mubr.bf16.mxu0 0
        %2809 = vmatmul.mubr.bf16.gmra.mrb[0].mxu0 %v2470
        %v2810 = vpop.f32.mrb[0].mxu0
        %v2811 = vadd.f32 0.0, %v2810
        %v2812 = vpop.f32.mrb[0].mxu0
        %v2813 = vpop.f32.mrb[0].mxu0
        %v2814 = vadd.f32 0.0, %v2813
        %v2815 = vpop.f32.mrb[0].mxu0
        %2816 = vmatprep.mubr.bf16.mxu0 0
        %2817 = vmatmul.mubr.bf16.gmra.mrb[0].mxu0 %v2471
        %v2818 = vpop.f32.mrb[0].mxu0
        %v2819 = vadd.f32 0.0, %v2818
        %v2820 = vpop.f32.mrb[0].mxu0
        %v2821 = vpop.f32.mrb[0].mxu0
        %v2822 = vadd.f32 0.0, %v2821
        %v2823 = vpop.f32.mrb[0].mxu0
        %2824 = vdwg.mxu0
        %v2825 = vadd.f32 %v2571, %v2574
        %v2826 = vadd.f32 %v2825, %v2579
        %v2827 = vadd.f32 %v2826, %v2582
        %v2828 = vadd.f32 %v2827, %v2587
        %v2829 = vadd.f32 %v2828, %v2590
        %v2830 = vadd.f32 %v2829, %v2595
        %v2831 = vadd.f32 %v2830, %v2598
        %v2832 = vadd.f32 %v2831, %v2603
        %v2833 = vadd.f32 %v2832, %v2606
        %v2834 = vadd.f32 %v2833, %v2611
        %v2835 = vadd.f32 %v2834, %v2614
        %v2836 = vadd.f32 %v2835, %v2619
        %v2837 = vadd.f32 %v2836, %v2622
        %v2838 = vadd.f32 %v2837, %v2627
        %v2839 = vadd.f32 %v2838, %v2630
        %v2840 = vadd.f32 %v2839, %v2635
        %v2841 = vadd.f32 %v2840, %v2638
        %v2842 = vadd.f32 %v2841, %v2643
        %v2843 = vadd.f32 %v2842, %v2646
        %v2844 = vadd.f32 %v2843, %v2651
        %v2845 = vadd.f32 %v2844, %v2654
        %v2846 = vadd.f32 %v2845, %v2659
        %v2847 = vadd.f32 %v2846, %v2662
        %v2848 = vadd.f32 %v2847, %v2667
        %v2849 = vadd.f32 %v2848, %v2670
        %v2850 = vadd.f32 %v2849, %v2675
        %v2851 = vadd.f32 %v2850, %v2678
        %v2852 = vadd.f32 %v2851, %v2683
        %v2853 = vadd.f32 %v2852, %v2686
        %v2854 = vadd.f32 %v2853, %v2691
        %v2855 = vadd.f32 %v2854, %v2694
        %v2856 = vadd.f32 %v2855, %v2699
        %v2857 = vadd.f32 %v2856, %v2702
        %v2858 = vadd.f32 %v2857, %v2707
        %v2859 = vadd.f32 %v2858, %v2710
        %v2860 = vadd.f32 %v2859, %v2715
        %v2861 = vadd.f32 %v2860, %v2718
        %v2862 = vadd.f32 %v2861, %v2723
        %v2863 = vadd.f32 %v2862, %v2726
        %v2864 = vadd.f32 %v2863, %v2731
        %v2865 = vadd.f32 %v2864, %v2734
        %v2866 = vadd.f32 %v2865, %v2739
        %v2867 = vadd.f32 %v2866, %v2742
        %v2868 = vadd.f32 %v2867, %v2747
        %v2869 = vadd.f32 %v2868, %v2750
        %v2870 = vadd.f32 %v2869, %v2755
        %v2871 = vadd.f32 %v2870, %v2758
        %v2872 = vadd.f32 %v2871, %v2763
        %v2873 = vadd.f32 %v2872, %v2766
        %v2874 = vadd.f32 %v2873, %v2771
        %v2875 = vadd.f32 %v2874, %v2774
        %v2876 = vadd.f32 %v2875, %v2779
        %v2877 = vadd.f32 %v2876, %v2782
        %v2878 = vadd.f32 %v2877, %v2787
        %v2879 = vadd.f32 %v2878, %v2790
        %v2880 = vadd.f32 %v2879, %v2795
        %v2881 = vadd.f32 %v2880, %v2798
        %v2882 = vadd.f32 %v2881, %v2803
        %v2883 = vadd.f32 %v2882, %v2806
        %v2884 = vadd.f32 %v2883, %v2811
        %v2885 = vadd.f32 %v2884, %v2814
        %v2886 = vadd.f32 %v2885, %v2819
        %v2887 = vadd.f32 %v2886, %v2822
        %v2888 = vrot.slane %v2887, 4
        %v2889 = vadd.f32 %v2887, %v2888
        %v2890 = vrot.slane %v2889, 2
        %v2891 = vadd.f32 %v2889, %v2890
        %v2892 = vrot.slane %v2891, 1
        %v2893 = vadd.f32 %v2891, %v2892
        %v2894 = vmul.f32 %v2893, %v1043
        %v2895 = vsub.f32 %v2571, %v2894
        %v2896 = vsub.f32 %v2574, %v2894
        %v2897 = vsub.f32 %v2579, %v2894
        %v2898 = vsub.f32 %v2582, %v2894
        %v2899 = vsub.f32 %v2587, %v2894
        %v2900 = vsub.f32 %v2590, %v2894
        %v2901 = vsub.f32 %v2595, %v2894
        %v2902 = vsub.f32 %v2598, %v2894
        %v2903 = vsub.f32 %v2603, %v2894
        %v2904 = vsub.f32 %v2606, %v2894
        %v2905 = vsub.f32 %v2611, %v2894
        %v2906 = vsub.f32 %v2614, %v2894
        %v2907 = vsub.f32 %v2619, %v2894
        %v2908 = vsub.f32 %v2622, %v2894
        %v2909 = vsub.f32 %v2627, %v2894
        %v2910 = vsub.f32 %v2630, %v2894
        %v2911 = vsub.f32 %v2635, %v2894
        %v2912 = vsub.f32 %v2638, %v2894
        %v2913 = vsub.f32 %v2643, %v2894
        %v2914 = vsub.f32 %v2646, %v2894
        %v2915 = vsub.f32 %v2651, %v2894
        %v2916 = vsub.f32 %v2654, %v2894
        %v2917 = vsub.f32 %v2659, %v2894
        %v2918 = vsub.f32 %v2662, %v2894
        %v2919 = vsub.f32 %v2667, %v2894
        %v2920 = vsub.f32 %v2670, %v2894
        %v2921 = vsub.f32 %v2675, %v2894
        %v2922 = vsub.f32 %v2678, %v2894
        %v2923 = vsub.f32 %v2683, %v2894
        %v2924 = vsub.f32 %v2686, %v2894
        %v2925 = vsub.f32 %v2691, %v2894
        %v2926 = vsub.f32 %v2694, %v2894
        %v2927 = vsub.f32 %v2699, %v2894
        %v2928 = vsub.f32 %v2702, %v2894
        %v2929 = vsub.f32 %v2707, %v2894
        %v2930 = vsub.f32 %v2710, %v2894
        %v2931 = vsub.f32 %v2715, %v2894
        %v2932 = vsub.f32 %v2718, %v2894
        %v2933 = vsub.f32 %v2723, %v2894
        %v2934 = vsub.f32 %v2726, %v2894
        %v2935 = vsub.f32 %v2731, %v2894
        %v2936 = vsub.f32 %v2734, %v2894
        %v2937 = vsub.f32 %v2739, %v2894
        %v2938 = vsub.f32 %v2742, %v2894
        %v2939 = vsub.f32 %v2747, %v2894
        %v2940 = vsub.f32 %v2750, %v2894
        %v2941 = vsub.f32 %v2755, %v2894
        %v2942 = vsub.f32 %v2758, %v2894
        %v2943 = vsub.f32 %v2763, %v2894
        %v2944 = vsub.f32 %v2766, %v2894
        %v2945 = vsub.f32 %v2771, %v2894
        %v2946 = vsub.f32 %v2774, %v2894
        %v2947 = vsub.f32 %v2779, %v2894
        %v2948 = vsub.f32 %v2782, %v2894
        %v2949 = vsub.f32 %v2787, %v2894
        %v2950 = vsub.f32 %v2790, %v2894
        %v2951 = vsub.f32 %v2795, %v2894
        %v2952 = vsub.f32 %v2798, %v2894
        %v2953 = vsub.f32 %v2803, %v2894
        %v2954 = vsub.f32 %v2806, %v2894
        %v2955 = vsub.f32 %v2811, %v2894
        %v2956 = vsub.f32 %v2814, %v2894
        %v2957 = vsub.f32 %v2819, %v2894
        %v2958 = vsub.f32 %v2822, %v2894
        %v2959 = vmul.f32 %v2895, %v2895
        %v2960 = vmul.f32 %v2896, %v2896
        %v2961 = vmul.f32 %v2897, %v2897
        %v2962 = vmul.f32 %v2898, %v2898
        %v2963 = vmul.f32 %v2899, %v2899
        %v2964 = vmul.f32 %v2900, %v2900
        %v2965 = vmul.f32 %v2901, %v2901
        %v2966 = vmul.f32 %v2902, %v2902
        %v2967 = vmul.f32 %v2903, %v2903
        %v2968 = vmul.f32 %v2904, %v2904
        %v2969 = vmul.f32 %v2905, %v2905
        %v2970 = vmul.f32 %v2906, %v2906
        %v2971 = vmul.f32 %v2907, %v2907
        %v2972 = vmul.f32 %v2908, %v2908
        %v2973 = vmul.f32 %v2909, %v2909
        %v2974 = vmul.f32 %v2910, %v2910
        %v2975 = vmul.f32 %v2911, %v2911
        %v2976 = vmul.f32 %v2912, %v2912
        %v2977 = vmul.f32 %v2913, %v2913
        %v2978 = vmul.f32 %v2914, %v2914
        %v2979 = vmul.f32 %v2915, %v2915
        %v2980 = vmul.f32 %v2916, %v2916
        %v2981 = vmul.f32 %v2917, %v2917
        %v2982 = vmul.f32 %v2918, %v2918
        %v2983 = vmul.f32 %v2919, %v2919
        %v2984 = vmul.f32 %v2920, %v2920
        %v2985 = vmul.f32 %v2921, %v2921
        %v2986 = vmul.f32 %v2922, %v2922
        %v2987 = vmul.f32 %v2923, %v2923
        %v2988 = vmul.f32 %v2924, %v2924
        %v2989 = vmul.f32 %v2925, %v2925
        %v2990 = vmul.f32 %v2926, %v2926
        %v2991 = vmul.f32 %v2927, %v2927
        %v2992 = vmul.f32 %v2928, %v2928
        %v2993 = vmul.f32 %v2929, %v2929
        %v2994 = vmul.f32 %v2930, %v2930
        %v2995 = vmul.f32 %v2931, %v2931
        %v2996 = vmul.f32 %v2932, %v2932
        %v2997 = vmul.f32 %v2933, %v2933
        %v2998 = vmul.f32 %v2934, %v2934
        %v2999 = vmul.f32 %v2935, %v2935
        %v3000 = vmul.f32 %v2936, %v2936
        %v3001 = vmul.f32 %v2937, %v2937
        %v3002 = vmul.f32 %v2938, %v2938
        %v3003 = vmul.f32 %v2939, %v2939
        %v3004 = vmul.f32 %v2940, %v2940
        %v3005 = vmul.f32 %v2941, %v2941
        %v3006 = vmul.f32 %v2942, %v2942
        %v3007 = vmul.f32 %v2943, %v2943
        %v3008 = vmul.f32 %v2944, %v2944
        %v3009 = vmul.f32 %v2945, %v2945
        %v3010 = vmul.f32 %v2946, %v2946
        %v3011 = vmul.f32 %v2947, %v2947
        %v3012 = vmul.f32 %v2948, %v2948
        %v3013 = vmul.f32 %v2949, %v2949
        %v3014 = vmul.f32 %v2950, %v2950
        %v3015 = vmul.f32 %v2951, %v2951
        %v3016 = vmul.f32 %v2952, %v2952
        %v3017 = vmul.f32 %v2953, %v2953
        %v3018 = vmul.f32 %v2954, %v2954
        %v3019 = vmul.f32 %v2955, %v2955
        %v3020 = vmul.f32 %v2956, %v2956
        %v3021 = vmul.f32 %v2957, %v2957
        %v3022 = vmul.f32 %v2958, %v2958
        %v3023 = vadd.f32 %v2959, %v2960
        %v3024 = vadd.f32 %v3023, %v2961
        %v3025 = vadd.f32 %v3024, %v2962
        %v3026 = vadd.f32 %v3025, %v2963
        %v3027 = vadd.f32 %v3026, %v2964
        %v3028 = vadd.f32 %v3027, %v2965
        %v3029 = vadd.f32 %v3028, %v2966
        %v3030 = vadd.f32 %v3029, %v2967
        %v3031 = vadd.f32 %v3030, %v2968
        %v3032 = vadd.f32 %v3031, %v2969
        %v3033 = vadd.f32 %v3032, %v2970
        %v3034 = vadd.f32 %v3033, %v2971
        %v3035 = vadd.f32 %v3034, %v2972
        %v3036 = vadd.f32 %v3035, %v2973
        %v3037 = vadd.f32 %v3036, %v2974
        %v3038 = vadd.f32 %v3037, %v2975
        %v3039 = vadd.f32 %v3038, %v2976
        %v3040 = vadd.f32 %v3039, %v2977
        %v3041 = vadd.f32 %v3040, %v2978
        %v3042 = vadd.f32 %v3041, %v2979
        %v3043 = vadd.f32 %v3042, %v2980
        %v3044 = vadd.f32 %v3043, %v2981
        %v3045 = vadd.f32 %v3044, %v2982
        %v3046 = vadd.f32 %v3045, %v2983
        %v3047 = vadd.f32 %v3046, %v2984
        %v3048 = vadd.f32 %v3047, %v2985
        %v3049 = vadd.f32 %v3048, %v2986
        %v3050 = vadd.f32 %v3049, %v2987
        %v3051 = vadd.f32 %v3050, %v2988
        %v3052 = vadd.f32 %v3051, %v2989
        %v3053 = vadd.f32 %v3052, %v2990
        %v3054 = vadd.f32 %v3053, %v2991
        %v3055 = vadd.f32 %v3054, %v2992
        %v3056 = vadd.f32 %v3055, %v2993
        %v3057 = vadd.f32 %v3056, %v2994
        %v3058 = vadd.f32 %v3057, %v2995
        %v3059 = vadd.f32 %v3058, %v2996
        %v3060 = vadd.f32 %v3059, %v2997
        %v3061 = vadd.f32 %v3060, %v2998
        %v3062 = vadd.f32 %v3061, %v2999
        %v3063 = vadd.f32 %v3062, %v3000
        %v3064 = vadd.f32 %v3063, %v3001
        %v3065 = vadd.f32 %v3064, %v3002
        %v3066 = vadd.f32 %v3065, %v3003
        %v3067 = vadd.f32 %v3066, %v3004
        %v3068 = vadd.f32 %v3067, %v3005
        %v3069 = vadd.f32 %v3068, %v3006
        %v3070 = vadd.f32 %v3069, %v3007
        %v3071 = vadd.f32 %v3070, %v3008
        %v3072 = vadd.f32 %v3071, %v3009
        %v3073 = vadd.f32 %v3072, %v3010
        %v3074 = vadd.f32 %v3073, %v3011
        %v3075 = vadd.f32 %v3074, %v3012
        %v3076 = vadd.f32 %v3075, %v3013
        %v3077 = vadd.f32 %v3076, %v3014
        %v3078 = vadd.f32 %v3077, %v3015
        %v3079 = vadd.f32 %v3078, %v3016
        %v3080 = vadd.f32 %v3079, %v3017
        %v3081 = vadd.f32 %v3080, %v3018
        %v3082 = vadd.f32 %v3081, %v3019
        %v3083 = vadd.f32 %v3082, %v3020
        %v3084 = vadd.f32 %v3083, %v3021
        %v3085 = vadd.f32 %v3084, %v3022
        %v3086 = vrot.slane %v3085, 4
        %v3087 = vadd.f32 %v3085, %v3086
        %v3088 = vrot.slane %v3087, 2
        %v3089 = vadd.f32 %v3087, %v3088
        %v3090 = vrot.slane %v3089, 1
        %v3091 = vadd.f32 %v3089, %v3090
        %v3092 = vmul.f32 %v3091, %v1043
        %v3093 = vadd.f32 %v3092, 1e-05
        %v3094 = vrsqrt.pop %v3093
        %v3095 = vmul.f32 %v2895, %v3094
        %v3096 = vmul.f32 %v2896, %v3094
        %v3097 = vmul.f32 %v2897, %v3094
        %v3098 = vmul.f32 %v2898, %v3094
        %v3099 = vmul.f32 %v2899, %v3094
        %v3100 = vmul.f32 %v2900, %v3094
        %v3101 = vmul.f32 %v2901, %v3094
        %v3102 = vmul.f32 %v2902, %v3094
        %v3103 = vmul.f32 %v2903, %v3094
        %v3104 = vmul.f32 %v2904, %v3094
        %v3105 = vmul.f32 %v2905, %v3094
        %v3106 = vmul.f32 %v2906, %v3094
        %v3107 = vmul.f32 %v2907, %v3094
        %v3108 = vmul.f32 %v2908, %v3094
        %v3109 = vmul.f32 %v2909, %v3094
        %v3110 = vmul.f32 %v2910, %v3094
        %v3111 = vmul.f32 %v2911, %v3094
        %v3112 = vmul.f32 %v2912, %v3094
        %v3113 = vmul.f32 %v2913, %v3094
        %v3114 = vmul.f32 %v2914, %v3094
        %v3115 = vmul.f32 %v2915, %v3094
        %v3116 = vmul.f32 %v2916, %v3094
        %v3117 = vmul.f32 %v2917, %v3094
        %v3118 = vmul.f32 %v2918, %v3094
        %v3119 = vmul.f32 %v2919, %v3094
        %v3120 = vmul.f32 %v2920, %v3094
        %v3121 = vmul.f32 %v2921, %v3094
        %v3122 = vmul.f32 %v2922, %v3094
        %v3123 = vmul.f32 %v2923, %v3094
        %v3124 = vmul.f32 %v2924, %v3094
        %v3125 = vmul.f32 %v2925, %v3094
        %v3126 = vmul.f32 %v2926, %v3094
        %v3127 = vmul.f32 %v2927, %v3094
        %v3128 = vmul.f32 %v2928, %v3094
        %v3129 = vmul.f32 %v2929, %v3094
        %v3130 = vmul.f32 %v2930, %v3094
        %v3131 = vmul.f32 %v2931, %v3094
        %v3132 = vmul.f32 %v2932, %v3094
        %v3133 = vmul.f32 %v2933, %v3094
        %v3134 = vmul.f32 %v2934, %v3094
        %v3135 = vmul.f32 %v2935, %v3094
        %v3136 = vmul.f32 %v2936, %v3094
        %v3137 = vmul.f32 %v2937, %v3094
        %v3138 = vmul.f32 %v2938, %v3094
        %v3139 = vmul.f32 %v2939, %v3094
        %v3140 = vmul.f32 %v2940, %v3094
        %v3141 = vmul.f32 %v2941, %v3094
        %v3142 = vmul.f32 %v2942, %v3094
        %v3143 = vmul.f32 %v2943, %v3094
        %v3144 = vmul.f32 %v2944, %v3094
        %v3145 = vmul.f32 %v2945, %v3094
        %v3146 = vmul.f32 %v2946, %v3094
        %v3147 = vmul.f32 %v2947, %v3094
        %v3148 = vmul.f32 %v2948, %v3094
        %v3149 = vmul.f32 %v2949, %v3094
        %v3150 = vmul.f32 %v2950, %v3094
        %v3151 = vmul.f32 %v2951, %v3094
        %v3152 = vmul.f32 %v2952, %v3094
        %v3153 = vmul.f32 %v2953, %v3094
        %v3154 = vmul.f32 %v2954, %v3094
        %v3155 = vmul.f32 %v2955, %v3094
        %v3156 = vmul.f32 %v2956, %v3094
        %v3157 = vmul.f32 %v2957, %v3094
        %v3158 = vmul.f32 %v2958, %v3094
        %v3159 = vld [vmem:[%s8] sm:$0x1]
        %v3161 = vlaneseq
        %v3162 = vshrl.u32 %v3161, 7
        %v3163 = vsub.s32 0, %v3162
        %v3164 = vrot.slane %v3159, %v3163
        %v3166 = vmul.f32 %v3095, %v3164
        %v3167 = vmul.f32 %v3096, %v3164
        %v3168 = vmul.f32 %v3097, %v3164
        %v3169 = vmul.f32 %v3098, %v3164
        %v3170 = vmul.f32 %v3099, %v3164
        %v3171 = vmul.f32 %v3100, %v3164
        %v3172 = vmul.f32 %v3101, %v3164
        %v3173 = vmul.f32 %v3102, %v3164
        %v3174 = vmul.f32 %v3103, %v3164
        %v3175 = vmul.f32 %v3104, %v3164
        %v3176 = vmul.f32 %v3105, %v3164
        %v3177 = vmul.f32 %v3106, %v3164
        %v3178 = vmul.f32 %v3107, %v3164
        %v3179 = vmul.f32 %v3108, %v3164
        %v3180 = vmul.f32 %v3109, %v3164
        %v3181 = vmul.f32 %v3110, %v3164
        %v3182 = vmul.f32 %v3111, %v3164
        %v3183 = vmul.f32 %v3112, %v3164
        %v3184 = vmul.f32 %v3113, %v3164
        %v3185 = vmul.f32 %v3114, %v3164
        %v3186 = vmul.f32 %v3115, %v3164
        %v3187 = vmul.f32 %v3116, %v3164
        %v3188 = vmul.f32 %v3117, %v3164
        %v3189 = vmul.f32 %v3118, %v3164
        %v3190 = vmul.f32 %v3119, %v3164
        %v3191 = vmul.f32 %v3120, %v3164
        %v3192 = vmul.f32 %v3121, %v3164
        %v3193 = vmul.f32 %v3122, %v3164
        %v3194 = vmul.f32 %v3123, %v3164
        %v3195 = vmul.f32 %v3124, %v3164
        %v3196 = vmul.f32 %v3125, %v3164
        %v3197 = vmul.f32 %v3126, %v3164
        %v3198 = vmul.f32 %v3127, %v3164
        %v3199 = vmul.f32 %v3128, %v3164
        %v3200 = vmul.f32 %v3129, %v3164
        %v3201 = vmul.f32 %v3130, %v3164
        %v3202 = vmul.f32 %v3131, %v3164
        %v3203 = vmul.f32 %v3132, %v3164
        %v3204 = vmul.f32 %v3133, %v3164
        %v3205 = vmul.f32 %v3134, %v3164
        %v3206 = vmul.f32 %v3135, %v3164
        %v3207 = vmul.f32 %v3136, %v3164
        %v3208 = vmul.f32 %v3137, %v3164
        %v3209 = vmul.f32 %v3138, %v3164
        %v3210 = vmul.f32 %v3139, %v3164
        %v3211 = vmul.f32 %v3140, %v3164
        %v3212 = vmul.f32 %v3141, %v3164
        %v3213 = vmul.f32 %v3142, %v3164
        %v3214 = vmul.f32 %v3143, %v3164
        %v3215 = vmul.f32 %v3144, %v3164
        %v3216 = vmul.f32 %v3145, %v3164
        %v3217 = vmul.f32 %v3146, %v3164
        %v3218 = vmul.f32 %v3147, %v3164
        %v3219 = vmul.f32 %v3148, %v3164
        %v3220 = vmul.f32 %v3149, %v3164
        %v3221 = vmul.f32 %v3150, %v3164
        %v3222 = vmul.f32 %v3151, %v3164
        %v3223 = vmul.f32 %v3152, %v3164
        %v3224 = vmul.f32 %v3153, %v3164
        %v3225 = vmul.f32 %v3154, %v3164
        %v3226 = vmul.f32 %v3155, %v3164
        %v3227 = vmul.f32 %v3156, %v3164
        %v3228 = vmul.f32 %v3157, %v3164
        %v3229 = vmul.f32 %v3158, %v3164
        %v3230 = vld [vmem:[%s9] sm:$0x1]
        %v3232 = vlaneseq
        %v3233 = vshrl.u32 %v3232, 7
        %v3234 = vsub.s32 0, %v3233
        %v3235 = vrot.slane %v3230, %v3234
        %v3237 = vadd.f32 %v3166, %v3235
        %v3238 = vadd.f32 %v3167, %v3235
        %v3239 = vadd.f32 %v3168, %v3235
        %v3240 = vadd.f32 %v3169, %v3235
        %v3241 = vadd.f32 %v3170, %v3235
        %v3242 = vadd.f32 %v3171, %v3235
        %v3243 = vadd.f32 %v3172, %v3235
        %v3244 = vadd.f32 %v3173, %v3235
        %v3245 = vadd.f32 %v3174, %v3235
        %v3246 = vadd.f32 %v3175, %v3235
        %v3247 = vadd.f32 %v3176, %v3235
        %v3248 = vadd.f32 %v3177, %v3235
        %v3249 = vadd.f32 %v3178, %v3235
        %v3250 = vadd.f32 %v3179, %v3235
        %v3251 = vadd.f32 %v3180, %v3235
        %v3252 = vadd.f32 %v3181, %v3235
        %v3253 = vadd.f32 %v3182, %v3235
        %v3254 = vadd.f32 %v3183, %v3235
        %v3255 = vadd.f32 %v3184, %v3235
        %v3256 = vadd.f32 %v3185, %v3235
        %v3257 = vadd.f32 %v3186, %v3235
        %v3258 = vadd.f32 %v3187, %v3235
        %v3259 = vadd.f32 %v3188, %v3235
        %v3260 = vadd.f32 %v3189, %v3235
        %v3261 = vadd.f32 %v3190, %v3235
        %v3262 = vadd.f32 %v3191, %v3235
        %v3263 = vadd.f32 %v3192, %v3235
        %v3264 = vadd.f32 %v3193, %v3235
        %v3265 = vadd.f32 %v3194, %v3235
        %v3266 = vadd.f32 %v3195, %v3235
        %v3267 = vadd.f32 %v3196, %v3235
        %v3268 = vadd.f32 %v3197, %v3235
        %v3269 = vadd.f32 %v3198, %v3235
        %v3270 = vadd.f32 %v3199, %v3235
        %v3271 = vadd.f32 %v3200, %v3235
        %v3272 = vadd.f32 %v3201, %v3235
        %v3273 = vadd.f32 %v3202, %v3235
        %v3274 = vadd.f32 %v3203, %v3235
        %v3275 = vadd.f32 %v3204, %v3235
        %v3276 = vadd.f32 %v3205, %v3235
        %v3277 = vadd.f32 %v3206, %v3235
        %v3278 = vadd.f32 %v3207, %v3235
        %v3279 = vadd.f32 %v3208, %v3235
        %v3280 = vadd.f32 %v3209, %v3235
        %v3281 = vadd.f32 %v3210, %v3235
        %v3282 = vadd.f32 %v3211, %v3235
        %v3283 = vadd.f32 %v3212, %v3235
        %v3284 = vadd.f32 %v3213, %v3235
        %v3285 = vadd.f32 %v3214, %v3235
        %v3286 = vadd.f32 %v3215, %v3235
        %v3287 = vadd.f32 %v3216, %v3235
        %v3288 = vadd.f32 %v3217, %v3235
        %v3289 = vadd.f32 %v3218, %v3235
        %v3290 = vadd.f32 %v3219, %v3235
        %v3291 = vadd.f32 %v3220, %v3235
        %v3292 = vadd.f32 %v3221, %v3235
        %v3293 = vadd.f32 %v3222, %v3235
        %v3294 = vadd.f32 %v3223, %v3235
        %v3295 = vadd.f32 %v3224, %v3235
        %v3296 = vadd.f32 %v3225, %v3235
        %v3297 = vadd.f32 %v3226, %v3235
        %v3298 = vadd.f32 %v3227, %v3235
        %v3299 = vadd.f32 %v3228, %v3235
        %v3300 = vadd.f32 %v3229, %v3235
        %v3301 = vmax.f32 %v3237, 0.0
        %v3302 = vmax.f32 %v3238, 0.0
        %v3303 = vmax.f32 %v3239, 0.0
        %v3304 = vmax.f32 %v3240, 0.0
        %v3305 = vmax.f32 %v3241, 0.0
        %v3306 = vmax.f32 %v3242, 0.0
        %v3307 = vmax.f32 %v3243, 0.0
        %v3308 = vmax.f32 %v3244, 0.0
        %v3309 = vmax.f32 %v3245, 0.0
        %v3310 = vmax.f32 %v3246, 0.0
        %v3311 = vmax.f32 %v3247, 0.0
        %v3312 = vmax.f32 %v3248, 0.0
        %v3313 = vmax.f32 %v3249, 0.0
        %v3314 = vmax.f32 %v3250, 0.0
        %v3315 = vmax.f32 %v3251, 0.0
        %v3316 = vmax.f32 %v3252, 0.0
        %v3317 = vmax.f32 %v3253, 0.0
        %v3318 = vmax.f32 %v3254, 0.0
        %v3319 = vmax.f32 %v3255, 0.0
        %v3320 = vmax.f32 %v3256, 0.0
        %v3321 = vmax.f32 %v3257, 0.0
        %v3322 = vmax.f32 %v3258, 0.0
        %v3323 = vmax.f32 %v3259, 0.0
        %v3324 = vmax.f32 %v3260, 0.0
        %v3325 = vmax.f32 %v3261, 0.0
        %v3326 = vmax.f32 %v3262, 0.0
        %v3327 = vmax.f32 %v3263, 0.0
        %v3328 = vmax.f32 %v3264, 0.0
        %v3329 = vmax.f32 %v3265, 0.0
        %v3330 = vmax.f32 %v3266, 0.0
        %v3331 = vmax.f32 %v3267, 0.0
        %v3332 = vmax.f32 %v3268, 0.0
        %v3333 = vmax.f32 %v3269, 0.0
        %v3334 = vmax.f32 %v3270, 0.0
        %v3335 = vmax.f32 %v3271, 0.0
        %v3336 = vmax.f32 %v3272, 0.0
        %v3337 = vmax.f32 %v3273, 0.0
        %v3338 = vmax.f32 %v3274, 0.0
        %v3339 = vmax.f32 %v3275, 0.0
        %v3340 = vmax.f32 %v3276, 0.0
        %v3341 = vmax.f32 %v3277, 0.0
        %v3342 = vmax.f32 %v3278, 0.0
        %v3343 = vmax.f32 %v3279, 0.0
        %v3344 = vmax.f32 %v3280, 0.0
        %v3345 = vmax.f32 %v3281, 0.0
        %v3346 = vmax.f32 %v3282, 0.0
        %v3347 = vmax.f32 %v3283, 0.0
        %v3348 = vmax.f32 %v3284, 0.0
        %v3349 = vmax.f32 %v3285, 0.0
        %v3350 = vmax.f32 %v3286, 0.0
        %v3351 = vmax.f32 %v3287, 0.0
        %v3352 = vmax.f32 %v3288, 0.0
        %v3353 = vmax.f32 %v3289, 0.0
        %v3354 = vmax.f32 %v3290, 0.0
        %v3355 = vmax.f32 %v3291, 0.0
        %v3356 = vmax.f32 %v3292, 0.0
        %v3357 = vmax.f32 %v3293, 0.0
        %v3358 = vmax.f32 %v3294, 0.0
        %v3359 = vmax.f32 %v3295, 0.0
        %v3360 = vmax.f32 %v3296, 0.0
        %v3361 = vmax.f32 %v3297, 0.0
        %v3362 = vmax.f32 %v3298, 0.0
        %v3363 = vmax.f32 %v3299, 0.0
        %v3364 = vmax.f32 %v3300, 0.0
        %v3365 = vmax.f32 %v3301, %v3305
        %v3366 = vmax.f32 %v3302, %v3306
        %v3367 = vmax.f32 %v3303, %v3307
        %v3368 = vmax.f32 %v3304, %v3308
        %v3369 = vmax.f32 %v3365, %v3309
        %v3370 = vmax.f32 %v3366, %v3310
        %v3371 = vmax.f32 %v3367, %v3311
        %v3372 = vmax.f32 %v3368, %v3312
        %v3373 = vmax.f32 %v3369, %v3313
        %v3374 = vmax.f32 %v3370, %v3314
        %v3375 = vmax.f32 %v3371, %v3315
        %v3376 = vmax.f32 %v3372, %v3316
        %v3377 = vmax.f32 %v3373, %v3317
        %v3378 = vmax.f32 %v3374, %v3318
        %v3379 = vmax.f32 %v3375, %v3319
        %v3380 = vmax.f32 %v3376, %v3320
        %v3381 = vmax.f32 %v3377, %v3321
        %v3382 = vmax.f32 %v3378, %v3322
        %v3383 = vmax.f32 %v3379, %v3323
        %v3384 = vmax.f32 %v3380, %v3324
        %v3385 = vmax.f32 %v3381, %v3325
        %v3386 = vmax.f32 %v3382, %v3326
        %v3387 = vmax.f32 %v3383, %v3327
        %v3388 = vmax.f32 %v3384, %v3328
        %v3389 = vmax.f32 %v3385, %v3329
        %v3390 = vmax.f32 %v3386, %v3330
        %v3391 = vmax.f32 %v3387, %v3331
        %v3392 = vmax.f32 %v3388, %v3332
        %v3393 = vmax.f32 %v3389, %v3333
        %v3394 = vmax.f32 %v3390, %v3334
        %v3395 = vmax.f32 %v3391, %v3335
        %v3396 = vmax.f32 %v3392, %v3336
        %v3397 = vmax.f32 %v3393, %v3337
        %v3398 = vmax.f32 %v3394, %v3338
        %v3399 = vmax.f32 %v3395, %v3339
        %v3400 = vmax.f32 %v3396, %v3340
        %v3401 = vmax.f32 %v3397, %v3341
        %v3402 = vmax.f32 %v3398, %v3342
        %v3403 = vmax.f32 %v3399, %v3343
        %v3404 = vmax.f32 %v3400, %v3344
        %v3405 = vmax.f32 %v3401, %v3345
        %v3406 = vmax.f32 %v3402, %v3346
        %v3407 = vmax.f32 %v3403, %v3347
        %v3408 = vmax.f32 %v3404, %v3348
        %v3409 = vmax.f32 %v3405, %v3349
        %v3410 = vmax.f32 %v3406, %v3350
        %v3411 = vmax.f32 %v3407, %v3351
        %v3412 = vmax.f32 %v3408, %v3352
        %v3413 = vmax.f32 %v3409, %v3353
        %v3414 = vmax.f32 %v3410, %v3354
        %v3415 = vmax.f32 %v3411, %v3355
        %v3416 = vmax.f32 %v3412, %v3356
        %v3417 = vmax.f32 %v3413, %v3357
        %v3418 = vmax.f32 %v3414, %v3358
        %v3419 = vmax.f32 %v3415, %v3359
        %v3420 = vmax.f32 %v3416, %v3360
        %v3421 = vmax.f32 %v3417, %v3361
        %v3422 = vmax.f32 %v3418, %v3362
        %v3423 = vmax.f32 %v3419, %v3363
        %v3424 = vmax.f32 %v3420, %v3364
        %3425 = vst [vmem:[%s352] sm:$0xff] %v3421
        %3426 = vst [vmem:[%s352 + $0x8] sm:$0xff] %v3422
        %3427 = vst [vmem:[%s352 + $0x10] sm:$0xff] %v3423
        %3428 = vst [vmem:[%s352 + $0x18] sm:$0xff] %v3424
        %s3429 = sand.u32 %s247, 1
        %s3430 = scalar_lea.sflag [#allocation3], %s3429
        %s3431 = sand.u32 %s247, 1
        %s3432 = smul.addr %s3431, 32
        %s3433 = scalar_lea.vmem [#allocation2], %s3432
        // Predicated region
        $region61: #{tpu_custom_call.1} parent=59 // pred_check
          %p3434 = pneg %p257
        $region62: #{tpu_custom_call.1} parent=59 // pred_check_branch
          %3436 = sbr.rel (%p3434) target = $region64
        $region63: #{tpu_custom_call.1} parent=59 // pred_region
          %s3438 = ssub.s32 512, 512
          %3439 = vsyncadd %s3430, %s3438
          %s3440 = smul.addr %s24, 4
          %s3441 = smul.addr %s3440, 128
          %s3442 = scalar_lea.hbm %s10, %s3441
          %s3443 = sshll.u32 %s3433, 4
          %s3444 = int_to_ptr.vmem [resolvable:$true] %s3443
          %3449 = dma.vmem_to_hbm [thread:$0]  %s3444, 512, %s3442, %s3430, 128, 128, 8
        $region64: #{tpu_custom_call.1} parent=59 // pred_fallthru
          _
      $region60: #{tpu_custom_call.1} parent=5 // pred_fallthru
        _
      %p3450 = scmp.le.s32.totalorder 2, %s19
      // Predicated region
      $region65: #{tpu_custom_call.1} parent=5 // pred_check
        %p3451 = pneg %p3450
      $region66: #{tpu_custom_call.1} parent=5 // pred_check_branch
        %3453 = sbr.rel (%p3451) target = $region68
      $region67: #{tpu_custom_call.1} parent=5 // pred_region
        %s3454 = ssub.s32 %s19, 2
        // Predicated region
        $region69: #{tpu_custom_call.1} parent=67 // pred_check
          %p3455 = pneg %p263
        $region70: #{tpu_custom_call.1} parent=67 // pred_check_branch
          %3457 = sbr.rel (%p3455) target = $region72
        $region71: #{tpu_custom_call.1} parent=67 // pred_region
          %s3458 = sand.u32 %s248, 1
          %s3459 = scalar_lea.sflag [#allocation3], %s3458
          %s3460 = sand.u32 %s248, 1
          %s3461 = smul.addr %s3460, 32
          %s3462 = scalar_lea.vmem [#allocation2], %s3461
          %3463 = dma.done %s3459, 512
        $region72: #{tpu_custom_call.1} parent=67 // pred_fallthru
          _
      $region68: #{tpu_custom_call.1} parent=5 // pred_fallthru
        _
    $region6: #{tpu_custom_call.1} parent=1 // loop_footer
      %s23 = sadd.s32 1, %s19
    $region7: #{tpu_custom_call.1} parent=1 // loop_footer_branch
      %18 = sbr.rel target = $region3
    $region8: #{tpu_custom_call.1} parent=1 // loop_exit
      _
    %3464 = vsyncpa [#allocation3], 1
    %s3465 = scalar_lea.sflag [#allocation3], 1
    %3466 = vsyncpa %s3465, 1

</llo_original>
